<compile_context>
chip_gen: v6e
topology: v6e:2x2x1
jax: 0.10.0
libtpu: 0.0.40
codegen_flags: <defaults>
</compile_context>

<pallas_src>
import jax
import jax.numpy as jnp
from jax.experimental import pallas as pl
from jax.experimental.pallas import tpu as pltpu

K_IN  = 3000          # original input feature dim
K_PAD = 3072          # padded to a multiple of 128 (lane alignment)
TK    = 1536          # K-tile for layer-1 reduction grid (3072 / 1536 = 2 steps)
DIMS  = [(3000, 1024), (1024, 256), (256, 128), (128, 64), (64, 11)]


def fcn_kernel(x_ref,
               w1_ref, b1_ref,
               w2_ref, b2_ref,
               w3_ref, b3_ref,
               w4_ref, b4_ref,
               w5_ref, b5_ref,
               out_ref,
               h1_acc):
    k = pl.program_id(0)

    @pl.when(k == 0)
    def _():
        h1_acc[...] = jnp.zeros_like(h1_acc)

    # Layer-1 partial product for this K tile (bf16 operands, f32 accumulation).
    # x is resident; slice its K chunk here instead of K-tiling it via BlockSpec.
    k_start = pl.multiple_of(k * TK, TK)
    x_tile = x_ref[:, pl.ds(k_start, TK)]
    h1_acc[...] += jnp.dot(x_tile, w1_ref[...],
                           preferred_element_type=jnp.float32)

    @pl.when(k == pl.num_programs(0) - 1)
    def _():
        # dnn1 (+ dropout = identity in eval mode)
        h = (h1_acc[...] + b1_ref[...]).astype(jnp.bfloat16)
        # dnn2
        h = (jnp.dot(h, w2_ref[...], preferred_element_type=jnp.float32)
             + b2_ref[...]).astype(jnp.bfloat16)
        # dnn3 (+ dropout = identity)
        h = (jnp.dot(h, w3_ref[...], preferred_element_type=jnp.float32)
             + b3_ref[...]).astype(jnp.bfloat16)
        # dnn4
        h = (jnp.dot(h, w4_ref[...], preferred_element_type=jnp.float32)
             + b4_ref[...]).astype(jnp.bfloat16)
        # dnn5 (+ dropout = identity)
        logits = (jnp.dot(h, w5_ref[...], preferred_element_type=jnp.float32)
                  + b5_ref[...])
        # Softmax(dim=1) over the class (lane) axis — exact normalization.
        m = jnp.max(logits, axis=1, keepdims=True)
        e = jnp.exp(logits - m)
        denom = jnp.sum(e, axis=1, keepdims=True)
        out_ref[...] = (e / denom).astype(out_ref.dtype)


@jax.jit
def fcn_forward(x, params):
    """x: (B, 3000) float.  params: output of prepare_params()."""
    B, K = x.shape
    assert K == K_IN
    # Pad batch to a multiple of 8 (sublane) and features to 3072 (lane tile).
    Bp = ((B + 7) // 8) * 8
    xp = jnp.zeros((Bp, K_PAD), jnp.bfloat16).at[:B, :K].set(x.astype(jnp.bfloat16))

    args = (xp,
            params["w1"], params["b1"],
            params["w2"], params["b2"],
            params["w3"], params["b3"],
            params["w4"], params["b4"],
            params["w5"], params["b5"])

    # Advisory cost estimate (HBM-bandwidth bound: ~7 MB of bf16 weights streamed).
    flops = 2 * Bp * sum(ki * ko for ki, ko in
                         [(K_PAD, 1024), (1024, 256), (256, 128), (128, 64), (64, 11)])
    bytes_accessed = sum(int(a.size) * a.dtype.itemsize for a in args) + Bp * 11 * 4
    cost = pl.CostEstimate(flops=flops, transcendentals=Bp * 12,
                           bytes_accessed=bytes_accessed)

    resident = lambda k: (0, 0)   # blocks with a constant index are DMA'd only once
    out = pl.pallas_call(
        fcn_kernel,
        out_shape=jax.ShapeDtypeStruct((Bp, 11), jnp.float32),
        grid_spec=pltpu.PrefetchScalarGridSpec(
            num_scalar_prefetch=0,
            grid=(K_PAD // TK,),
            in_specs=[
                pl.BlockSpec((Bp, K_PAD), resident),          # x  : resident (~48 KiB)
                pl.BlockSpec((TK, 1024), lambda k: (k, 0)),   # w1 : K-tiled (streamed)
                pl.BlockSpec((1, 1024), resident),            # b1
                pl.BlockSpec((1024, 256), resident),          # w2
                pl.BlockSpec((1, 256), resident),             # b2
                pl.BlockSpec((256, 128), resident),           # w3
                pl.BlockSpec((1, 128), resident),             # b3
                pl.BlockSpec((128, 64), resident),            # w4
                pl.BlockSpec((1, 64), resident),              # b4
                pl.BlockSpec((64, 11), resident),             # w5
                pl.BlockSpec((1, 11), resident),              # b5
            ],
            out_specs=pl.BlockSpec((Bp, 11), resident),
            scratch_shapes=[pltpu.VMEM((Bp, 1024), jnp.float32)],   # h1 accumulator
        ),
        compiler_params=pltpu.CompilerParams(
            # Single grid axis is a K reduction -> "arbitrary".  If the batch
            # ever grows, add a leading batch axis marked "parallel" (megacore);
            # at B=8 that would only re-stream weights per core for no gain.
            dimension_semantics=("arbitrary",),
            vmem_limit_bytes=32 << 20,            # leave headroom on v7x (64 MiB total)
        ),
        cost_estimate=cost,
    )(*args)
    return out[:B]


def init_params(key):
    """Deterministic PyTorch-Linear-style init (uniform(-1/sqrt(fan_in), +)), f32."""
    params = {}
    for i, (fan_in, fan_out) in enumerate(DIMS, start=1):
        key, kw, kb = jax.random.split(key, 3)
        bound = 1.0 / (fan_in ** 0.5)
        # Stored as (in, out) so the kernel computes h @ W + b (== x @ W_pt.T + b).
        params[f"w{i}"] = jax.random.uniform(
            kw, (fan_in, fan_out), jnp.float32, minval=-bound, maxval=bound)
        params[f"b{i}"] = jax.random.uniform(
            kb, (fan_out,), jnp.float32, minval=-bound, maxval=bound)
    return params


def prepare_params(params_f32):
    """One-time prep: cast weights to bf16 (halves HBM weight traffic), zero-pad
    w1's K dim to 3072, reshape biases to (1, out) (kept f32)."""
    p = {}
    for i, (fan_in, fan_out) in enumerate(DIMS, start=1):
        w = params_f32[f"w{i}"]
        if i == 1:
            w = jnp.zeros((K_PAD, fan_out), w.dtype).at[:fan_in].set(w)
        p[f"w{i}"] = w.astype(jnp.bfloat16)
        p[f"b{i}"] = params_f32[f"b{i}"].reshape(1, fan_out).astype(jnp.float32)
    return p


def ref_forward(x, p):
    """Pure-JAX reference with identical bf16-weight / f32-accumulate numerics."""
    h = jnp.zeros((x.shape[0], K_PAD), jnp.bfloat16).at[:, :K_IN].set(
        x.astype(jnp.bfloat16))
    lin = lambda h, w, b: jnp.dot(h, w, preferred_element_type=jnp.float32) + b
    h = lin(h, p["w1"], p["b1"]).astype(jnp.bfloat16)
    h = lin(h, p["w2"], p["b2"]).astype(jnp.bfloat16)
    h = lin(h, p["w3"], p["b3"]).astype(jnp.bfloat16)
    h = lin(h, p["w4"], p["b4"]).astype(jnp.bfloat16)
    logits = lin(h, p["w5"], p["b5"])
    return jax.nn.softmax(logits, axis=1)


if __name__ == "__main__":
    key = jax.random.PRNGKey(0)
    key, kx = jax.random.split(key)

    B = 8
    x = jax.random.normal(kx, (B, K_IN), dtype=jnp.float32)
    params = prepare_params(init_params(key))

    out = jax.block_until_ready(fcn_forward(x, params))

    assert out.shape == (B, 11)
    # Softmax rows sum to 1 (exact division now -> tight tolerance passes).
    assert bool(jnp.allclose(jnp.sum(out, axis=1), 1.0, atol=2e-3))
    # Match the pure-JAX reference with the same bf16 weights.
    ref = jax.block_until_ready(ref_forward(x, params))
    assert bool(jnp.allclose(out, ref, atol=5e-3))

    print("KERNEL_OK")
</pallas_src>

<mosaic_0001>
module attributes {stable_mosaic.version = 11 : i64} {
  func.func @fcn_kernel(%arg0: i32, %arg1: memref<8x3072xbf16, #tpu.memory_space<vmem>>, %arg2: memref<1536x1024xbf16, #tpu.memory_space<vmem>>, %arg3: memref<1x1024xf32, #tpu.memory_space<vmem>>, %arg4: memref<1024x256xbf16, #tpu.memory_space<vmem>>, %arg5: memref<1x256xf32, #tpu.memory_space<vmem>>, %arg6: memref<256x128xbf16, #tpu.memory_space<vmem>>, %arg7: memref<1x128xf32, #tpu.memory_space<vmem>>, %arg8: memref<128x64xbf16, #tpu.memory_space<vmem>>, %arg9: memref<1x64xf32, #tpu.memory_space<vmem>>, %arg10: memref<64x11xbf16, #tpu.memory_space<vmem>>, %arg11: memref<1x11xf32, #tpu.memory_space<vmem>>, %arg12: memref<8x11xf32, #tpu.memory_space<vmem>>, %arg13: memref<8x1024xf32, #tpu.memory_space<vmem>>) attributes {dimension_semantics = [#tpu.dimension_semantics<arbitrary>], iteration_bounds = array<i64: 2>, scalar_prefetch = 0 : i64, scratch_operands = 1 : i64, tpu.core_type = #tpu.core_type<tc>, window_params = [{pipeline_mode = #tpu.pipeline_mode<synchronous>, transform_indices = @transform_0, window_bounds = array<i64: 8, 3072>}, {transform_indices = @transform_1, window_bounds = array<i64: 1536, 1024>}, {pipeline_mode = #tpu.pipeline_mode<synchronous>, transform_indices = @transform_2, window_bounds = array<i64: 1, 1024>}, {pipeline_mode = #tpu.pipeline_mode<synchronous>, transform_indices = @transform_3, window_bounds = array<i64: 1024, 256>}, {pipeline_mode = #tpu.pipeline_mode<synchronous>, transform_indices = @transform_4, window_bounds = array<i64: 1, 256>}, {pipeline_mode = #tpu.pipeline_mode<synchronous>, transform_indices = @transform_5, window_bounds = array<i64: 256, 128>}, {pipeline_mode = #tpu.pipeline_mode<synchronous>, transform_indices = @transform_6, window_bounds = array<i64: 1, 128>}, {pipeline_mode = #tpu.pipeline_mode<synchronous>, transform_indices = @transform_7, window_bounds = array<i64: 128, 64>}, {pipeline_mode = #tpu.pipeline_mode<synchronous>, transform_indices = @transform_8, window_bounds = array<i64: 1, 64>}, {pipeline_mode = #tpu.pipeline_mode<synchronous>, transform_indices = @transform_9, window_bounds = array<i64: 64, 11>}, {pipeline_mode = #tpu.pipeline_mode<synchronous>, transform_indices = @transform_10, window_bounds = array<i64: 1, 11>}, {pipeline_mode = #tpu.pipeline_mode<synchronous>, transform_indices = @transform_11, window_bounds = array<i64: 8, 11>}]} {
    %c0_i32 = arith.constant 0 : i32
    %0 = arith.cmpi eq, %arg0, %c0_i32 : i32
    %1 = arith.extui %0 : i1 to i32
    %c0_i32_0 = arith.constant 0 : i32
    %2 = arith.cmpi ne, %1, %c0_i32_0 : i32
    scf.if %2 {
      %cst_8 = arith.constant 0.000000e+00 : f32
      %15 = vector.broadcast %cst_8 : f32 to vector<8x1024xf32>
      %c0_9 = arith.constant 0 : index
      %c0_10 = arith.constant 0 : index
      %16 = vector.load %arg13[%c0_9, %c0_10] : memref<8x1024xf32, #tpu.memory_space<vmem>>, vector<8x1024xf32>
      tpu.vector_store %arg13[%c0_9, %c0_10], %15 {strides = array<i32>} : memref<8x1024xf32, #tpu.memory_space<vmem>>, vector<8x1024xf32>,
    } else {
    }
    %c1536_i32 = arith.constant 1536 : i32
    %3 = arith.muli %arg0, %c1536_i32 : i32
    %4 = tpu.assume_multiple %3, 1536 : i32
    %c0 = arith.constant 0 : index
    %5 = arith.index_cast %4 : i32 to index
    %6 = vector.load %arg1[%c0, %5] : memref<8x3072xbf16, #tpu.memory_space<vmem>>, vector<8x1536xbf16>
    %c0_1 = arith.constant 0 : index
    %c0_2 = arith.constant 0 : index
    %7 = vector.load %arg13[%c0_1, %c0_2] : memref<8x1024xf32, #tpu.memory_space<vmem>>, vector<8x1024xf32>
    %c0_3 = arith.constant 0 : index
    %c0_4 = arith.constant 0 : index
    %8 = vector.load %arg2[%c0_3, %c0_4] : memref<1536x1024xbf16, #tpu.memory_space<vmem>>, vector<1536x1024xbf16>
    %cst = arith.constant dense<0.000000e+00> : vector<8x1024xf32>
    %9 = tpu.matmul %6, %8, %cst {dimension_numbers = #tpu.dot_dimension_numbers<[1], [0], [0], [1], [0, 0, 1, 1], [], []>} : vector<8x1536xbf16>, vector<1536x1024xbf16>, vector<8x1024xf32> -> vector<8x1024xf32>
    %10 = arith.addf %7, %9 : vector<8x1024xf32>
    %c0_5 = arith.constant 0 : index
    %c0_6 = arith.constant 0 : index
    %11 = vector.load %arg13[%c0_5, %c0_6] : memref<8x1024xf32, #tpu.memory_space<vmem>>, vector<8x1024xf32>
    tpu.vector_store %arg13[%c0_5, %c0_6], %10 {strides = array<i32>} : memref<8x1024xf32, #tpu.memory_space<vmem>>, vector<8x1024xf32>,
    %c1_i32 = arith.constant 1 : i32
    %12 = arith.cmpi eq, %arg0, %c1_i32 : i32
    %13 = arith.extui %12 : i1 to i32
    %c0_i32_7 = arith.constant 0 : i32
    %14 = arith.cmpi ne, %13, %c0_i32_7 : i32
    scf.if %14 {
      %c0_8 = arith.constant 0 : index
      %c0_9 = arith.constant 0 : index
      %15 = vector.load %arg13[%c0_8, %c0_9] : memref<8x1024xf32, #tpu.memory_space<vmem>>, vector<8x1024xf32>
      %c0_10 = arith.constant 0 : index
      %c0_11 = arith.constant 0 : index
      %16 = vector.load %arg3[%c0_10, %c0_11] : memref<1x1024xf32, #tpu.memory_space<vmem>>, vector<1x1024xf32>
      %17 = vector.broadcast %16 : vector<1x1024xf32> to vector<8x1024xf32>
      %18 = arith.addf %15, %17 : vector<8x1024xf32>
      %19 = arith.truncf %18 : vector<8x1024xf32> to vector<8x1024xbf16>
      %c0_12 = arith.constant 0 : index
      %c0_13 = arith.constant 0 : index
      %20 = vector.load %arg4[%c0_12, %c0_13] : memref<1024x256xbf16, #tpu.memory_space<vmem>>, vector<1024x256xbf16>
      %cst_14 = arith.constant dense<0.000000e+00> : vector<8x256xf32>
      %21 = tpu.matmul %19, %20, %cst_14 {dimension_numbers = #tpu.dot_dimension_numbers<[1], [0], [0], [1], [0, 0, 1, 1], [], []>} : vector<8x1024xbf16>, vector<1024x256xbf16>, vector<8x256xf32> -> vector<8x256xf32>
      %c0_15 = arith.constant 0 : index
      %c0_16 = arith.constant 0 : index
      %22 = vector.load %arg5[%c0_15, %c0_16] : memref<1x256xf32, #tpu.memory_space<vmem>>, vector<1x256xf32>
      %23 = vector.broadcast %22 : vector<1x256xf32> to vector<8x256xf32>
      %24 = arith.addf %21, %23 : vector<8x256xf32>
      %25 = arith.truncf %24 : vector<8x256xf32> to vector<8x256xbf16>
      %c0_17 = arith.constant 0 : index
      %c0_18 = arith.constant 0 : index
      %26 = vector.load %arg6[%c0_17, %c0_18] : memref<256x128xbf16, #tpu.memory_space<vmem>>, vector<256x128xbf16>
      %cst_19 = arith.constant dense<0.000000e+00> : vector<8x128xf32>
      %27 = tpu.matmul %25, %26, %cst_19 {dimension_numbers = #tpu.dot_dimension_numbers<[1], [0], [0], [1], [0, 0, 1, 1], [], []>} : vector<8x256xbf16>, vector<256x128xbf16>, vector<8x128xf32> -> vector<8x128xf32>
      %c0_20 = arith.constant 0 : index
      %c0_21 = arith.constant 0 : index
      %28 = vector.load %arg7[%c0_20, %c0_21] : memref<1x128xf32, #tpu.memory_space<vmem>>, vector<1x128xf32>
      %29 = vector.broadcast %28 : vector<1x128xf32> to vector<8x128xf32>
      %30 = arith.addf %27, %29 : vector<8x128xf32>
      %31 = arith.truncf %30 : vector<8x128xf32> to vector<8x128xbf16>
      %c0_22 = arith.constant 0 : index
      %c0_23 = arith.constant 0 : index
      %32 = vector.load %arg8[%c0_22, %c0_23] : memref<128x64xbf16, #tpu.memory_space<vmem>>, vector<128x64xbf16>
      %cst_24 = arith.constant dense<0.000000e+00> : vector<8x64xf32>
      %33 = tpu.matmul %31, %32, %cst_24 {dimension_numbers = #tpu.dot_dimension_numbers<[1], [0], [0], [1], [0, 0, 1, 1], [], []>} : vector<8x128xbf16>, vector<128x64xbf16>, vector<8x64xf32> -> vector<8x64xf32>
      %c0_25 = arith.constant 0 : index
      %c0_26 = arith.constant 0 : index
      %34 = vector.load %arg9[%c0_25, %c0_26] : memref<1x64xf32, #tpu.memory_space<vmem>>, vector<1x64xf32>
      %35 = vector.broadcast %34 : vector<1x64xf32> to vector<8x64xf32>
      %36 = arith.addf %33, %35 : vector<8x64xf32>
      %37 = arith.truncf %36 : vector<8x64xf32> to vector<8x64xbf16>
      %c0_27 = arith.constant 0 : index
      %c0_28 = arith.constant 0 : index
      %38 = vector.load %arg10[%c0_27, %c0_28] : memref<64x11xbf16, #tpu.memory_space<vmem>>, vector<64x11xbf16>
      %cst_29 = arith.constant dense<0.000000e+00> : vector<8x11xf32>
      %39 = tpu.matmul %37, %38, %cst_29 {dimension_numbers = #tpu.dot_dimension_numbers<[1], [0], [0], [1], [0, 0, 1, 1], [], []>} : vector<8x64xbf16>, vector<64x11xbf16>, vector<8x11xf32> -> vector<8x11xf32>
      %c0_30 = arith.constant 0 : index
      %c0_31 = arith.constant 0 : index
      %40 = vector.load %arg11[%c0_30, %c0_31] : memref<1x11xf32, #tpu.memory_space<vmem>>, vector<1x11xf32>
      %41 = vector.broadcast %40 : vector<1x11xf32> to vector<8x11xf32>
      %42 = arith.addf %39, %41 : vector<8x11xf32>
      %cst_32 = arith.constant dense<0xFF800000> : vector<8xf32>
      %43 = vector.multi_reduction <maximumf>, %42, %cst_32 [1] : vector<8x11xf32> to vector<8xf32>
      %44 = vector.shape_cast %43 : vector<8xf32> to vector<8x1xf32>
      %45 = vector.broadcast %44 : vector<8x1xf32> to vector<8x11xf32>
      %46 = arith.subf %42, %45 : vector<8x11xf32>
      %47 = math.exp %46 : vector<8x11xf32>
      %cst_33 = arith.constant dense<0.000000e+00> : vector<8xf32>
      %48 = vector.multi_reduction <add>, %47, %cst_33 [1] : vector<8x11xf32> to vector<8xf32>
      %49 = vector.shape_cast %48 : vector<8xf32> to vector<8x1xf32>
      %50 = vector.broadcast %49 : vector<8x1xf32> to vector<8x11xf32>
      %51 = arith.divf %47, %50 : vector<8x11xf32>
      %c0_34 = arith.constant 0 : index
      %c0_35 = arith.constant 0 : index
      %52 = vector.load %arg12[%c0_34, %c0_35] : memref<8x11xf32, #tpu.memory_space<vmem>>, vector<8x11xf32>
      tpu.vector_store %arg12[%c0_34, %c0_35], %51 {strides = array<i32>} : memref<8x11xf32, #tpu.memory_space<vmem>>, vector<8x11xf32>,
    } else {
    }
    return
  }
  func.func @transform_0(%arg0: i32) -> (i32, i32) {
    %c0_i32 = arith.constant 0 : i32
    %c0_i32_0 = arith.constant 0 : i32
    %c0_i32_1 = arith.constant 0 : i32
    return %c0_i32, %c0_i32_0 : i32, i32
  }
  func.func @transform_1(%arg0: i32) -> (i32, i32) {
    %c0_i32 = arith.constant 0 : i32
    %c0_i32_0 = arith.constant 0 : i32
    return %arg0, %c0_i32 : i32, i32
  }
  func.func @transform_2(%arg0: i32) -> (i32, i32) {
    %c0_i32 = arith.constant 0 : i32
    %c0_i32_0 = arith.constant 0 : i32
    %c0_i32_1 = arith.constant 0 : i32
    return %c0_i32, %c0_i32_0 : i32, i32
  }
  func.func @transform_3(%arg0: i32) -> (i32, i32) {
    %c0_i32 = arith.constant 0 : i32
    %c0_i32_0 = arith.constant 0 : i32
    %c0_i32_1 = arith.constant 0 : i32
    return %c0_i32, %c0_i32_0 : i32, i32
  }
  func.func @transform_4(%arg0: i32) -> (i32, i32) {
    %c0_i32 = arith.constant 0 : i32
    %c0_i32_0 = arith.constant 0 : i32
    %c0_i32_1 = arith.constant 0 : i32
    return %c0_i32, %c0_i32_0 : i32, i32
  }
  func.func @transform_5(%arg0: i32) -> (i32, i32) {
    %c0_i32 = arith.constant 0 : i32
    %c0_i32_0 = arith.constant 0 : i32
    %c0_i32_1 = arith.constant 0 : i32
    return %c0_i32, %c0_i32_0 : i32, i32
  }
  func.func @transform_6(%arg0: i32) -> (i32, i32) {
    %c0_i32 = arith.constant 0 : i32
    %c0_i32_0 = arith.constant 0 : i32
    %c0_i32_1 = arith.constant 0 : i32
    return %c0_i32, %c0_i32_0 : i32, i32
  }
  func.func @transform_7(%arg0: i32) -> (i32, i32) {
    %c0_i32 = arith.constant 0 : i32
    %c0_i32_0 = arith.constant 0 : i32
    %c0_i32_1 = arith.constant 0 : i32
    return %c0_i32, %c0_i32_0 : i32, i32
  }
  func.func @transform_8(%arg0: i32) -> (i32, i32) {
    %c0_i32 = arith.constant 0 : i32
    %c0_i32_0 = arith.constant 0 : i32
    %c0_i32_1 = arith.constant 0 : i32
    return %c0_i32, %c0_i32_0 : i32, i32
  }
  func.func @transform_9(%arg0: i32) -> (i32, i32) {
    %c0_i32 = arith.constant 0 : i32
    %c0_i32_0 = arith.constant 0 : i32
    %c0_i32_1 = arith.constant 0 : i32
    return %c0_i32, %c0_i32_0 : i32, i32
  }
  func.func @transform_10(%arg0: i32) -> (i32, i32) {
    %c0_i32 = arith.constant 0 : i32
    %c0_i32_0 = arith.constant 0 : i32
    %c0_i32_1 = arith.constant 0 : i32
    return %c0_i32, %c0_i32_0 : i32, i32
  }
  func.func @transform_11(%arg0: i32) -> (i32, i32) {
    %c0_i32 = arith.constant 0 : i32
    %c0_i32_0 = arith.constant 0 : i32
    %c0_i32_1 = arith.constant 0 : i32
    return %c0_i32, %c0_i32_0 : i32, i32
  }
}

</mosaic_0001>

<llo_original>
// kernel: fcn_forward.1
$region0: #{fcn_forward.1}
  #allocation0 [shape = 'u32[]', space=smem, size = 0x4, offset = 0x4, fixed_abs, tag = 'smem constant byte address 0x4 - core index']
  #allocation1 [shape = 'u32[144,128]{1,0:T(1,128)}', space=vmem, size = 0x12000, scoped, tag = 'internal scratch']
  #allocation2 [shape = 'f32[8,1024]{1,0:T(8,128)}', space=vmem, size = 0x8000, scoped, tag = 'scratch operand']
  %s0 = inlined_call_operand.vmem [shape: bf16[8,3072], index: 0, kind: input, shape index: {}]
  %s1 = inlined_call_operand.hbm [shape: bf16[3072,1024], index: 1, kind: input, shape index: {}]
  %s2 = inlined_call_operand.hbm [shape: f32[1,1024], index: 2, kind: input, shape index: {}]
  %s3 = inlined_call_operand.hbm [shape: bf16[1024,256], index: 3, kind: input, shape index: {}]
  %s4 = inlined_call_operand.hbm [shape: f32[1,256], index: 4, kind: input, shape index: {}]
  %s5 = inlined_call_operand.hbm [shape: bf16[256,128], index: 5, kind: input, shape index: {}]
  %s6 = inlined_call_operand.hbm [shape: f32[1,128], index: 6, kind: input, shape index: {}]
  %s7 = inlined_call_operand.vmem [shape: bf16[128,64], index: 7, kind: input, shape index: {}]
  %s8 = inlined_call_operand.hbm [shape: f32[1,64], index: 8, kind: input, shape index: {}]
  %s9 = inlined_call_operand.vmem [shape: bf16[64,11], index: 9, kind: input, shape index: {}]
  %s10 = inlined_call_operand.hbm [shape: f32[1,11], index: 10, kind: input, shape index: {}]
  %s11 = inlined_call_operand.hbm [shape: f32[8,11], index: 11, kind: output, shape index: {}]
  %s12 = sld [smem:[#allocation0]]
  $region117: #{fcn_forward.1} parent=0
    _
  %s14 = ssub.s32 1, %s12
  %s15 = scalar_select 0, %s14, %s12
  $region1: #{fcn_forward.1} parent=0
    #allocation3 [shape = 'u8[6291456]{0}', space=vmem, size = 0x600000, scoped, tag = 'input window, operand 1']
    #allocation4 [shape = 's32[2]{0}', space=sflag, size = 0x8, scoped, tag = 'scoped memory for fcn_forward.1']
    #allocation5 [shape = 's32[2]{0}', space=sflag, size = 0x8, scoped, tag = 'scoped memory for fcn_forward.1']
    #allocation6 [shape = 'u8[4096]{0}', space=vmem, size = 0x1000, scoped, tag = 'input window, operand 2, single buffered']
    #allocation7 [shape = 's32[1]{0}', space=sflag, size = 0x4, scoped, tag = 'scoped memory for fcn_forward.1']
    #allocation8 [shape = 'u8[524288]{0}', space=vmem, size = 0x80000, scoped, tag = 'input window, operand 3, single buffered']
    #allocation9 [shape = 'u8[1024]{0}', space=vmem, size = 0x400, scoped, tag = 'input window, operand 4, single buffered']
    #allocation10 [shape = 's32[1]{0}', space=sflag, size = 0x4, scoped, tag = 'scoped memory for fcn_forward.1']
    #allocation11 [shape = 'u8[65536]{0}', space=vmem, size = 0x10000, scoped, tag = 'input window, operand 5, single buffered']
    #allocation12 [shape = 'u8[512]{0}', space=vmem, size = 0x400, scoped, tag = 'input window, operand 6, single buffered']
    #allocation13 [shape = 's32[1]{0}', space=sflag, size = 0x4, scoped, tag = 'scoped memory for fcn_forward.1']
    #allocation14 [shape = 'u8[512]{0}', space=vmem, size = 0x400, scoped, tag = 'input window, operand 8, single buffered']
    #allocation15 [shape = 'u8[512]{0}', space=vmem, size = 0x400, scoped, tag = 'input window, operand 10, single buffered']
    #allocation16 [shape = 's32[1]{0}', space=sflag, size = 0x4, scoped, tag = 'scoped memory for fcn_forward.1']
    #allocation17 [shape = 'u8[4096]{0}', space=vmem, size = 0x1000, scoped, tag = 'output window, operand 0, single buffered']
    %16 = vsyncpa [#allocation4], 0
    %s17 = scalar_lea.sflag [#allocation4], 1
    %18 = vsyncpa %s17, 0
    %19 = vsyncpa [#allocation7], 0
    %20 = vsyncpa [#allocation10], 0
    %21 = vsyncpa [#allocation13], 0
    %22 = vsyncpa [#allocation16], 0
    %23 = vsyncpa [#allocation5], 0
    loop: start=0, step=1, limit=4
    $region2: #{fcn_forward.1} parent=1 // loop_pre_header
      _
    $region3: #{fcn_forward.1} parent=1 // loop_header
      %s25 = sphi 0, %s29
      %p26 = scmp.ge.s32.totalorder %s25, 4
      %s33 = sphi 0, %s33
      %s35 = sphi 0, %s33
      %s36 = sphi 0, %s35
      %s50 = sphi 0, %s36
      %s56 = sphi 0, %s58
      %s59 = sphi 0, %s56
      %s60 = sphi 0, %s59
      %s76 = sphi 0, %s60
      %s80 = sphi 0, %s80
      %s82 = sphi 0, %s80
      %s83 = sphi 0, %s82
      %s97 = sphi 0, %s83
      %s101 = sphi 0, %s101
      %s103 = sphi 0, %s101
      %s104 = sphi 0, %s103
      %s118 = sphi 0, %s104
      %s122 = sphi 0, %s122
      %s124 = sphi 0, %s122
      %s125 = sphi 0, %s124
      %s139 = sphi 0, %s125
      %s143 = sphi 0, %s143
      %s145 = sphi 0, %s143
      %s146 = sphi 0, %s145
      %s160 = sphi 0, %s146
      %s164 = sphi 0, %s164
      %s166 = sphi 0, %s164
      %s167 = sphi 0, %s166
      %s181 = sphi 0, %s167
      %s185 = sphi 0, %s185
      %s187 = sphi 0, %s185
      %s188 = sphi 0, %s187
      %s202 = sphi 0, %s188
      %s206 = sphi 0, %s206
      %s208 = sphi 0, %s206
      %s209 = sphi 0, %s208
      %s223 = sphi 0, %s209
      %s227 = sphi 0, %s227
      %s229 = sphi 0, %s227
      %s230 = sphi 0, %s229
      %s244 = sphi 0, %s230
      %s248 = sphi 0, %s248
      %s250 = sphi 0, %s248
      %s251 = sphi 0, %s250
      %s265 = sphi 0, %s251
      %s269 = sphi 0, %s269
      %s271 = sphi 0, %s269
      %s272 = sphi 0, %s271
      %s286 = sphi 0, %s272
    $region4: #{fcn_forward.1} parent=1 // loop_header_branch
      %28 = sbr.rel (%p26) target = $region8
    $region5: #{fcn_forward.1} parent=1 // loop_body
      %s30 = ssub.s32 %s25, 1
      %s31 = ssub.s32 %s25, 2
      %s32 = sadd.s32 %s25, 1
      %s34 = sadd.s32 %s33, 1
      %p37 = scmp.eq.s32.totalorder %s25, 1
      %p38 = scmp.ne.s32.totalorder %s33, %s35
      %p39 = scmp.eq.s32.totalorder %s25, 0
      %p40 = por %p38, %p39
      %p41 = scmp.ne.s32.totalorder %s33, %s35
      %p42 = scmp.eq.s32.totalorder %s30, 1
      %p43 = por %p41, %p42
      %p44 = scmp.ne.s32.totalorder %s35, %s36
      %p45 = scmp.eq.s32.totalorder %s30, 0
      %p46 = por %p44, %p45
      %p47 = scmp.ne.s32.totalorder %s35, %s36
      %p48 = scmp.eq.s32.totalorder %s31, 1
      %p49 = por %p47, %p48
      %p51 = scmp.ne.s32.totalorder %s36, %s50
      %p52 = scmp.eq.s32.totalorder %s31, 0
      %p53 = por %p51, %p52
      %s54 = ssub.s32 %s25, %s32
      %p55 = scmp.eq.s32.totalorder %s54, 0
      %s57 = sadd.s32 %s56, 1
      %s58 = scalar_select %p55, %s56, %s57
      %p61 = pneg %p55
      %p62 = scmp.eq.s32.totalorder %s25, 1
      %p63 = por %p61, %p62
      %p64 = scmp.ne.s32.totalorder %s56, %s59
      %p65 = scmp.eq.s32.totalorder %s25, 0
      %p66 = por %p64, %p65
      %p67 = scmp.ne.s32.totalorder %s56, %s59
      %p68 = scmp.eq.s32.totalorder %s30, 1
      %p69 = por %p67, %p68
      %p70 = scmp.ne.s32.totalorder %s59, %s60
      %p71 = scmp.eq.s32.totalorder %s30, 0
      %p72 = por %p70, %p71
      %p73 = scmp.ne.s32.totalorder %s59, %s60
      %p74 = scmp.eq.s32.totalorder %s31, 1
      %p75 = por %p73, %p74
      %p77 = scmp.ne.s32.totalorder %s60, %s76
      %p78 = scmp.eq.s32.totalorder %s31, 0
      %p79 = por %p77, %p78
      %s81 = sadd.s32 %s80, 1
      %p84 = scmp.eq.s32.totalorder %s25, 1
      %p85 = scmp.ne.s32.totalorder %s80, %s82
      %p86 = scmp.eq.s32.totalorder %s25, 0
      %p87 = por %p85, %p86
      %p88 = scmp.ne.s32.totalorder %s80, %s82
      %p89 = scmp.eq.s32.totalorder %s30, 1
      %p90 = por %p88, %p89
      %p91 = scmp.ne.s32.totalorder %s82, %s83
      %p92 = scmp.eq.s32.totalorder %s30, 0
      %p93 = por %p91, %p92
      %p94 = scmp.ne.s32.totalorder %s82, %s83
      %p95 = scmp.eq.s32.totalorder %s31, 1
      %p96 = por %p94, %p95
      %p98 = scmp.ne.s32.totalorder %s83, %s97
      %p99 = scmp.eq.s32.totalorder %s31, 0
      %p100 = por %p98, %p99
      %s102 = sadd.s32 %s101, 1
      %p105 = scmp.eq.s32.totalorder %s25, 1
      %p106 = scmp.ne.s32.totalorder %s101, %s103
      %p107 = scmp.eq.s32.totalorder %s25, 0
      %p108 = por %p106, %p107
      %p109 = scmp.ne.s32.totalorder %s101, %s103
      %p110 = scmp.eq.s32.totalorder %s30, 1
      %p111 = por %p109, %p110
      %p112 = scmp.ne.s32.totalorder %s103, %s104
      %p113 = scmp.eq.s32.totalorder %s30, 0
      %p114 = por %p112, %p113
      %p115 = scmp.ne.s32.totalorder %s103, %s104
      %p116 = scmp.eq.s32.totalorder %s31, 1
      %p117 = por %p115, %p116
      %p119 = scmp.ne.s32.totalorder %s104, %s118
      %p120 = scmp.eq.s32.totalorder %s31, 0
      %p121 = por %p119, %p120
      %s123 = sadd.s32 %s122, 1
      %p126 = scmp.eq.s32.totalorder %s25, 1
      %p127 = scmp.ne.s32.totalorder %s122, %s124
      %p128 = scmp.eq.s32.totalorder %s25, 0
      %p129 = por %p127, %p128
      %p130 = scmp.ne.s32.totalorder %s122, %s124
      %p131 = scmp.eq.s32.totalorder %s30, 1
      %p132 = por %p130, %p131
      %p133 = scmp.ne.s32.totalorder %s124, %s125
      %p134 = scmp.eq.s32.totalorder %s30, 0
      %p135 = por %p133, %p134
      %p136 = scmp.ne.s32.totalorder %s124, %s125
      %p137 = scmp.eq.s32.totalorder %s31, 1
      %p138 = por %p136, %p137
      %p140 = scmp.ne.s32.totalorder %s125, %s139
      %p141 = scmp.eq.s32.totalorder %s31, 0
      %p142 = por %p140, %p141
      %s144 = sadd.s32 %s143, 1
      %p147 = scmp.eq.s32.totalorder %s25, 1
      %p148 = scmp.ne.s32.totalorder %s143, %s145
      %p149 = scmp.eq.s32.totalorder %s25, 0
      %p150 = por %p148, %p149
      %p151 = scmp.ne.s32.totalorder %s143, %s145
      %p152 = scmp.eq.s32.totalorder %s30, 1
      %p153 = por %p151, %p152
      %p154 = scmp.ne.s32.totalorder %s145, %s146
      %p155 = scmp.eq.s32.totalorder %s30, 0
      %p156 = por %p154, %p155
      %p157 = scmp.ne.s32.totalorder %s145, %s146
      %p158 = scmp.eq.s32.totalorder %s31, 1
      %p159 = por %p157, %p158
      %p161 = scmp.ne.s32.totalorder %s146, %s160
      %p162 = scmp.eq.s32.totalorder %s31, 0
      %p163 = por %p161, %p162
      %s165 = sadd.s32 %s164, 1
      %p168 = scmp.eq.s32.totalorder %s25, 1
      %p169 = scmp.ne.s32.totalorder %s164, %s166
      %p170 = scmp.eq.s32.totalorder %s25, 0
      %p171 = por %p169, %p170
      %p172 = scmp.ne.s32.totalorder %s164, %s166
      %p173 = scmp.eq.s32.totalorder %s30, 1
      %p174 = por %p172, %p173
      %p175 = scmp.ne.s32.totalorder %s166, %s167
      %p176 = scmp.eq.s32.totalorder %s30, 0
      %p177 = por %p175, %p176
      %p178 = scmp.ne.s32.totalorder %s166, %s167
      %p179 = scmp.eq.s32.totalorder %s31, 1
      %p180 = por %p178, %p179
      %p182 = scmp.ne.s32.totalorder %s167, %s181
      %p183 = scmp.eq.s32.totalorder %s31, 0
      %p184 = por %p182, %p183
      %s186 = sadd.s32 %s185, 1
      %p189 = scmp.eq.s32.totalorder %s25, 1
      %p190 = scmp.ne.s32.totalorder %s185, %s187
      %p191 = scmp.eq.s32.totalorder %s25, 0
      %p192 = por %p190, %p191
      %p193 = scmp.ne.s32.totalorder %s185, %s187
      %p194 = scmp.eq.s32.totalorder %s30, 1
      %p195 = por %p193, %p194
      %p196 = scmp.ne.s32.totalorder %s187, %s188
      %p197 = scmp.eq.s32.totalorder %s30, 0
      %p198 = por %p196, %p197
      %p199 = scmp.ne.s32.totalorder %s187, %s188
      %p200 = scmp.eq.s32.totalorder %s31, 1
      %p201 = por %p199, %p200
      %p203 = scmp.ne.s32.totalorder %s188, %s202
      %p204 = scmp.eq.s32.totalorder %s31, 0
      %p205 = por %p203, %p204
      %s207 = sadd.s32 %s206, 1
      %p210 = scmp.eq.s32.totalorder %s25, 1
      %p211 = scmp.ne.s32.totalorder %s206, %s208
      %p212 = scmp.eq.s32.totalorder %s25, 0
      %p213 = por %p211, %p212
      %p214 = scmp.ne.s32.totalorder %s206, %s208
      %p215 = scmp.eq.s32.totalorder %s30, 1
      %p216 = por %p214, %p215
      %p217 = scmp.ne.s32.totalorder %s208, %s209
      %p218 = scmp.eq.s32.totalorder %s30, 0
      %p219 = por %p217, %p218
      %p220 = scmp.ne.s32.totalorder %s208, %s209
      %p221 = scmp.eq.s32.totalorder %s31, 1
      %p222 = por %p220, %p221
      %p224 = scmp.ne.s32.totalorder %s209, %s223
      %p225 = scmp.eq.s32.totalorder %s31, 0
      %p226 = por %p224, %p225
      %s228 = sadd.s32 %s227, 1
      %p231 = scmp.eq.s32.totalorder %s25, 1
      %p232 = scmp.ne.s32.totalorder %s227, %s229
      %p233 = scmp.eq.s32.totalorder %s25, 0
      %p234 = por %p232, %p233
      %p235 = scmp.ne.s32.totalorder %s227, %s229
      %p236 = scmp.eq.s32.totalorder %s30, 1
      %p237 = por %p235, %p236
      %p238 = scmp.ne.s32.totalorder %s229, %s230
      %p239 = scmp.eq.s32.totalorder %s30, 0
      %p240 = por %p238, %p239
      %p241 = scmp.ne.s32.totalorder %s229, %s230
      %p242 = scmp.eq.s32.totalorder %s31, 1
      %p243 = por %p241, %p242
      %p245 = scmp.ne.s32.totalorder %s230, %s244
      %p246 = scmp.eq.s32.totalorder %s31, 0
      %p247 = por %p245, %p246
      %s249 = sadd.s32 %s248, 1
      %p252 = scmp.eq.s32.totalorder %s25, 1
      %p253 = scmp.ne.s32.totalorder %s248, %s250
      %p254 = scmp.eq.s32.totalorder %s25, 0
      %p255 = por %p253, %p254
      %p256 = scmp.ne.s32.totalorder %s248, %s250
      %p257 = scmp.eq.s32.totalorder %s30, 1
      %p258 = por %p256, %p257
      %p259 = scmp.ne.s32.totalorder %s250, %s251
      %p260 = scmp.eq.s32.totalorder %s30, 0
      %p261 = por %p259, %p260
      %p262 = scmp.ne.s32.totalorder %s250, %s251
      %p263 = scmp.eq.s32.totalorder %s31, 1
      %p264 = por %p262, %p263
      %p266 = scmp.ne.s32.totalorder %s251, %s265
      %p267 = scmp.eq.s32.totalorder %s31, 0
      %p268 = por %p266, %p267
      %s270 = sadd.s32 %s269, 1
      %p273 = scmp.eq.s32.totalorder %s25, 1
      %p274 = scmp.ne.s32.totalorder %s269, %s271
      %p275 = scmp.eq.s32.totalorder %s25, 0
      %p276 = por %p274, %p275
      %p277 = scmp.ne.s32.totalorder %s269, %s271
      %p278 = scmp.eq.s32.totalorder %s30, 1
      %p279 = por %p277, %p278
      %p280 = scmp.ne.s32.totalorder %s271, %s272
      %p281 = scmp.eq.s32.totalorder %s30, 0
      %p282 = por %p280, %p281
      %p283 = scmp.ne.s32.totalorder %s271, %s272
      %p284 = scmp.eq.s32.totalorder %s31, 1
      %p285 = por %p283, %p284
      %p287 = scmp.ne.s32.totalorder %s272, %s286
      %p288 = scmp.eq.s32.totalorder %s31, 0
      %p289 = por %p287, %p288
      %p290 = scmp.le.s32.totalorder 1, %s25
      %p291 = scmp.lt.s32.totalorder %s25, 3
      %p292 = pnand %p290, %p291
      %p293 = pneg %p292
      // Predicated region
      $region9: #{fcn_forward.1} parent=5 // pred_check
        _
      $region10: #{fcn_forward.1} parent=5 // pred_check_branch
        %295 = sbr.rel (%p292) target = $region12
      $region11: #{fcn_forward.1} parent=5 // pred_region
        %s296 = ssub.s32 %s25, 1
        // Predicated region
        $region13: #{fcn_forward.1} parent=11 // pred_check
          %p297 = pneg %p46
        $region14: #{fcn_forward.1} parent=11 // pred_check_branch
          %299 = sbr.rel (%p297) target = $region16
        $region15: #{fcn_forward.1} parent=11 // pred_region
          _
        $region16: #{fcn_forward.1} parent=11 // pred_fallthru
          _
        // Predicated region
        $region17: #{fcn_forward.1} parent=11 // pred_check
          %p300 = pneg %p93
        $region18: #{fcn_forward.1} parent=11 // pred_check_branch
          %302 = sbr.rel (%p300) target = $region20
        $region19: #{fcn_forward.1} parent=11 // pred_region
          %s304 = ssub.s32 128, 128
          %305 = vsyncadd [#allocation7], %s304
          %s307 = sshll.u32 [#allocation6], 4
          %s308 = int_to_ptr.vmem [resolvable:$true] %s307
          %310 = dma.hbm_to_vmem [thread:$0]  %s2, 128, %s308, [#allocation7]
        $region20: #{fcn_forward.1} parent=11 // pred_fallthru
          _
        // Predicated region
        $region21: #{fcn_forward.1} parent=11 // pred_check
          %p311 = pneg %p114
        $region22: #{fcn_forward.1} parent=11 // pred_check_branch
          %313 = sbr.rel (%p311) target = $region24
        $region23: #{fcn_forward.1} parent=11 // pred_region
          %s315 = ssub.s32 16384, 16384
          %316 = vsyncadd [#allocation7], %s315
          %s317 = sshll.u32 [#allocation8], 4
          %s318 = int_to_ptr.vmem [resolvable:$true] %s317
          %323 = dma.hbm_to_vmem [thread:$0]  %s3, 16384, %s318, [#allocation7], 128, 128, 8
        $region24: #{fcn_forward.1} parent=11 // pred_fallthru
          _
        // Predicated region
        $region25: #{fcn_forward.1} parent=11 // pred_check
          %p324 = pneg %p135
        $region26: #{fcn_forward.1} parent=11 // pred_check_branch
          %326 = sbr.rel (%p324) target = $region28
        $region27: #{fcn_forward.1} parent=11 // pred_region
          %s328 = ssub.s32 32, 32
          %329 = vsyncadd [#allocation10], %s328
          %s331 = sshll.u32 [#allocation9], 4
          %s332 = int_to_ptr.vmem [resolvable:$true] %s331
          %334 = dma.hbm_to_vmem [thread:$0]  %s4, 32, %s332, [#allocation10]
        $region28: #{fcn_forward.1} parent=11 // pred_fallthru
          _
        // Predicated region
        $region29: #{fcn_forward.1} parent=11 // pred_check
          %p335 = pneg %p156
        $region30: #{fcn_forward.1} parent=11 // pred_check_branch
          %337 = sbr.rel (%p335) target = $region32
        $region31: #{fcn_forward.1} parent=11 // pred_region
          %s339 = ssub.s32 2048, 2048
          %340 = vsyncadd [#allocation10], %s339
          %s341 = sshll.u32 [#allocation11], 4
          %s342 = int_to_ptr.vmem [resolvable:$true] %s341
          %347 = dma.hbm_to_vmem [thread:$0]  %s5, 2048, %s342, [#allocation10], 64, 64, 4
        $region32: #{fcn_forward.1} parent=11 // pred_fallthru
          _
        // Predicated region
        $region33: #{fcn_forward.1} parent=11 // pred_check
          %p348 = pneg %p177
        $region34: #{fcn_forward.1} parent=11 // pred_check_branch
          %350 = sbr.rel (%p348) target = $region36
        $region35: #{fcn_forward.1} parent=11 // pred_region
          %s352 = ssub.s32 16, 16
          %353 = vsyncadd [#allocation13], %s352
          %s355 = sshll.u32 [#allocation12], 4
          %s356 = int_to_ptr.vmem [resolvable:$true] %s355
          %358 = dma.hbm_to_vmem [thread:$0]  %s6, 16, %s356, [#allocation13]
        $region36: #{fcn_forward.1} parent=11 // pred_fallthru
          _
        // Predicated region
        $region37: #{fcn_forward.1} parent=11 // pred_check
          %p359 = pneg %p198
        $region38: #{fcn_forward.1} parent=11 // pred_check_branch
          %361 = sbr.rel (%p359) target = $region40
        $region39: #{fcn_forward.1} parent=11 // pred_region
          _
        $region40: #{fcn_forward.1} parent=11 // pred_fallthru
          _
        // Predicated region
        $region41: #{fcn_forward.1} parent=11 // pred_check
          %p362 = pneg %p219
        $region42: #{fcn_forward.1} parent=11 // pred_check_branch
          %364 = sbr.rel (%p362) target = $region44
        $region43: #{fcn_forward.1} parent=11 // pred_region
          %s366 = ssub.s32 16, 16
          %367 = vsyncadd [#allocation13], %s366
          %s369 = sshll.u32 [#allocation14], 4
          %s370 = int_to_ptr.vmem [resolvable:$true] %s369
          %372 = dma.hbm_to_vmem [thread:$0]  %s8, 16, %s370, [#allocation13]
        $region44: #{fcn_forward.1} parent=11 // pred_fallthru
          _
        // Predicated region
        $region45: #{fcn_forward.1} parent=11 // pred_check
          %p373 = pneg %p240
        $region46: #{fcn_forward.1} parent=11 // pred_check_branch
          %375 = sbr.rel (%p373) target = $region48
        $region47: #{fcn_forward.1} parent=11 // pred_region
          _
        $region48: #{fcn_forward.1} parent=11 // pred_fallthru
          _
        // Predicated region
        $region49: #{fcn_forward.1} parent=11 // pred_check
          %p376 = pneg %p261
        $region50: #{fcn_forward.1} parent=11 // pred_check_branch
          %378 = sbr.rel (%p376) target = $region52
        $region51: #{fcn_forward.1} parent=11 // pred_region
          %s380 = ssub.s32 16, 16
          %381 = vsyncadd [#allocation16], %s380
          %s383 = sshll.u32 [#allocation15], 4
          %s384 = int_to_ptr.vmem [resolvable:$true] %s383
          %386 = dma.hbm_to_vmem [thread:$0]  %s10, 16, %s384, [#allocation16]
        $region52: #{fcn_forward.1} parent=11 // pred_fallthru
          _
      $region12: #{fcn_forward.1} parent=5 // pred_fallthru
        _
      %p387 = scmp.lt.s32.totalorder %s25, 2
      // Predicated region
      $region53: #{fcn_forward.1} parent=5 // pred_check
        %p388 = pneg %p387
      $region54: #{fcn_forward.1} parent=5 // pred_check_branch
        %390 = sbr.rel (%p388) target = $region56
      $region55: #{fcn_forward.1} parent=5 // pred_region
        // Predicated region
        $region57: #{fcn_forward.1} parent=55 // pred_check
          %p391 = pneg %p66
        $region58: #{fcn_forward.1} parent=55 // pred_check_branch
          %393 = sbr.rel (%p391) target = $region60
        $region59: #{fcn_forward.1} parent=55 // pred_region
          %s394 = sand.u32 %s56, 1
          %s395 = scalar_lea.sflag [#allocation4], %s394
          %s396 = sand.u32 %s56, 1
          %s397 = smul.addr %s396, 6144
          %s398 = scalar_lea.vmem [#allocation3], %s397
          %s399 = smul.u32 192, %s25
          %s401 = ssub.s32 98304, 98304
          %402 = vsyncadd %s395, %s401
          %s403 = smul.addr %s399, 8
          %s404 = smul.addr %s403, 64
          %s405 = scalar_lea.hbm %s1, %s404
          %s406 = sshll.u32 %s398, 4
          %s407 = int_to_ptr.vmem [resolvable:$true] %s406
          %412 = dma.hbm_to_vmem [thread:$0]  %s405, 98304, %s407, %s395, 512, 512, 32
        $region60: #{fcn_forward.1} parent=55 // pred_fallthru
          _
      $region56: #{fcn_forward.1} parent=5 // pred_fallthru
        _
      %p413 = scmp.le.s32.totalorder 1, %s25
      %p414 = scmp.lt.s32.totalorder %s25, 3
      %p415 = pnand %p413, %p414
      %p416 = pneg %p415
      // Predicated region
      $region61: #{fcn_forward.1} parent=5 // pred_check
        _
      $region62: #{fcn_forward.1} parent=5 // pred_check_branch
        %418 = sbr.rel (%p415) target = $region64
      $region63: #{fcn_forward.1} parent=5 // pred_region
        %s419 = ssub.s32 %s25, 1
        %s420 = sand.u32 %s59, 1
        %s421 = scalar_lea.sflag [#allocation4], %s420
        %s422 = sand.u32 %s59, 1
        %s423 = smul.addr %s422, 6144
        %s424 = scalar_lea.vmem [#allocation3], %s423
        // Predicated region
        $region65: #{fcn_forward.1} parent=63 // pred_check
          %p425 = pneg %p72
        $region66: #{fcn_forward.1} parent=63 // pred_check_branch
          %427 = sbr.rel (%p425) target = $region68
        $region67: #{fcn_forward.1} parent=63 // pred_region
          %428 = dma.done %s421, 98304
        $region68: #{fcn_forward.1} parent=63 // pred_fallthru
          _
        // Predicated region
        $region69: #{fcn_forward.1} parent=63 // pred_check
          %p429 = pneg %p93
        $region70: #{fcn_forward.1} parent=63 // pred_check_branch
          %431 = sbr.rel (%p429) target = $region72
        $region71: #{fcn_forward.1} parent=63 // pred_region
          %432 = dma.done [#allocation7], 128
        $region72: #{fcn_forward.1} parent=63 // pred_fallthru
          _
        // Predicated region
        $region73: #{fcn_forward.1} parent=63 // pred_check
          %p433 = pneg %p114
        $region74: #{fcn_forward.1} parent=63 // pred_check_branch
          %435 = sbr.rel (%p433) target = $region76
        $region75: #{fcn_forward.1} parent=63 // pred_region
          %436 = dma.done [#allocation7], 16384
        $region76: #{fcn_forward.1} parent=63 // pred_fallthru
          _
        // Predicated region
        $region77: #{fcn_forward.1} parent=63 // pred_check
          %p437 = pneg %p135
        $region78: #{fcn_forward.1} parent=63 // pred_check_branch
          %439 = sbr.rel (%p437) target = $region80
        $region79: #{fcn_forward.1} parent=63 // pred_region
          %440 = dma.done [#allocation10], 32
        $region80: #{fcn_forward.1} parent=63 // pred_fallthru
          _
        // Predicated region
        $region81: #{fcn_forward.1} parent=63 // pred_check
          %p441 = pneg %p156
        $region82: #{fcn_forward.1} parent=63 // pred_check_branch
          %443 = sbr.rel (%p441) target = $region84
        $region83: #{fcn_forward.1} parent=63 // pred_region
          %444 = dma.done [#allocation10], 2048
        $region84: #{fcn_forward.1} parent=63 // pred_fallthru
          _
        // Predicated region
        $region85: #{fcn_forward.1} parent=63 // pred_check
          %p445 = pneg %p177
        $region86: #{fcn_forward.1} parent=63 // pred_check_branch
          %447 = sbr.rel (%p445) target = $region88
        $region87: #{fcn_forward.1} parent=63 // pred_region
          %448 = dma.done [#allocation13], 16
        $region88: #{fcn_forward.1} parent=63 // pred_fallthru
          _
        // Predicated region
        $region89: #{fcn_forward.1} parent=63 // pred_check
          %p449 = pneg %p219
        $region90: #{fcn_forward.1} parent=63 // pred_check_branch
          %451 = sbr.rel (%p449) target = $region92
        $region91: #{fcn_forward.1} parent=63 // pred_region
          %452 = dma.done [#allocation13], 16
        $region92: #{fcn_forward.1} parent=63 // pred_fallthru
          _
        // Predicated region
        $region93: #{fcn_forward.1} parent=63 // pred_check
          %p453 = pneg %p261
        $region94: #{fcn_forward.1} parent=63 // pred_check_branch
          %455 = sbr.rel (%p453) target = $region96
        $region95: #{fcn_forward.1} parent=63 // pred_region
          %456 = dma.done [#allocation16], 16
        $region96: #{fcn_forward.1} parent=63 // pred_fallthru
          _
        %p457 = pneg %p46
        %p458 = pneg %p43
        %s459 = sand.u32 %s59, 1
        %s460 = scalar_lea.sflag [#allocation4], %s459
        %s461 = sand.u32 %s59, 1
        %s462 = smul.addr %s461, 6144
        %s463 = scalar_lea.vmem [#allocation3], %s462
        %p464 = pneg %p72
        %p465 = pneg %p69
        %p466 = pneg %p93
        %p467 = pneg %p90
        %p468 = pneg %p114
        %p469 = pneg %p111
        %p470 = pneg %p135
        %p471 = pneg %p132
        %p472 = pneg %p156
        %p473 = pneg %p153
        %p474 = pneg %p177
        %p475 = pneg %p174
        %p476 = pneg %p198
        %p477 = pneg %p195
        %p478 = pneg %p219
        %p479 = pneg %p216
        %p480 = pneg %p240
        %p481 = pneg %p237
        %p482 = pneg %p261
        %p483 = pneg %p258
        %p484 = pneg %p282
        %p485 = pneg %p279
        %s486 = smul.u32 192, %s30
        %p488 = scmp.eq.s32.totalorder %s30, 0
        // Predicated region
        $region97: #{fcn_forward.1} parent=63 // pred_check
          %p489 = pneg %p488
        $region98: #{fcn_forward.1} parent=63 // pred_check_branch
          %491 = sbr.rel (%p489) target = $region100
        $region99: #{fcn_forward.1} parent=63 // pred_region
          %492 = vst [vmem:[#allocation2] sm:$0xff] 0.0
          %493 = vst [vmem:[#allocation2 + $0x8] sm:$0xff] 0.0
          %494 = vst [vmem:[#allocation2 + $0x10] sm:$0xff] 0.0
          %495 = vst [vmem:[#allocation2 + $0x18] sm:$0xff] 0.0
          %496 = vst [vmem:[#allocation2 + $0x20] sm:$0xff] 0.0
          %497 = vst [vmem:[#allocation2 + $0x28] sm:$0xff] 0.0
          %498 = vst [vmem:[#allocation2 + $0x30] sm:$0xff] 0.0
          %499 = vst [vmem:[#allocation2 + $0x38] sm:$0xff] 0.0
        $region100: #{fcn_forward.1} parent=63 // pred_fallthru
          _
        %s500 = smul.u32 %s30, 1536
        %s501 = sshra.s32 %s500, 7
        %s502 = sand.u32 %s500, 127
        %s503 = smul.addr %s501, 4
        %s504 = scalar_lea.vmem %s0, %s503
        %v505 = vld [vmem:[%s504] sm:$0xff]
        %v506 = vld [vmem:[%s504 + $0x8] sm:$0xff]
        %v507 = vld [vmem:[%s504 + $0x10] sm:$0xff]
        %v508 = vld [vmem:[%s504 + $0x18] sm:$0xff]
        %v509 = vld [vmem:[%s504 + $0x20] sm:$0xff]
        %v510 = vld [vmem:[%s504 + $0x28] sm:$0xff]
        %v511 = vld [vmem:[#allocation2] sm:$0xff]
        %v512 = vld [vmem:[#allocation2 + $0x8] sm:$0xff]
        %v513 = vld [vmem:[#allocation2 + $0x10] sm:$0xff]
        %v514 = vld [vmem:[#allocation2 + $0x18] sm:$0xff]
        %v515 = vld [vmem:[#allocation2 + $0x20] sm:$0xff]
        %v516 = vld [vmem:[#allocation2 + $0x28] sm:$0xff]
        %v517 = vld [vmem:[#allocation2 + $0x30] sm:$0xff]
        %v518 = vld [vmem:[#allocation2 + $0x38] sm:$0xff]
        %v519 = vld [vmem:[%s424] sm:$0xff]
        %v520 = vld [vmem:[%s424 + $0x8] sm:$0xff]
        %v521 = vld [vmem:[%s424 + $0x10] sm:$0xff]
        %v522 = vld [vmem:[%s424 + $0x18] sm:$0xff]
        %v523 = vld [vmem:[%s424 + $0x20] sm:$0xff]
        %v524 = vld [vmem:[%s424 + $0x28] sm:$0xff]
        %v525 = vld [vmem:[%s424 + $0x30] sm:$0xff]
        %v526 = vld [vmem:[%s424 + $0x38] sm:$0xff]
        %v527 = vld [vmem:[%s424 + $0x40] sm:$0xff]
        %v528 = vld [vmem:[%s424 + $0x48] sm:$0xff]
        %v529 = vld [vmem:[%s424 + $0x50] sm:$0xff]
        %v530 = vld [vmem:[%s424 + $0x58] sm:$0xff]
        %v531 = vld [vmem:[%s424 + $0x60] sm:$0xff]
        %v532 = vld [vmem:[%s424 + $0x68] sm:$0xff]
        %v533 = vld [vmem:[%s424 + $0x70] sm:$0xff]
        %v534 = vld [vmem:[%s424 + $0x78] sm:$0xff]
        %v535 = vld [vmem:[%s424 + $0x80] sm:$0xff]
        %v536 = vld [vmem:[%s424 + $0x88] sm:$0xff]
        %v537 = vld [vmem:[%s424 + $0x90] sm:$0xff]
        %v538 = vld [vmem:[%s424 + $0x98] sm:$0xff]
        %v539 = vld [vmem:[%s424 + $0xa0] sm:$0xff]
        %v540 = vld [vmem:[%s424 + $0xa8] sm:$0xff]
        %v541 = vld [vmem:[%s424 + $0xb0] sm:$0xff]
        %v542 = vld [vmem:[%s424 + $0xb8] sm:$0xff]
        %v543 = vld [vmem:[%s424 + $0xc0] sm:$0xff]
        %v544 = vld [vmem:[%s424 + $0xc8] sm:$0xff]
        %v545 = vld [vmem:[%s424 + $0xd0] sm:$0xff]
        %v546 = vld [vmem:[%s424 + $0xd8] sm:$0xff]
        %v547 = vld [vmem:[%s424 + $0xe0] sm:$0xff]
        %v548 = vld [vmem:[%s424 + $0xe8] sm:$0xff]
        %v549 = vld [vmem:[%s424 + $0xf0] sm:$0xff]
        %v550 = vld [vmem:[%s424 + $0xf8] sm:$0xff]
        %v551 = vld [vmem:[%s424 + $0x100] sm:$0xff]
        %v552 = vld [vmem:[%s424 + $0x108] sm:$0xff]
        %v553 = vld [vmem:[%s424 + $0x110] sm:$0xff]
        %v554 = vld [vmem:[%s424 + $0x118] sm:$0xff]
        %v555 = vld [vmem:[%s424 + $0x120] sm:$0xff]
        %v556 = vld [vmem:[%s424 + $0x128] sm:$0xff]
        %v557 = vld [vmem:[%s424 + $0x130] sm:$0xff]
        %v558 = vld [vmem:[%s424 + $0x138] sm:$0xff]
        %v559 = vld [vmem:[%s424 + $0x140] sm:$0xff]
        %v560 = vld [vmem:[%s424 + $0x148] sm:$0xff]
        %v561 = vld [vmem:[%s424 + $0x150] sm:$0xff]
        %v562 = vld [vmem:[%s424 + $0x158] sm:$0xff]
        %v563 = vld [vmem:[%s424 + $0x160] sm:$0xff]
        %v564 = vld [vmem:[%s424 + $0x168] sm:$0xff]
        %v565 = vld [vmem:[%s424 + $0x170] sm:$0xff]
        %v566 = vld [vmem:[%s424 + $0x178] sm:$0xff]
        %v567 = vld [vmem:[%s424 + $0x180] sm:$0xff]
        %v568 = vld [vmem:[%s424 + $0x188] sm:$0xff]
        %v569 = vld [vmem:[%s424 + $0x190] sm:$0xff]
        %v570 = vld [vmem:[%s424 + $0x198] sm:$0xff]
        %v571 = vld [vmem:[%s424 + $0x1a0] sm:$0xff]
        %v572 = vld [vmem:[%s424 + $0x1a8] sm:$0xff]
        %v573 = vld [vmem:[%s424 + $0x1b0] sm:$0xff]
        %v574 = vld [vmem:[%s424 + $0x1b8] sm:$0xff]
        %v575 = vld [vmem:[%s424 + $0x1c0] sm:$0xff]
        %v576 = vld [vmem:[%s424 + $0x1c8] sm:$0xff]
        %v577 = vld [vmem:[%s424 + $0x1d0] sm:$0xff]
        %v578 = vld [vmem:[%s424 + $0x1d8] sm:$0xff]
        %v579 = vld [vmem:[%s424 + $0x1e0] sm:$0xff]
        %v580 = vld [vmem:[%s424 + $0x1e8] sm:$0xff]
        %v581 = vld [vmem:[%s424 + $0x1f0] sm:$0xff]
        %v582 = vld [vmem:[%s424 + $0x1f8] sm:$0xff]
        %v583 = vld [vmem:[%s424 + $0x200] sm:$0xff]
        %v584 = vld [vmem:[%s424 + $0x208] sm:$0xff]
        %v585 = vld [vmem:[%s424 + $0x210] sm:$0xff]
        %v586 = vld [vmem:[%s424 + $0x218] sm:$0xff]
        %v587 = vld [vmem:[%s424 + $0x220] sm:$0xff]
        %v588 = vld [vmem:[%s424 + $0x228] sm:$0xff]
        %v589 = vld [vmem:[%s424 + $0x230] sm:$0xff]
        %v590 = vld [vmem:[%s424 + $0x238] sm:$0xff]
        %v591 = vld [vmem:[%s424 + $0x240] sm:$0xff]
        %v592 = vld [vmem:[%s424 + $0x248] sm:$0xff]
        %v593 = vld [vmem:[%s424 + $0x250] sm:$0xff]
        %v594 = vld [vmem:[%s424 + $0x258] sm:$0xff]
        %v595 = vld [vmem:[%s424 + $0x260] sm:$0xff]
        %v596 = vld [vmem:[%s424 + $0x268] sm:$0xff]
        %v597 = vld [vmem:[%s424 + $0x270] sm:$0xff]
        %v598 = vld [vmem:[%s424 + $0x278] sm:$0xff]
        %v599 = vld [vmem:[%s424 + $0x280] sm:$0xff]
        %v600 = vld [vmem:[%s424 + $0x288] sm:$0xff]
        %v601 = vld [vmem:[%s424 + $0x290] sm:$0xff]
        %v602 = vld [vmem:[%s424 + $0x298] sm:$0xff]
        %v603 = vld [vmem:[%s424 + $0x2a0] sm:$0xff]
        %v604 = vld [vmem:[%s424 + $0x2a8] sm:$0xff]
        %v605 = vld [vmem:[%s424 + $0x2b0] sm:$0xff]
        %v606 = vld [vmem:[%s424 + $0x2b8] sm:$0xff]
        %v607 = vld [vmem:[%s424 + $0x2c0] sm:$0xff]
        %v608 = vld [vmem:[%s424 + $0x2c8] sm:$0xff]
        %v609 = vld [vmem:[%s424 + $0x2d0] sm:$0xff]
        %v610 = vld [vmem:[%s424 + $0x2d8] sm:$0xff]
        %v611 = vld [vmem:[%s424 + $0x2e0] sm:$0xff]
        %v612 = vld [vmem:[%s424 + $0x2e8] sm:$0xff]
        %v613 = vld [vmem:[%s424 + $0x2f0] sm:$0xff]
        %v614 = vld [vmem:[%s424 + $0x2f8] sm:$0xff]
        %v615 = vld [vmem:[%s424 + $0x300] sm:$0xff]
        %v616 = vld [vmem:[%s424 + $0x308] sm:$0xff]
        %v617 = vld [vmem:[%s424 + $0x310] sm:$0xff]
        %v618 = vld [vmem:[%s424 + $0x318] sm:$0xff]
        %v619 = vld [vmem:[%s424 + $0x320] sm:$0xff]
        %v620 = vld [vmem:[%s424 + $0x328] sm:$0xff]
        %v621 = vld [vmem:[%s424 + $0x330] sm:$0xff]
        %v622 = vld [vmem:[%s424 + $0x338] sm:$0xff]
        %v623 = vld [vmem:[%s424 + $0x340] sm:$0xff]
        %v624 = vld [vmem:[%s424 + $0x348] sm:$0xff]
        %v625 = vld [vmem:[%s424 + $0x350] sm:$0xff]
        %v626 = vld [vmem:[%s424 + $0x358] sm:$0xff]
        %v627 = vld [vmem:[%s424 + $0x360] sm:$0xff]
        %v628 = vld [vmem:[%s424 + $0x368] sm:$0xff]
        %v629 = vld [vmem:[%s424 + $0x370] sm:$0xff]
        %v630 = vld [vmem:[%s424 + $0x378] sm:$0xff]
        %v631 = vld [vmem:[%s424 + $0x380] sm:$0xff]
        %v632 = vld [vmem:[%s424 + $0x388] sm:$0xff]
        %v633 = vld [vmem:[%s424 + $0x390] sm:$0xff]
        %v634 = vld [vmem:[%s424 + $0x398] sm:$0xff]
        %v635 = vld [vmem:[%s424 + $0x3a0] sm:$0xff]
        %v636 = vld [vmem:[%s424 + $0x3a8] sm:$0xff]
        %v637 = vld [vmem:[%s424 + $0x3b0] sm:$0xff]
        %v638 = vld [vmem:[%s424 + $0x3b8] sm:$0xff]
        %v639 = vld [vmem:[%s424 + $0x3c0] sm:$0xff]
        %v640 = vld [vmem:[%s424 + $0x3c8] sm:$0xff]
        %v641 = vld [vmem:[%s424 + $0x3d0] sm:$0xff]
        %v642 = vld [vmem:[%s424 + $0x3d8] sm:$0xff]
        %v643 = vld [vmem:[%s424 + $0x3e0] sm:$0xff]
        %v644 = vld [vmem:[%s424 + $0x3e8] sm:$0xff]
        %v645 = vld [vmem:[%s424 + $0x3f0] sm:$0xff]
        %v646 = vld [vmem:[%s424 + $0x3f8] sm:$0xff]
        %v647 = vld [vmem:[%s424 + $0x400] sm:$0xff]
        %v648 = vld [vmem:[%s424 + $0x408] sm:$0xff]
        %v649 = vld [vmem:[%s424 + $0x410] sm:$0xff]
        %v650 = vld [vmem:[%s424 + $0x418] sm:$0xff]
        %v651 = vld [vmem:[%s424 + $0x420] sm:$0xff]
        %v652 = vld [vmem:[%s424 + $0x428] sm:$0xff]
        %v653 = vld [vmem:[%s424 + $0x430] sm:$0xff]
        %v654 = vld [vmem:[%s424 + $0x438] sm:$0xff]
        %v655 = vld [vmem:[%s424 + $0x440] sm:$0xff]
        %v656 = vld [vmem:[%s424 + $0x448] sm:$0xff]
        %v657 = vld [vmem:[%s424 + $0x450] sm:$0xff]
        %v658 = vld [vmem:[%s424 + $0x458] sm:$0xff]
        %v659 = vld [vmem:[%s424 + $0x460] sm:$0xff]
        %v660 = vld [vmem:[%s424 + $0x468] sm:$0xff]
        %v661 = vld [vmem:[%s424 + $0x470] sm:$0xff]
        %v662 = vld [vmem:[%s424 + $0x478] sm:$0xff]
        %v663 = vld [vmem:[%s424 + $0x480] sm:$0xff]
        %v664 = vld [vmem:[%s424 + $0x488] sm:$0xff]
        %v665 = vld [vmem:[%s424 + $0x490] sm:$0xff]
        %v666 = vld [vmem:[%s424 + $0x498] sm:$0xff]
        %v667 = vld [vmem:[%s424 + $0x4a0] sm:$0xff]
        %v668 = vld [vmem:[%s424 + $0x4a8] sm:$0xff]
        %v669 = vld [vmem:[%s424 + $0x4b0] sm:$0xff]
        %v670 = vld [vmem:[%s424 + $0x4b8] sm:$0xff]
        %v671 = vld [vmem:[%s424 + $0x4c0] sm:$0xff]
        %v672 = vld [vmem:[%s424 + $0x4c8] sm:$0xff]
        %v673 = vld [vmem:[%s424 + $0x4d0] sm:$0xff]
        %v674 = vld [vmem:[%s424 + $0x4d8] sm:$0xff]
        %v675 = vld [vmem:[%s424 + $0x4e0] sm:$0xff]
        %v676 = vld [vmem:[%s424 + $0x4e8] sm:$0xff]
        %v677 = vld [vmem:[%s424 + $0x4f0] sm:$0xff]
        %v678 = vld [vmem:[%s424 + $0x4f8] sm:$0xff]
        %v679 = vld [vmem:[%s424 + $0x500] sm:$0xff]
        %v680 = vld [vmem:[%s424 + $0x508] sm:$0xff]
        %v681 = vld [vmem:[%s424 + $0x510] sm:$0xff]
        %v682 = vld [vmem:[%s424 + $0x518] sm:$0xff]
        %v683 = vld [vmem:[%s424 + $0x520] sm:$0xff]
        %v684 = vld [vmem:[%s424 + $0x528] sm:$0xff]
        %v685 = vld [vmem:[%s424 + $0x530] sm:$0xff]
        %v686 = vld [vmem:[%s424 + $0x538] sm:$0xff]
        %v687 = vld [vmem:[%s424 + $0x540] sm:$0xff]
        %v688 = vld [vmem:[%s424 + $0x548] sm:$0xff]
        %v689 = vld [vmem:[%s424 + $0x550] sm:$0xff]
        %v690 = vld [vmem:[%s424 + $0x558] sm:$0xff]
        %v691 = vld [vmem:[%s424 + $0x560] sm:$0xff]
        %v692 = vld [vmem:[%s424 + $0x568] sm:$0xff]
        %v693 = vld [vmem:[%s424 + $0x570] sm:$0xff]
        %v694 = vld [vmem:[%s424 + $0x578] sm:$0xff]
        %v695 = vld [vmem:[%s424 + $0x580] sm:$0xff]
        %v696 = vld [vmem:[%s424 + $0x588] sm:$0xff]
        %v697 = vld [vmem:[%s424 + $0x590] sm:$0xff]
        %v698 = vld [vmem:[%s424 + $0x598] sm:$0xff]
        %v699 = vld [vmem:[%s424 + $0x5a0] sm:$0xff]
        %v700 = vld [vmem:[%s424 + $0x5a8] sm:$0xff]
        %v701 = vld [vmem:[%s424 + $0x5b0] sm:$0xff]
        %v702 = vld [vmem:[%s424 + $0x5b8] sm:$0xff]
        %v703 = vld [vmem:[%s424 + $0x5c0] sm:$0xff]
        %v704 = vld [vmem:[%s424 + $0x5c8] sm:$0xff]
        %v705 = vld [vmem:[%s424 + $0x5d0] sm:$0xff]
        %v706 = vld [vmem:[%s424 + $0x5d8] sm:$0xff]
        %v707 = vld [vmem:[%s424 + $0x5e0] sm:$0xff]
        %v708 = vld [vmem:[%s424 + $0x5e8] sm:$0xff]
        %v709 = vld [vmem:[%s424 + $0x5f0] sm:$0xff]
        %v710 = vld [vmem:[%s424 + $0x5f8] sm:$0xff]
        %v711 = vld [vmem:[%s424 + $0x600] sm:$0xff]
        %v712 = vld [vmem:[%s424 + $0x608] sm:$0xff]
        %v713 = vld [vmem:[%s424 + $0x610] sm:$0xff]
        %v714 = vld [vmem:[%s424 + $0x618] sm:$0xff]
        %v715 = vld [vmem:[%s424 + $0x620] sm:$0xff]
        %v716 = vld [vmem:[%s424 + $0x628] sm:$0xff]
        %v717 = vld [vmem:[%s424 + $0x630] sm:$0xff]
        %v718 = vld [vmem:[%s424 + $0x638] sm:$0xff]
        %v719 = vld [vmem:[%s424 + $0x640] sm:$0xff]
        %v720 = vld [vmem:[%s424 + $0x648] sm:$0xff]
        %v721 = vld [vmem:[%s424 + $0x650] sm:$0xff]
        %v722 = vld [vmem:[%s424 + $0x658] sm:$0xff]
        %v723 = vld [vmem:[%s424 + $0x660] sm:$0xff]
        %v724 = vld [vmem:[%s424 + $0x668] sm:$0xff]
        %v725 = vld [vmem:[%s424 + $0x670] sm:$0xff]
        %v726 = vld [vmem:[%s424 + $0x678] sm:$0xff]
        %v727 = vld [vmem:[%s424 + $0x680] sm:$0xff]
        %v728 = vld [vmem:[%s424 + $0x688] sm:$0xff]
        %v729 = vld [vmem:[%s424 + $0x690] sm:$0xff]
        %v730 = vld [vmem:[%s424 + $0x698] sm:$0xff]
        %v731 = vld [vmem:[%s424 + $0x6a0] sm:$0xff]
        %v732 = vld [vmem:[%s424 + $0x6a8] sm:$0xff]
        %v733 = vld [vmem:[%s424 + $0x6b0] sm:$0xff]
        %v734 = vld [vmem:[%s424 + $0x6b8] sm:$0xff]
        %v735 = vld [vmem:[%s424 + $0x6c0] sm:$0xff]
        %v736 = vld [vmem:[%s424 + $0x6c8] sm:$0xff]
        %v737 = vld [vmem:[%s424 + $0x6d0] sm:$0xff]
        %v738 = vld [vmem:[%s424 + $0x6d8] sm:$0xff]
        %v739 = vld [vmem:[%s424 + $0x6e0] sm:$0xff]
        %v740 = vld [vmem:[%s424 + $0x6e8] sm:$0xff]
        %v741 = vld [vmem:[%s424 + $0x6f0] sm:$0xff]
        %v742 = vld [vmem:[%s424 + $0x6f8] sm:$0xff]
        %v743 = vld [vmem:[%s424 + $0x700] sm:$0xff]
        %v744 = vld [vmem:[%s424 + $0x708] sm:$0xff]
        %v745 = vld [vmem:[%s424 + $0x710] sm:$0xff]
        %v746 = vld [vmem:[%s424 + $0x718] sm:$0xff]
        %v747 = vld [vmem:[%s424 + $0x720] sm:$0xff]
        %v748 = vld [vmem:[%s424 + $0x728] sm:$0xff]
        %v749 = vld [vmem:[%s424 + $0x730] sm:$0xff]
        %v750 = vld [vmem:[%s424 + $0x738] sm:$0xff]
        %v751 = vld [vmem:[%s424 + $0x740] sm:$0xff]
        %v752 = vld [vmem:[%s424 + $0x748] sm:$0xff]
        %v753 = vld [vmem:[%s424 + $0x750] sm:$0xff]
        %v754 = vld [vmem:[%s424 + $0x758] sm:$0xff]
        %v755 = vld [vmem:[%s424 + $0x760] sm:$0xff]
        %v756 = vld [vmem:[%s424 + $0x768] sm:$0xff]
        %v757 = vld [vmem:[%s424 + $0x770] sm:$0xff]
        %v758 = vld [vmem:[%s424 + $0x778] sm:$0xff]
        %v759 = vld [vmem:[%s424 + $0x780] sm:$0xff]
        %v760 = vld [vmem:[%s424 + $0x788] sm:$0xff]
        %v761 = vld [vmem:[%s424 + $0x790] sm:$0xff]
        %v762 = vld [vmem:[%s424 + $0x798] sm:$0xff]
        %v763 = vld [vmem:[%s424 + $0x7a0] sm:$0xff]
        %v764 = vld [vmem:[%s424 + $0x7a8] sm:$0xff]
        %v765 = vld [vmem:[%s424 + $0x7b0] sm:$0xff]
        %v766 = vld [vmem:[%s424 + $0x7b8] sm:$0xff]
        %v767 = vld [vmem:[%s424 + $0x7c0] sm:$0xff]
        %v768 = vld [vmem:[%s424 + $0x7c8] sm:$0xff]
        %v769 = vld [vmem:[%s424 + $0x7d0] sm:$0xff]
        %v770 = vld [vmem:[%s424 + $0x7d8] sm:$0xff]
        %v771 = vld [vmem:[%s424 + $0x7e0] sm:$0xff]
        %v772 = vld [vmem:[%s424 + $0x7e8] sm:$0xff]
        %v773 = vld [vmem:[%s424 + $0x7f0] sm:$0xff]
        %v774 = vld [vmem:[%s424 + $0x7f8] sm:$0xff]
        %v775 = vld [vmem:[%s424 + $0x800] sm:$0xff]
        %v776 = vld [vmem:[%s424 + $0x808] sm:$0xff]
        %v777 = vld [vmem:[%s424 + $0x810] sm:$0xff]
        %v778 = vld [vmem:[%s424 + $0x818] sm:$0xff]
        %v779 = vld [vmem:[%s424 + $0x820] sm:$0xff]
        %v780 = vld [vmem:[%s424 + $0x828] sm:$0xff]
        %v781 = vld [vmem:[%s424 + $0x830] sm:$0xff]
        %v782 = vld [vmem:[%s424 + $0x838] sm:$0xff]
        %v783 = vld [vmem:[%s424 + $0x840] sm:$0xff]
        %v784 = vld [vmem:[%s424 + $0x848] sm:$0xff]
        %v785 = vld [vmem:[%s424 + $0x850] sm:$0xff]
        %v786 = vld [vmem:[%s424 + $0x858] sm:$0xff]
        %v787 = vld [vmem:[%s424 + $0x860] sm:$0xff]
        %v788 = vld [vmem:[%s424 + $0x868] sm:$0xff]
        %v789 = vld [vmem:[%s424 + $0x870] sm:$0xff]
        %v790 = vld [vmem:[%s424 + $0x878] sm:$0xff]
        %v791 = vld [vmem:[%s424 + $0x880] sm:$0xff]
        %v792 = vld [vmem:[%s424 + $0x888] sm:$0xff]
        %v793 = vld [vmem:[%s424 + $0x890] sm:$0xff]
        %v794 = vld [vmem:[%s424 + $0x898] sm:$0xff]
        %v795 = vld [vmem:[%s424 + $0x8a0] sm:$0xff]
        %v796 = vld [vmem:[%s424 + $0x8a8] sm:$0xff]
        %v797 = vld [vmem:[%s424 + $0x8b0] sm:$0xff]
        %v798 = vld [vmem:[%s424 + $0x8b8] sm:$0xff]
        %v799 = vld [vmem:[%s424 + $0x8c0] sm:$0xff]
        %v800 = vld [vmem:[%s424 + $0x8c8] sm:$0xff]
        %v801 = vld [vmem:[%s424 + $0x8d0] sm:$0xff]
        %v802 = vld [vmem:[%s424 + $0x8d8] sm:$0xff]
        %v803 = vld [vmem:[%s424 + $0x8e0] sm:$0xff]
        %v804 = vld [vmem:[%s424 + $0x8e8] sm:$0xff]
        %v805 = vld [vmem:[%s424 + $0x8f0] sm:$0xff]
        %v806 = vld [vmem:[%s424 + $0x8f8] sm:$0xff]
        %v807 = vld [vmem:[%s424 + $0x900] sm:$0xff]
        %v808 = vld [vmem:[%s424 + $0x908] sm:$0xff]
        %v809 = vld [vmem:[%s424 + $0x910] sm:$0xff]
        %v810 = vld [vmem:[%s424 + $0x918] sm:$0xff]
        %v811 = vld [vmem:[%s424 + $0x920] sm:$0xff]
        %v812 = vld [vmem:[%s424 + $0x928] sm:$0xff]
        %v813 = vld [vmem:[%s424 + $0x930] sm:$0xff]
        %v814 = vld [vmem:[%s424 + $0x938] sm:$0xff]
        %v815 = vld [vmem:[%s424 + $0x940] sm:$0xff]
        %v816 = vld [vmem:[%s424 + $0x948] sm:$0xff]
        %v817 = vld [vmem:[%s424 + $0x950] sm:$0xff]
        %v818 = vld [vmem:[%s424 + $0x958] sm:$0xff]
        %v819 = vld [vmem:[%s424 + $0x960] sm:$0xff]
        %v820 = vld [vmem:[%s424 + $0x968] sm:$0xff]
        %v821 = vld [vmem:[%s424 + $0x970] sm:$0xff]
        %v822 = vld [vmem:[%s424 + $0x978] sm:$0xff]
        %v823 = vld [vmem:[%s424 + $0x980] sm:$0xff]
        %v824 = vld [vmem:[%s424 + $0x988] sm:$0xff]
        %v825 = vld [vmem:[%s424 + $0x990] sm:$0xff]
        %v826 = vld [vmem:[%s424 + $0x998] sm:$0xff]
        %v827 = vld [vmem:[%s424 + $0x9a0] sm:$0xff]
        %v828 = vld [vmem:[%s424 + $0x9a8] sm:$0xff]
        %v829 = vld [vmem:[%s424 + $0x9b0] sm:$0xff]
        %v830 = vld [vmem:[%s424 + $0x9b8] sm:$0xff]
        %v831 = vld [vmem:[%s424 + $0x9c0] sm:$0xff]
        %v832 = vld [vmem:[%s424 + $0x9c8] sm:$0xff]
        %v833 = vld [vmem:[%s424 + $0x9d0] sm:$0xff]
        %v834 = vld [vmem:[%s424 + $0x9d8] sm:$0xff]
        %v835 = vld [vmem:[%s424 + $0x9e0] sm:$0xff]
        %v836 = vld [vmem:[%s424 + $0x9e8] sm:$0xff]
        %v837 = vld [vmem:[%s424 + $0x9f0] sm:$0xff]
        %v838 = vld [vmem:[%s424 + $0x9f8] sm:$0xff]
        %v839 = vld [vmem:[%s424 + $0xa00] sm:$0xff]
        %v840 = vld [vmem:[%s424 + $0xa08] sm:$0xff]
        %v841 = vld [vmem:[%s424 + $0xa10] sm:$0xff]
        %v842 = vld [vmem:[%s424 + $0xa18] sm:$0xff]
        %v843 = vld [vmem:[%s424 + $0xa20] sm:$0xff]
        %v844 = vld [vmem:[%s424 + $0xa28] sm:$0xff]
        %v845 = vld [vmem:[%s424 + $0xa30] sm:$0xff]
        %v846 = vld [vmem:[%s424 + $0xa38] sm:$0xff]
        %v847 = vld [vmem:[%s424 + $0xa40] sm:$0xff]
        %v848 = vld [vmem:[%s424 + $0xa48] sm:$0xff]
        %v849 = vld [vmem:[%s424 + $0xa50] sm:$0xff]
        %v850 = vld [vmem:[%s424 + $0xa58] sm:$0xff]
        %v851 = vld [vmem:[%s424 + $0xa60] sm:$0xff]
        %v852 = vld [vmem:[%s424 + $0xa68] sm:$0xff]
        %v853 = vld [vmem:[%s424 + $0xa70] sm:$0xff]
        %v854 = vld [vmem:[%s424 + $0xa78] sm:$0xff]
        %v855 = vld [vmem:[%s424 + $0xa80] sm:$0xff]
        %v856 = vld [vmem:[%s424 + $0xa88] sm:$0xff]
        %v857 = vld [vmem:[%s424 + $0xa90] sm:$0xff]
        %v858 = vld [vmem:[%s424 + $0xa98] sm:$0xff]
        %v859 = vld [vmem:[%s424 + $0xaa0] sm:$0xff]
        %v860 = vld [vmem:[%s424 + $0xaa8] sm:$0xff]
        %v861 = vld [vmem:[%s424 + $0xab0] sm:$0xff]
        %v862 = vld [vmem:[%s424 + $0xab8] sm:$0xff]
        %v863 = vld [vmem:[%s424 + $0xac0] sm:$0xff]
        %v864 = vld [vmem:[%s424 + $0xac8] sm:$0xff]
        %v865 = vld [vmem:[%s424 + $0xad0] sm:$0xff]
        %v866 = vld [vmem:[%s424 + $0xad8] sm:$0xff]
        %v867 = vld [vmem:[%s424 + $0xae0] sm:$0xff]
        %v868 = vld [vmem:[%s424 + $0xae8] sm:$0xff]
        %v869 = vld [vmem:[%s424 + $0xaf0] sm:$0xff]
        %v870 = vld [vmem:[%s424 + $0xaf8] sm:$0xff]
        %v871 = vld [vmem:[%s424 + $0xb00] sm:$0xff]
        %v872 = vld [vmem:[%s424 + $0xb08] sm:$0xff]
        %v873 = vld [vmem:[%s424 + $0xb10] sm:$0xff]
        %v874 = vld [vmem:[%s424 + $0xb18] sm:$0xff]
        %v875 = vld [vmem:[%s424 + $0xb20] sm:$0xff]
        %v876 = vld [vmem:[%s424 + $0xb28] sm:$0xff]
        %v877 = vld [vmem:[%s424 + $0xb30] sm:$0xff]
        %v878 = vld [vmem:[%s424 + $0xb38] sm:$0xff]
        %v879 = vld [vmem:[%s424 + $0xb40] sm:$0xff]
        %v880 = vld [vmem:[%s424 + $0xb48] sm:$0xff]
        %v881 = vld [vmem:[%s424 + $0xb50] sm:$0xff]
        %v882 = vld [vmem:[%s424 + $0xb58] sm:$0xff]
        %v883 = vld [vmem:[%s424 + $0xb60] sm:$0xff]
        %v884 = vld [vmem:[%s424 + $0xb68] sm:$0xff]
        %v885 = vld [vmem:[%s424 + $0xb70] sm:$0xff]
        %v886 = vld [vmem:[%s424 + $0xb78] sm:$0xff]
        %v887 = vld [vmem:[%s424 + $0xb80] sm:$0xff]
        %v888 = vld [vmem:[%s424 + $0xb88] sm:$0xff]
        %v889 = vld [vmem:[%s424 + $0xb90] sm:$0xff]
        %v890 = vld [vmem:[%s424 + $0xb98] sm:$0xff]
        %v891 = vld [vmem:[%s424 + $0xba0] sm:$0xff]
        %v892 = vld [vmem:[%s424 + $0xba8] sm:$0xff]
        %v893 = vld [vmem:[%s424 + $0xbb0] sm:$0xff]
        %v894 = vld [vmem:[%s424 + $0xbb8] sm:$0xff]
        %v895 = vld [vmem:[%s424 + $0xbc0] sm:$0xff]
        %v896 = vld [vmem:[%s424 + $0xbc8] sm:$0xff]
        %v897 = vld [vmem:[%s424 + $0xbd0] sm:$0xff]
        %v898 = vld [vmem:[%s424 + $0xbd8] sm:$0xff]
        %v899 = vld [vmem:[%s424 + $0xbe0] sm:$0xff]
        %v900 = vld [vmem:[%s424 + $0xbe8] sm:$0xff]
        %v901 = vld [vmem:[%s424 + $0xbf0] sm:$0xff]
        %v902 = vld [vmem:[%s424 + $0xbf8] sm:$0xff]
        %v903 = vld [vmem:[%s424 + $0xc00] sm:$0xff]
        %v904 = vld [vmem:[%s424 + $0xc08] sm:$0xff]
        %v905 = vld [vmem:[%s424 + $0xc10] sm:$0xff]
        %v906 = vld [vmem:[%s424 + $0xc18] sm:$0xff]
        %v907 = vld [vmem:[%s424 + $0xc20] sm:$0xff]
        %v908 = vld [vmem:[%s424 + $0xc28] sm:$0xff]
        %v909 = vld [vmem:[%s424 + $0xc30] sm:$0xff]
        %v910 = vld [vmem:[%s424 + $0xc38] sm:$0xff]
        %v911 = vld [vmem:[%s424 + $0xc40] sm:$0xff]
        %v912 = vld [vmem:[%s424 + $0xc48] sm:$0xff]
        %v913 = vld [vmem:[%s424 + $0xc50] sm:$0xff]
        %v914 = vld [vmem:[%s424 + $0xc58] sm:$0xff]
        %v915 = vld [vmem:[%s424 + $0xc60] sm:$0xff]
        %v916 = vld [vmem:[%s424 + $0xc68] sm:$0xff]
        %v917 = vld [vmem:[%s424 + $0xc70] sm:$0xff]
        %v918 = vld [vmem:[%s424 + $0xc78] sm:$0xff]
        %v919 = vld [vmem:[%s424 + $0xc80] sm:$0xff]
        %v920 = vld [vmem:[%s424 + $0xc88] sm:$0xff]
        %v921 = vld [vmem:[%s424 + $0xc90] sm:$0xff]
        %v922 = vld [vmem:[%s424 + $0xc98] sm:$0xff]
        %v923 = vld [vmem:[%s424 + $0xca0] sm:$0xff]
        %v924 = vld [vmem:[%s424 + $0xca8] sm:$0xff]
        %v925 = vld [vmem:[%s424 + $0xcb0] sm:$0xff]
        %v926 = vld [vmem:[%s424 + $0xcb8] sm:$0xff]
        %v927 = vld [vmem:[%s424 + $0xcc0] sm:$0xff]
        %v928 = vld [vmem:[%s424 + $0xcc8] sm:$0xff]
        %v929 = vld [vmem:[%s424 + $0xcd0] sm:$0xff]
        %v930 = vld [vmem:[%s424 + $0xcd8] sm:$0xff]
        %v931 = vld [vmem:[%s424 + $0xce0] sm:$0xff]
        %v932 = vld [vmem:[%s424 + $0xce8] sm:$0xff]
        %v933 = vld [vmem:[%s424 + $0xcf0] sm:$0xff]
        %v934 = vld [vmem:[%s424 + $0xcf8] sm:$0xff]
        %v935 = vld [vmem:[%s424 + $0xd00] sm:$0xff]
        %v936 = vld [vmem:[%s424 + $0xd08] sm:$0xff]
        %v937 = vld [vmem:[%s424 + $0xd10] sm:$0xff]
        %v938 = vld [vmem:[%s424 + $0xd18] sm:$0xff]
        %v939 = vld [vmem:[%s424 + $0xd20] sm:$0xff]
        %v940 = vld [vmem:[%s424 + $0xd28] sm:$0xff]
        %v941 = vld [vmem:[%s424 + $0xd30] sm:$0xff]
        %v942 = vld [vmem:[%s424 + $0xd38] sm:$0xff]
        %v943 = vld [vmem:[%s424 + $0xd40] sm:$0xff]
        %v944 = vld [vmem:[%s424 + $0xd48] sm:$0xff]
        %v945 = vld [vmem:[%s424 + $0xd50] sm:$0xff]
        %v946 = vld [vmem:[%s424 + $0xd58] sm:$0xff]
        %v947 = vld [vmem:[%s424 + $0xd60] sm:$0xff]
        %v948 = vld [vmem:[%s424 + $0xd68] sm:$0xff]
        %v949 = vld [vmem:[%s424 + $0xd70] sm:$0xff]
        %v950 = vld [vmem:[%s424 + $0xd78] sm:$0xff]
        %v951 = vld [vmem:[%s424 + $0xd80] sm:$0xff]
        %v952 = vld [vmem:[%s424 + $0xd88] sm:$0xff]
        %v953 = vld [vmem:[%s424 + $0xd90] sm:$0xff]
        %v954 = vld [vmem:[%s424 + $0xd98] sm:$0xff]
        %v955 = vld [vmem:[%s424 + $0xda0] sm:$0xff]
        %v956 = vld [vmem:[%s424 + $0xda8] sm:$0xff]
        %v957 = vld [vmem:[%s424 + $0xdb0] sm:$0xff]
        %v958 = vld [vmem:[%s424 + $0xdb8] sm:$0xff]
        %v959 = vld [vmem:[%s424 + $0xdc0] sm:$0xff]
        %v960 = vld [vmem:[%s424 + $0xdc8] sm:$0xff]
        %v961 = vld [vmem:[%s424 + $0xdd0] sm:$0xff]
        %v962 = vld [vmem:[%s424 + $0xdd8] sm:$0xff]
        %v963 = vld [vmem:[%s424 + $0xde0] sm:$0xff]
        %v964 = vld [vmem:[%s424 + $0xde8] sm:$0xff]
        %v965 = vld [vmem:[%s424 + $0xdf0] sm:$0xff]
        %v966 = vld [vmem:[%s424 + $0xdf8] sm:$0xff]
        %v967 = vld [vmem:[%s424 + $0xe00] sm:$0xff]
        %v968 = vld [vmem:[%s424 + $0xe08] sm:$0xff]
        %v969 = vld [vmem:[%s424 + $0xe10] sm:$0xff]
        %v970 = vld [vmem:[%s424 + $0xe18] sm:$0xff]
        %v971 = vld [vmem:[%s424 + $0xe20] sm:$0xff]
        %v972 = vld [vmem:[%s424 + $0xe28] sm:$0xff]
        %v973 = vld [vmem:[%s424 + $0xe30] sm:$0xff]
        %v974 = vld [vmem:[%s424 + $0xe38] sm:$0xff]
        %v975 = vld [vmem:[%s424 + $0xe40] sm:$0xff]
        %v976 = vld [vmem:[%s424 + $0xe48] sm:$0xff]
        %v977 = vld [vmem:[%s424 + $0xe50] sm:$0xff]
        %v978 = vld [vmem:[%s424 + $0xe58] sm:$0xff]
        %v979 = vld [vmem:[%s424 + $0xe60] sm:$0xff]
        %v980 = vld [vmem:[%s424 + $0xe68] sm:$0xff]
        %v981 = vld [vmem:[%s424 + $0xe70] sm:$0xff]
        %v982 = vld [vmem:[%s424 + $0xe78] sm:$0xff]
        %v983 = vld [vmem:[%s424 + $0xe80] sm:$0xff]
        %v984 = vld [vmem:[%s424 + $0xe88] sm:$0xff]
        %v985 = vld [vmem:[%s424 + $0xe90] sm:$0xff]
        %v986 = vld [vmem:[%s424 + $0xe98] sm:$0xff]
        %v987 = vld [vmem:[%s424 + $0xea0] sm:$0xff]
        %v988 = vld [vmem:[%s424 + $0xea8] sm:$0xff]
        %v989 = vld [vmem:[%s424 + $0xeb0] sm:$0xff]
        %v990 = vld [vmem:[%s424 + $0xeb8] sm:$0xff]
        %v991 = vld [vmem:[%s424 + $0xec0] sm:$0xff]
        %v992 = vld [vmem:[%s424 + $0xec8] sm:$0xff]
        %v993 = vld [vmem:[%s424 + $0xed0] sm:$0xff]
        %v994 = vld [vmem:[%s424 + $0xed8] sm:$0xff]
        %v995 = vld [vmem:[%s424 + $0xee0] sm:$0xff]
        %v996 = vld [vmem:[%s424 + $0xee8] sm:$0xff]
        %v997 = vld [vmem:[%s424 + $0xef0] sm:$0xff]
        %v998 = vld [vmem:[%s424 + $0xef8] sm:$0xff]
        %v999 = vld [vmem:[%s424 + $0xf00] sm:$0xff]
        %v1000 = vld [vmem:[%s424 + $0xf08] sm:$0xff]
        %v1001 = vld [vmem:[%s424 + $0xf10] sm:$0xff]
        %v1002 = vld [vmem:[%s424 + $0xf18] sm:$0xff]
        %v1003 = vld [vmem:[%s424 + $0xf20] sm:$0xff]
        %v1004 = vld [vmem:[%s424 + $0xf28] sm:$0xff]
        %v1005 = vld [vmem:[%s424 + $0xf30] sm:$0xff]
        %v1006 = vld [vmem:[%s424 + $0xf38] sm:$0xff]
        %v1007 = vld [vmem:[%s424 + $0xf40] sm:$0xff]
        %v1008 = vld [vmem:[%s424 + $0xf48] sm:$0xff]
        %v1009 = vld [vmem:[%s424 + $0xf50] sm:$0xff]
        %v1010 = vld [vmem:[%s424 + $0xf58] sm:$0xff]
        %v1011 = vld [vmem:[%s424 + $0xf60] sm:$0xff]
        %v1012 = vld [vmem:[%s424 + $0xf68] sm:$0xff]
        %v1013 = vld [vmem:[%s424 + $0xf70] sm:$0xff]
        %v1014 = vld [vmem:[%s424 + $0xf78] sm:$0xff]
        %v1015 = vld [vmem:[%s424 + $0xf80] sm:$0xff]
        %v1016 = vld [vmem:[%s424 + $0xf88] sm:$0xff]
        %v1017 = vld [vmem:[%s424 + $0xf90] sm:$0xff]
        %v1018 = vld [vmem:[%s424 + $0xf98] sm:$0xff]
        %v1019 = vld [vmem:[%s424 + $0xfa0] sm:$0xff]
        %v1020 = vld [vmem:[%s424 + $0xfa8] sm:$0xff]
        %v1021 = vld [vmem:[%s424 + $0xfb0] sm:$0xff]
        %v1022 = vld [vmem:[%s424 + $0xfb8] sm:$0xff]
        %v1023 = vld [vmem:[%s424 + $0xfc0] sm:$0xff]
        %v1024 = vld [vmem:[%s424 + $0xfc8] sm:$0xff]
        %v1025 = vld [vmem:[%s424 + $0xfd0] sm:$0xff]
        %v1026 = vld [vmem:[%s424 + $0xfd8] sm:$0xff]
        %v1027 = vld [vmem:[%s424 + $0xfe0] sm:$0xff]
        %v1028 = vld [vmem:[%s424 + $0xfe8] sm:$0xff]
        %v1029 = vld [vmem:[%s424 + $0xff0] sm:$0xff]
        %v1030 = vld [vmem:[%s424 + $0xff8] sm:$0xff]
        %v1031 = vld [vmem:[%s424 + $0x1000] sm:$0xff]
        %v1032 = vld [vmem:[%s424 + $0x1008] sm:$0xff]
        %v1033 = vld [vmem:[%s424 + $0x1010] sm:$0xff]
        %v1034 = vld [vmem:[%s424 + $0x1018] sm:$0xff]
        %v1035 = vld [vmem:[%s424 + $0x1020] sm:$0xff]
        %v1036 = vld [vmem:[%s424 + $0x1028] sm:$0xff]
        %v1037 = vld [vmem:[%s424 + $0x1030] sm:$0xff]
        %v1038 = vld [vmem:[%s424 + $0x1038] sm:$0xff]
        %v1039 = vld [vmem:[%s424 + $0x1040] sm:$0xff]
        %v1040 = vld [vmem:[%s424 + $0x1048] sm:$0xff]
        %v1041 = vld [vmem:[%s424 + $0x1050] sm:$0xff]
        %v1042 = vld [vmem:[%s424 + $0x1058] sm:$0xff]
        %v1043 = vld [vmem:[%s424 + $0x1060] sm:$0xff]
        %v1044 = vld [vmem:[%s424 + $0x1068] sm:$0xff]
        %v1045 = vld [vmem:[%s424 + $0x1070] sm:$0xff]
        %v1046 = vld [vmem:[%s424 + $0x1078] sm:$0xff]
        %v1047 = vld [vmem:[%s424 + $0x1080] sm:$0xff]
        %v1048 = vld [vmem:[%s424 + $0x1088] sm:$0xff]
        %v1049 = vld [vmem:[%s424 + $0x1090] sm:$0xff]
        %v1050 = vld [vmem:[%s424 + $0x1098] sm:$0xff]
        %v1051 = vld [vmem:[%s424 + $0x10a0] sm:$0xff]
        %v1052 = vld [vmem:[%s424 + $0x10a8] sm:$0xff]
        %v1053 = vld [vmem:[%s424 + $0x10b0] sm:$0xff]
        %v1054 = vld [vmem:[%s424 + $0x10b8] sm:$0xff]
        %v1055 = vld [vmem:[%s424 + $0x10c0] sm:$0xff]
        %v1056 = vld [vmem:[%s424 + $0x10c8] sm:$0xff]
        %v1057 = vld [vmem:[%s424 + $0x10d0] sm:$0xff]
        %v1058 = vld [vmem:[%s424 + $0x10d8] sm:$0xff]
        %v1059 = vld [vmem:[%s424 + $0x10e0] sm:$0xff]
        %v1060 = vld [vmem:[%s424 + $0x10e8] sm:$0xff]
        %v1061 = vld [vmem:[%s424 + $0x10f0] sm:$0xff]
        %v1062 = vld [vmem:[%s424 + $0x10f8] sm:$0xff]
        %v1063 = vld [vmem:[%s424 + $0x1100] sm:$0xff]
        %v1064 = vld [vmem:[%s424 + $0x1108] sm:$0xff]
        %v1065 = vld [vmem:[%s424 + $0x1110] sm:$0xff]
        %v1066 = vld [vmem:[%s424 + $0x1118] sm:$0xff]
        %v1067 = vld [vmem:[%s424 + $0x1120] sm:$0xff]
        %v1068 = vld [vmem:[%s424 + $0x1128] sm:$0xff]
        %v1069 = vld [vmem:[%s424 + $0x1130] sm:$0xff]
        %v1070 = vld [vmem:[%s424 + $0x1138] sm:$0xff]
        %v1071 = vld [vmem:[%s424 + $0x1140] sm:$0xff]
        %v1072 = vld [vmem:[%s424 + $0x1148] sm:$0xff]
        %v1073 = vld [vmem:[%s424 + $0x1150] sm:$0xff]
        %v1074 = vld [vmem:[%s424 + $0x1158] sm:$0xff]
        %v1075 = vld [vmem:[%s424 + $0x1160] sm:$0xff]
        %v1076 = vld [vmem:[%s424 + $0x1168] sm:$0xff]
        %v1077 = vld [vmem:[%s424 + $0x1170] sm:$0xff]
        %v1078 = vld [vmem:[%s424 + $0x1178] sm:$0xff]
        %v1079 = vld [vmem:[%s424 + $0x1180] sm:$0xff]
        %v1080 = vld [vmem:[%s424 + $0x1188] sm:$0xff]
        %v1081 = vld [vmem:[%s424 + $0x1190] sm:$0xff]
        %v1082 = vld [vmem:[%s424 + $0x1198] sm:$0xff]
        %v1083 = vld [vmem:[%s424 + $0x11a0] sm:$0xff]
        %v1084 = vld [vmem:[%s424 + $0x11a8] sm:$0xff]
        %v1085 = vld [vmem:[%s424 + $0x11b0] sm:$0xff]
        %v1086 = vld [vmem:[%s424 + $0x11b8] sm:$0xff]
        %v1087 = vld [vmem:[%s424 + $0x11c0] sm:$0xff]
        %v1088 = vld [vmem:[%s424 + $0x11c8] sm:$0xff]
        %v1089 = vld [vmem:[%s424 + $0x11d0] sm:$0xff]
        %v1090 = vld [vmem:[%s424 + $0x11d8] sm:$0xff]
        %v1091 = vld [vmem:[%s424 + $0x11e0] sm:$0xff]
        %v1092 = vld [vmem:[%s424 + $0x11e8] sm:$0xff]
        %v1093 = vld [vmem:[%s424 + $0x11f0] sm:$0xff]
        %v1094 = vld [vmem:[%s424 + $0x11f8] sm:$0xff]
        %v1095 = vld [vmem:[%s424 + $0x1200] sm:$0xff]
        %v1096 = vld [vmem:[%s424 + $0x1208] sm:$0xff]
        %v1097 = vld [vmem:[%s424 + $0x1210] sm:$0xff]
        %v1098 = vld [vmem:[%s424 + $0x1218] sm:$0xff]
        %v1099 = vld [vmem:[%s424 + $0x1220] sm:$0xff]
        %v1100 = vld [vmem:[%s424 + $0x1228] sm:$0xff]
        %v1101 = vld [vmem:[%s424 + $0x1230] sm:$0xff]
        %v1102 = vld [vmem:[%s424 + $0x1238] sm:$0xff]
        %v1103 = vld [vmem:[%s424 + $0x1240] sm:$0xff]
        %v1104 = vld [vmem:[%s424 + $0x1248] sm:$0xff]
        %v1105 = vld [vmem:[%s424 + $0x1250] sm:$0xff]
        %v1106 = vld [vmem:[%s424 + $0x1258] sm:$0xff]
        %v1107 = vld [vmem:[%s424 + $0x1260] sm:$0xff]
        %v1108 = vld [vmem:[%s424 + $0x1268] sm:$0xff]
        %v1109 = vld [vmem:[%s424 + $0x1270] sm:$0xff]
        %v1110 = vld [vmem:[%s424 + $0x1278] sm:$0xff]
        %v1111 = vld [vmem:[%s424 + $0x1280] sm:$0xff]
        %v1112 = vld [vmem:[%s424 + $0x1288] sm:$0xff]
        %v1113 = vld [vmem:[%s424 + $0x1290] sm:$0xff]
        %v1114 = vld [vmem:[%s424 + $0x1298] sm:$0xff]
        %v1115 = vld [vmem:[%s424 + $0x12a0] sm:$0xff]
        %v1116 = vld [vmem:[%s424 + $0x12a8] sm:$0xff]
        %v1117 = vld [vmem:[%s424 + $0x12b0] sm:$0xff]
        %v1118 = vld [vmem:[%s424 + $0x12b8] sm:$0xff]
        %v1119 = vld [vmem:[%s424 + $0x12c0] sm:$0xff]
        %v1120 = vld [vmem:[%s424 + $0x12c8] sm:$0xff]
        %v1121 = vld [vmem:[%s424 + $0x12d0] sm:$0xff]
        %v1122 = vld [vmem:[%s424 + $0x12d8] sm:$0xff]
        %v1123 = vld [vmem:[%s424 + $0x12e0] sm:$0xff]
        %v1124 = vld [vmem:[%s424 + $0x12e8] sm:$0xff]
        %v1125 = vld [vmem:[%s424 + $0x12f0] sm:$0xff]
        %v1126 = vld [vmem:[%s424 + $0x12f8] sm:$0xff]
        %v1127 = vld [vmem:[%s424 + $0x1300] sm:$0xff]
        %v1128 = vld [vmem:[%s424 + $0x1308] sm:$0xff]
        %v1129 = vld [vmem:[%s424 + $0x1310] sm:$0xff]
        %v1130 = vld [vmem:[%s424 + $0x1318] sm:$0xff]
        %v1131 = vld [vmem:[%s424 + $0x1320] sm:$0xff]
        %v1132 = vld [vmem:[%s424 + $0x1328] sm:$0xff]
        %v1133 = vld [vmem:[%s424 + $0x1330] sm:$0xff]
        %v1134 = vld [vmem:[%s424 + $0x1338] sm:$0xff]
        %v1135 = vld [vmem:[%s424 + $0x1340] sm:$0xff]
        %v1136 = vld [vmem:[%s424 + $0x1348] sm:$0xff]
        %v1137 = vld [vmem:[%s424 + $0x1350] sm:$0xff]
        %v1138 = vld [vmem:[%s424 + $0x1358] sm:$0xff]
        %v1139 = vld [vmem:[%s424 + $0x1360] sm:$0xff]
        %v1140 = vld [vmem:[%s424 + $0x1368] sm:$0xff]
        %v1141 = vld [vmem:[%s424 + $0x1370] sm:$0xff]
        %v1142 = vld [vmem:[%s424 + $0x1378] sm:$0xff]
        %v1143 = vld [vmem:[%s424 + $0x1380] sm:$0xff]
        %v1144 = vld [vmem:[%s424 + $0x1388] sm:$0xff]
        %v1145 = vld [vmem:[%s424 + $0x1390] sm:$0xff]
        %v1146 = vld [vmem:[%s424 + $0x1398] sm:$0xff]
        %v1147 = vld [vmem:[%s424 + $0x13a0] sm:$0xff]
        %v1148 = vld [vmem:[%s424 + $0x13a8] sm:$0xff]
        %v1149 = vld [vmem:[%s424 + $0x13b0] sm:$0xff]
        %v1150 = vld [vmem:[%s424 + $0x13b8] sm:$0xff]
        %v1151 = vld [vmem:[%s424 + $0x13c0] sm:$0xff]
        %v1152 = vld [vmem:[%s424 + $0x13c8] sm:$0xff]
        %v1153 = vld [vmem:[%s424 + $0x13d0] sm:$0xff]
        %v1154 = vld [vmem:[%s424 + $0x13d8] sm:$0xff]
        %v1155 = vld [vmem:[%s424 + $0x13e0] sm:$0xff]
        %v1156 = vld [vmem:[%s424 + $0x13e8] sm:$0xff]
        %v1157 = vld [vmem:[%s424 + $0x13f0] sm:$0xff]
        %v1158 = vld [vmem:[%s424 + $0x13f8] sm:$0xff]
        %v1159 = vld [vmem:[%s424 + $0x1400] sm:$0xff]
        %v1160 = vld [vmem:[%s424 + $0x1408] sm:$0xff]
        %v1161 = vld [vmem:[%s424 + $0x1410] sm:$0xff]
        %v1162 = vld [vmem:[%s424 + $0x1418] sm:$0xff]
        %v1163 = vld [vmem:[%s424 + $0x1420] sm:$0xff]
        %v1164 = vld [vmem:[%s424 + $0x1428] sm:$0xff]
        %v1165 = vld [vmem:[%s424 + $0x1430] sm:$0xff]
        %v1166 = vld [vmem:[%s424 + $0x1438] sm:$0xff]
        %v1167 = vld [vmem:[%s424 + $0x1440] sm:$0xff]
        %v1168 = vld [vmem:[%s424 + $0x1448] sm:$0xff]
        %v1169 = vld [vmem:[%s424 + $0x1450] sm:$0xff]
        %v1170 = vld [vmem:[%s424 + $0x1458] sm:$0xff]
        %v1171 = vld [vmem:[%s424 + $0x1460] sm:$0xff]
        %v1172 = vld [vmem:[%s424 + $0x1468] sm:$0xff]
        %v1173 = vld [vmem:[%s424 + $0x1470] sm:$0xff]
        %v1174 = vld [vmem:[%s424 + $0x1478] sm:$0xff]
        %v1175 = vld [vmem:[%s424 + $0x1480] sm:$0xff]
        %v1176 = vld [vmem:[%s424 + $0x1488] sm:$0xff]
        %v1177 = vld [vmem:[%s424 + $0x1490] sm:$0xff]
        %v1178 = vld [vmem:[%s424 + $0x1498] sm:$0xff]
        %v1179 = vld [vmem:[%s424 + $0x14a0] sm:$0xff]
        %v1180 = vld [vmem:[%s424 + $0x14a8] sm:$0xff]
        %v1181 = vld [vmem:[%s424 + $0x14b0] sm:$0xff]
        %v1182 = vld [vmem:[%s424 + $0x14b8] sm:$0xff]
        %v1183 = vld [vmem:[%s424 + $0x14c0] sm:$0xff]
        %v1184 = vld [vmem:[%s424 + $0x14c8] sm:$0xff]
        %v1185 = vld [vmem:[%s424 + $0x14d0] sm:$0xff]
        %v1186 = vld [vmem:[%s424 + $0x14d8] sm:$0xff]
        %v1187 = vld [vmem:[%s424 + $0x14e0] sm:$0xff]
        %v1188 = vld [vmem:[%s424 + $0x14e8] sm:$0xff]
        %v1189 = vld [vmem:[%s424 + $0x14f0] sm:$0xff]
        %v1190 = vld [vmem:[%s424 + $0x14f8] sm:$0xff]
        %v1191 = vld [vmem:[%s424 + $0x1500] sm:$0xff]
        %v1192 = vld [vmem:[%s424 + $0x1508] sm:$0xff]
        %v1193 = vld [vmem:[%s424 + $0x1510] sm:$0xff]
        %v1194 = vld [vmem:[%s424 + $0x1518] sm:$0xff]
        %v1195 = vld [vmem:[%s424 + $0x1520] sm:$0xff]
        %v1196 = vld [vmem:[%s424 + $0x1528] sm:$0xff]
        %v1197 = vld [vmem:[%s424 + $0x1530] sm:$0xff]
        %v1198 = vld [vmem:[%s424 + $0x1538] sm:$0xff]
        %v1199 = vld [vmem:[%s424 + $0x1540] sm:$0xff]
        %v1200 = vld [vmem:[%s424 + $0x1548] sm:$0xff]
        %v1201 = vld [vmem:[%s424 + $0x1550] sm:$0xff]
        %v1202 = vld [vmem:[%s424 + $0x1558] sm:$0xff]
        %v1203 = vld [vmem:[%s424 + $0x1560] sm:$0xff]
        %v1204 = vld [vmem:[%s424 + $0x1568] sm:$0xff]
        %v1205 = vld [vmem:[%s424 + $0x1570] sm:$0xff]
        %v1206 = vld [vmem:[%s424 + $0x1578] sm:$0xff]
        %v1207 = vld [vmem:[%s424 + $0x1580] sm:$0xff]
        %v1208 = vld [vmem:[%s424 + $0x1588] sm:$0xff]
        %v1209 = vld [vmem:[%s424 + $0x1590] sm:$0xff]
        %v1210 = vld [vmem:[%s424 + $0x1598] sm:$0xff]
        %v1211 = vld [vmem:[%s424 + $0x15a0] sm:$0xff]
        %v1212 = vld [vmem:[%s424 + $0x15a8] sm:$0xff]
        %v1213 = vld [vmem:[%s424 + $0x15b0] sm:$0xff]
        %v1214 = vld [vmem:[%s424 + $0x15b8] sm:$0xff]
        %v1215 = vld [vmem:[%s424 + $0x15c0] sm:$0xff]
        %v1216 = vld [vmem:[%s424 + $0x15c8] sm:$0xff]
        %v1217 = vld [vmem:[%s424 + $0x15d0] sm:$0xff]
        %v1218 = vld [vmem:[%s424 + $0x15d8] sm:$0xff]
        %v1219 = vld [vmem:[%s424 + $0x15e0] sm:$0xff]
        %v1220 = vld [vmem:[%s424 + $0x15e8] sm:$0xff]
        %v1221 = vld [vmem:[%s424 + $0x15f0] sm:$0xff]
        %v1222 = vld [vmem:[%s424 + $0x15f8] sm:$0xff]
        %v1223 = vld [vmem:[%s424 + $0x1600] sm:$0xff]
        %v1224 = vld [vmem:[%s424 + $0x1608] sm:$0xff]
        %v1225 = vld [vmem:[%s424 + $0x1610] sm:$0xff]
        %v1226 = vld [vmem:[%s424 + $0x1618] sm:$0xff]
        %v1227 = vld [vmem:[%s424 + $0x1620] sm:$0xff]
        %v1228 = vld [vmem:[%s424 + $0x1628] sm:$0xff]
        %v1229 = vld [vmem:[%s424 + $0x1630] sm:$0xff]
        %v1230 = vld [vmem:[%s424 + $0x1638] sm:$0xff]
        %v1231 = vld [vmem:[%s424 + $0x1640] sm:$0xff]
        %v1232 = vld [vmem:[%s424 + $0x1648] sm:$0xff]
        %v1233 = vld [vmem:[%s424 + $0x1650] sm:$0xff]
        %v1234 = vld [vmem:[%s424 + $0x1658] sm:$0xff]
        %v1235 = vld [vmem:[%s424 + $0x1660] sm:$0xff]
        %v1236 = vld [vmem:[%s424 + $0x1668] sm:$0xff]
        %v1237 = vld [vmem:[%s424 + $0x1670] sm:$0xff]
        %v1238 = vld [vmem:[%s424 + $0x1678] sm:$0xff]
        %v1239 = vld [vmem:[%s424 + $0x1680] sm:$0xff]
        %v1240 = vld [vmem:[%s424 + $0x1688] sm:$0xff]
        %v1241 = vld [vmem:[%s424 + $0x1690] sm:$0xff]
        %v1242 = vld [vmem:[%s424 + $0x1698] sm:$0xff]
        %v1243 = vld [vmem:[%s424 + $0x16a0] sm:$0xff]
        %v1244 = vld [vmem:[%s424 + $0x16a8] sm:$0xff]
        %v1245 = vld [vmem:[%s424 + $0x16b0] sm:$0xff]
        %v1246 = vld [vmem:[%s424 + $0x16b8] sm:$0xff]
        %v1247 = vld [vmem:[%s424 + $0x16c0] sm:$0xff]
        %v1248 = vld [vmem:[%s424 + $0x16c8] sm:$0xff]
        %v1249 = vld [vmem:[%s424 + $0x16d0] sm:$0xff]
        %v1250 = vld [vmem:[%s424 + $0x16d8] sm:$0xff]
        %v1251 = vld [vmem:[%s424 + $0x16e0] sm:$0xff]
        %v1252 = vld [vmem:[%s424 + $0x16e8] sm:$0xff]
        %v1253 = vld [vmem:[%s424 + $0x16f0] sm:$0xff]
        %v1254 = vld [vmem:[%s424 + $0x16f8] sm:$0xff]
        %v1255 = vld [vmem:[%s424 + $0x1700] sm:$0xff]
        %v1256 = vld [vmem:[%s424 + $0x1708] sm:$0xff]
        %v1257 = vld [vmem:[%s424 + $0x1710] sm:$0xff]
        %v1258 = vld [vmem:[%s424 + $0x1718] sm:$0xff]
        %v1259 = vld [vmem:[%s424 + $0x1720] sm:$0xff]
        %v1260 = vld [vmem:[%s424 + $0x1728] sm:$0xff]
        %v1261 = vld [vmem:[%s424 + $0x1730] sm:$0xff]
        %v1262 = vld [vmem:[%s424 + $0x1738] sm:$0xff]
        %v1263 = vld [vmem:[%s424 + $0x1740] sm:$0xff]
        %v1264 = vld [vmem:[%s424 + $0x1748] sm:$0xff]
        %v1265 = vld [vmem:[%s424 + $0x1750] sm:$0xff]
        %v1266 = vld [vmem:[%s424 + $0x1758] sm:$0xff]
        %v1267 = vld [vmem:[%s424 + $0x1760] sm:$0xff]
        %v1268 = vld [vmem:[%s424 + $0x1768] sm:$0xff]
        %v1269 = vld [vmem:[%s424 + $0x1770] sm:$0xff]
        %v1270 = vld [vmem:[%s424 + $0x1778] sm:$0xff]
        %v1271 = vld [vmem:[%s424 + $0x1780] sm:$0xff]
        %v1272 = vld [vmem:[%s424 + $0x1788] sm:$0xff]
        %v1273 = vld [vmem:[%s424 + $0x1790] sm:$0xff]
        %v1274 = vld [vmem:[%s424 + $0x1798] sm:$0xff]
        %v1275 = vld [vmem:[%s424 + $0x17a0] sm:$0xff]
        %v1276 = vld [vmem:[%s424 + $0x17a8] sm:$0xff]
        %v1277 = vld [vmem:[%s424 + $0x17b0] sm:$0xff]
        %v1278 = vld [vmem:[%s424 + $0x17b8] sm:$0xff]
        %v1279 = vld [vmem:[%s424 + $0x17c0] sm:$0xff]
        %v1280 = vld [vmem:[%s424 + $0x17c8] sm:$0xff]
        %v1281 = vld [vmem:[%s424 + $0x17d0] sm:$0xff]
        %v1282 = vld [vmem:[%s424 + $0x17d8] sm:$0xff]
        %v1283 = vld [vmem:[%s424 + $0x17e0] sm:$0xff]
        %v1284 = vld [vmem:[%s424 + $0x17e8] sm:$0xff]
        %v1285 = vld [vmem:[%s424 + $0x17f0] sm:$0xff]
        %v1286 = vld [vmem:[%s424 + $0x17f8] sm:$0xff]
        %v1293 = vunpack.c.l.b16 %v505
        %v1294 = vunpack.c.h.b16 %v505
        %v1295 = vunpack.c.l.b16 %v506
        %v1296 = vunpack.c.h.b16 %v506
        %v1297 = vunpack.c.l.b16 %v507
        %v1298 = vunpack.c.h.b16 %v507
        %v1299 = vunpack.c.l.b16 %v508
        %v1300 = vunpack.c.h.b16 %v508
        %v1301 = vunpack.c.l.b16 %v509
        %v1302 = vunpack.c.h.b16 %v509
        %v1303 = vunpack.c.l.b16 %v510
        %v1304 = vunpack.c.h.b16 %v510
        %v1305 = vpack.c.b16 %v1293, %v1293
        %v1306 = vpack.c.b16 %v1294, %v1294
        %v1307 = vpack.c.b16 %v1295, %v1295
        %v1308 = vpack.c.b16 %v1296, %v1296
        %v1309 = vpack.c.b16 %v1297, %v1297
        %v1310 = vpack.c.b16 %v1298, %v1298
        %v1311 = vpack.c.b16 %v1299, %v1299
        %v1312 = vpack.c.b16 %v1300, %v1300
        %v1313 = vpack.c.b16 %v1301, %v1301
        %v1314 = vpack.c.b16 %v1302, %v1302
        %v1315 = vpack.c.b16 %v1303, %v1303
        %v1316 = vpack.c.b16 %v1304, %v1304
        %v2097 = vunpack.c.l.b16 %v519
        %v2098 = vunpack.c.h.b16 %v519
        %v2099 = vunpack.c.l.b16 %v520
        %v2100 = vunpack.c.h.b16 %v520
        %v2101 = vunpack.c.l.b16 %v521
        %v2102 = vunpack.c.h.b16 %v521
        %v2103 = vunpack.c.l.b16 %v522
        %v2104 = vunpack.c.h.b16 %v522
        %v2105 = vunpack.c.l.b16 %v523
        %v2106 = vunpack.c.h.b16 %v523
        %v2107 = vunpack.c.l.b16 %v524
        %v2108 = vunpack.c.h.b16 %v524
        %v2109 = vunpack.c.l.b16 %v525
        %v2110 = vunpack.c.h.b16 %v525
        %v2111 = vunpack.c.l.b16 %v526
        %v2112 = vunpack.c.h.b16 %v526
        %v2113 = vunpack.c.l.b16 %v527
        %v2114 = vunpack.c.h.b16 %v527
        %v2115 = vunpack.c.l.b16 %v528
        %v2116 = vunpack.c.h.b16 %v528
        %v2117 = vunpack.c.l.b16 %v529
        %v2118 = vunpack.c.h.b16 %v529
        %v2119 = vunpack.c.l.b16 %v530
        %v2120 = vunpack.c.h.b16 %v530
        %v2121 = vunpack.c.l.b16 %v531
        %v2122 = vunpack.c.h.b16 %v531
        %v2123 = vunpack.c.l.b16 %v532
        %v2124 = vunpack.c.h.b16 %v532
        %v2125 = vunpack.c.l.b16 %v533
        %v2126 = vunpack.c.h.b16 %v533
        %v2127 = vunpack.c.l.b16 %v534
        %v2128 = vunpack.c.h.b16 %v534
        %v2129 = vunpack.c.l.b16 %v535
        %v2130 = vunpack.c.h.b16 %v535
        %v2131 = vunpack.c.l.b16 %v536
        %v2132 = vunpack.c.h.b16 %v536
        %v2133 = vunpack.c.l.b16 %v537
        %v2134 = vunpack.c.h.b16 %v537
        %v2135 = vunpack.c.l.b16 %v538
        %v2136 = vunpack.c.h.b16 %v538
        %v2137 = vunpack.c.l.b16 %v539
        %v2138 = vunpack.c.h.b16 %v539
        %v2139 = vunpack.c.l.b16 %v540
        %v2140 = vunpack.c.h.b16 %v540
        %v2141 = vunpack.c.l.b16 %v541
        %v2142 = vunpack.c.h.b16 %v541
        %v2143 = vunpack.c.l.b16 %v542
        %v2144 = vunpack.c.h.b16 %v542
        %v2145 = vunpack.c.l.b16 %v543
        %v2146 = vunpack.c.h.b16 %v543
        %v2147 = vunpack.c.l.b16 %v544
        %v2148 = vunpack.c.h.b16 %v544
        %v2149 = vunpack.c.l.b16 %v545
        %v2150 = vunpack.c.h.b16 %v545
        %v2151 = vunpack.c.l.b16 %v546
        %v2152 = vunpack.c.h.b16 %v546
        %v2153 = vunpack.c.l.b16 %v547
        %v2154 = vunpack.c.h.b16 %v547
        %v2155 = vunpack.c.l.b16 %v548
        %v2156 = vunpack.c.h.b16 %v548
        %v2157 = vunpack.c.l.b16 %v549
        %v2158 = vunpack.c.h.b16 %v549
        %v2159 = vunpack.c.l.b16 %v550
        %v2160 = vunpack.c.h.b16 %v550
        %v2161 = vunpack.c.l.b16 %v551
        %v2162 = vunpack.c.h.b16 %v551
        %v2163 = vunpack.c.l.b16 %v552
        %v2164 = vunpack.c.h.b16 %v552
        %v2165 = vunpack.c.l.b16 %v553
        %v2166 = vunpack.c.h.b16 %v553
        %v2167 = vunpack.c.l.b16 %v554
        %v2168 = vunpack.c.h.b16 %v554
        %v2169 = vunpack.c.l.b16 %v555
        %v2170 = vunpack.c.h.b16 %v555
        %v2171 = vunpack.c.l.b16 %v556
        %v2172 = vunpack.c.h.b16 %v556
        %v2173 = vunpack.c.l.b16 %v557
        %v2174 = vunpack.c.h.b16 %v557
        %v2175 = vunpack.c.l.b16 %v558
        %v2176 = vunpack.c.h.b16 %v558
        %v2177 = vunpack.c.l.b16 %v559
        %v2178 = vunpack.c.h.b16 %v559
        %v2179 = vunpack.c.l.b16 %v560
        %v2180 = vunpack.c.h.b16 %v560
        %v2181 = vunpack.c.l.b16 %v561
        %v2182 = vunpack.c.h.b16 %v561
        %v2183 = vunpack.c.l.b16 %v562
        %v2184 = vunpack.c.h.b16 %v562
        %v2185 = vunpack.c.l.b16 %v563
        %v2186 = vunpack.c.h.b16 %v563
        %v2187 = vunpack.c.l.b16 %v564
        %v2188 = vunpack.c.h.b16 %v564
        %v2189 = vunpack.c.l.b16 %v565
        %v2190 = vunpack.c.h.b16 %v565
        %v2191 = vunpack.c.l.b16 %v566
        %v2192 = vunpack.c.h.b16 %v566
        %v2193 = vunpack.c.l.b16 %v567
        %v2194 = vunpack.c.h.b16 %v567
        %v2195 = vunpack.c.l.b16 %v568
        %v2196 = vunpack.c.h.b16 %v568
        %v2197 = vunpack.c.l.b16 %v569
        %v2198 = vunpack.c.h.b16 %v569
        %v2199 = vunpack.c.l.b16 %v570
        %v2200 = vunpack.c.h.b16 %v570
        %v2201 = vunpack.c.l.b16 %v571
        %v2202 = vunpack.c.h.b16 %v571
        %v2203 = vunpack.c.l.b16 %v572
        %v2204 = vunpack.c.h.b16 %v572
        %v2205 = vunpack.c.l.b16 %v573
        %v2206 = vunpack.c.h.b16 %v573
        %v2207 = vunpack.c.l.b16 %v574
        %v2208 = vunpack.c.h.b16 %v574
        %v2209 = vunpack.c.l.b16 %v575
        %v2210 = vunpack.c.h.b16 %v575
        %v2211 = vunpack.c.l.b16 %v576
        %v2212 = vunpack.c.h.b16 %v576
        %v2213 = vunpack.c.l.b16 %v577
        %v2214 = vunpack.c.h.b16 %v577
        %v2215 = vunpack.c.l.b16 %v578
        %v2216 = vunpack.c.h.b16 %v578
        %v2217 = vunpack.c.l.b16 %v579
        %v2218 = vunpack.c.h.b16 %v579
        %v2219 = vunpack.c.l.b16 %v580
        %v2220 = vunpack.c.h.b16 %v580
        %v2221 = vunpack.c.l.b16 %v581
        %v2222 = vunpack.c.h.b16 %v581
        %v2223 = vunpack.c.l.b16 %v582
        %v2224 = vunpack.c.h.b16 %v582
        %v2225 = vunpack.c.l.b16 %v583
        %v2226 = vunpack.c.h.b16 %v583
        %v2227 = vunpack.c.l.b16 %v584
        %v2228 = vunpack.c.h.b16 %v584
        %v2229 = vunpack.c.l.b16 %v585
        %v2230 = vunpack.c.h.b16 %v585
        %v2231 = vunpack.c.l.b16 %v586
        %v2232 = vunpack.c.h.b16 %v586
        %v2233 = vunpack.c.l.b16 %v587
        %v2234 = vunpack.c.h.b16 %v587
        %v2235 = vunpack.c.l.b16 %v588
        %v2236 = vunpack.c.h.b16 %v588
        %v2237 = vunpack.c.l.b16 %v589
        %v2238 = vunpack.c.h.b16 %v589
        %v2239 = vunpack.c.l.b16 %v590
        %v2240 = vunpack.c.h.b16 %v590
        %v2241 = vunpack.c.l.b16 %v591
        %v2242 = vunpack.c.h.b16 %v591
        %v2243 = vunpack.c.l.b16 %v592
        %v2244 = vunpack.c.h.b16 %v592
        %v2245 = vunpack.c.l.b16 %v593
        %v2246 = vunpack.c.h.b16 %v593
        %v2247 = vunpack.c.l.b16 %v594
        %v2248 = vunpack.c.h.b16 %v594
        %v2249 = vunpack.c.l.b16 %v595
        %v2250 = vunpack.c.h.b16 %v595
        %v2251 = vunpack.c.l.b16 %v596
        %v2252 = vunpack.c.h.b16 %v596
        %v2253 = vunpack.c.l.b16 %v597
        %v2254 = vunpack.c.h.b16 %v597
        %v2255 = vunpack.c.l.b16 %v598
        %v2256 = vunpack.c.h.b16 %v598
        %v2257 = vunpack.c.l.b16 %v599
        %v2258 = vunpack.c.h.b16 %v599
        %v2259 = vunpack.c.l.b16 %v600
        %v2260 = vunpack.c.h.b16 %v600
        %v2261 = vunpack.c.l.b16 %v601
        %v2262 = vunpack.c.h.b16 %v601
        %v2263 = vunpack.c.l.b16 %v602
        %v2264 = vunpack.c.h.b16 %v602
        %v2265 = vunpack.c.l.b16 %v603
        %v2266 = vunpack.c.h.b16 %v603
        %v2267 = vunpack.c.l.b16 %v604
        %v2268 = vunpack.c.h.b16 %v604
        %v2269 = vunpack.c.l.b16 %v605
        %v2270 = vunpack.c.h.b16 %v605
        %v2271 = vunpack.c.l.b16 %v606
        %v2272 = vunpack.c.h.b16 %v606
        %v2273 = vunpack.c.l.b16 %v607
        %v2274 = vunpack.c.h.b16 %v607
        %v2275 = vunpack.c.l.b16 %v608
        %v2276 = vunpack.c.h.b16 %v608
        %v2277 = vunpack.c.l.b16 %v609
        %v2278 = vunpack.c.h.b16 %v609
        %v2279 = vunpack.c.l.b16 %v610
        %v2280 = vunpack.c.h.b16 %v610
        %v2281 = vunpack.c.l.b16 %v611
        %v2282 = vunpack.c.h.b16 %v611
        %v2283 = vunpack.c.l.b16 %v612
        %v2284 = vunpack.c.h.b16 %v612
        %v2285 = vunpack.c.l.b16 %v613
        %v2286 = vunpack.c.h.b16 %v613
        %v2287 = vunpack.c.l.b16 %v614
        %v2288 = vunpack.c.h.b16 %v614
        %v2289 = vunpack.c.l.b16 %v615
        %v2290 = vunpack.c.h.b16 %v615
        %v2291 = vunpack.c.l.b16 %v616
        %v2292 = vunpack.c.h.b16 %v616
        %v2293 = vunpack.c.l.b16 %v617
        %v2294 = vunpack.c.h.b16 %v617
        %v2295 = vunpack.c.l.b16 %v618
        %v2296 = vunpack.c.h.b16 %v618
        %v2297 = vunpack.c.l.b16 %v619
        %v2298 = vunpack.c.h.b16 %v619
        %v2299 = vunpack.c.l.b16 %v620
        %v2300 = vunpack.c.h.b16 %v620
        %v2301 = vunpack.c.l.b16 %v621
        %v2302 = vunpack.c.h.b16 %v621
        %v2303 = vunpack.c.l.b16 %v622
        %v2304 = vunpack.c.h.b16 %v622
        %v2305 = vunpack.c.l.b16 %v623
        %v2306 = vunpack.c.h.b16 %v623
        %v2307 = vunpack.c.l.b16 %v624
        %v2308 = vunpack.c.h.b16 %v624
        %v2309 = vunpack.c.l.b16 %v625
        %v2310 = vunpack.c.h.b16 %v625
        %v2311 = vunpack.c.l.b16 %v626
        %v2312 = vunpack.c.h.b16 %v626
        %v2313 = vunpack.c.l.b16 %v627
        %v2314 = vunpack.c.h.b16 %v627
        %v2315 = vunpack.c.l.b16 %v628
        %v2316 = vunpack.c.h.b16 %v628
        %v2317 = vunpack.c.l.b16 %v629
        %v2318 = vunpack.c.h.b16 %v629
        %v2319 = vunpack.c.l.b16 %v630
        %v2320 = vunpack.c.h.b16 %v630
        %v2321 = vunpack.c.l.b16 %v631
        %v2322 = vunpack.c.h.b16 %v631
        %v2323 = vunpack.c.l.b16 %v632
        %v2324 = vunpack.c.h.b16 %v632
        %v2325 = vunpack.c.l.b16 %v633
        %v2326 = vunpack.c.h.b16 %v633
        %v2327 = vunpack.c.l.b16 %v634
        %v2328 = vunpack.c.h.b16 %v634
        %v2329 = vunpack.c.l.b16 %v635
        %v2330 = vunpack.c.h.b16 %v635
        %v2331 = vunpack.c.l.b16 %v636
        %v2332 = vunpack.c.h.b16 %v636
        %v2333 = vunpack.c.l.b16 %v637
        %v2334 = vunpack.c.h.b16 %v637
        %v2335 = vunpack.c.l.b16 %v638
        %v2336 = vunpack.c.h.b16 %v638
        %v2337 = vunpack.c.l.b16 %v639
        %v2338 = vunpack.c.h.b16 %v639
        %v2339 = vunpack.c.l.b16 %v640
        %v2340 = vunpack.c.h.b16 %v640
        %v2341 = vunpack.c.l.b16 %v641
        %v2342 = vunpack.c.h.b16 %v641
        %v2343 = vunpack.c.l.b16 %v642
        %v2344 = vunpack.c.h.b16 %v642
        %v2345 = vunpack.c.l.b16 %v643
        %v2346 = vunpack.c.h.b16 %v643
        %v2347 = vunpack.c.l.b16 %v644
        %v2348 = vunpack.c.h.b16 %v644
        %v2349 = vunpack.c.l.b16 %v645
        %v2350 = vunpack.c.h.b16 %v645
        %v2351 = vunpack.c.l.b16 %v646
        %v2352 = vunpack.c.h.b16 %v646
        %v2353 = vunpack.c.l.b16 %v647
        %v2354 = vunpack.c.h.b16 %v647
        %v2355 = vunpack.c.l.b16 %v648
        %v2356 = vunpack.c.h.b16 %v648
        %v2357 = vunpack.c.l.b16 %v649
        %v2358 = vunpack.c.h.b16 %v649
        %v2359 = vunpack.c.l.b16 %v650
        %v2360 = vunpack.c.h.b16 %v650
        %v2361 = vunpack.c.l.b16 %v651
        %v2362 = vunpack.c.h.b16 %v651
        %v2363 = vunpack.c.l.b16 %v652
        %v2364 = vunpack.c.h.b16 %v652
        %v2365 = vunpack.c.l.b16 %v653
        %v2366 = vunpack.c.h.b16 %v653
        %v2367 = vunpack.c.l.b16 %v654
        %v2368 = vunpack.c.h.b16 %v654
        %v2369 = vunpack.c.l.b16 %v655
        %v2370 = vunpack.c.h.b16 %v655
        %v2371 = vunpack.c.l.b16 %v656
        %v2372 = vunpack.c.h.b16 %v656
        %v2373 = vunpack.c.l.b16 %v657
        %v2374 = vunpack.c.h.b16 %v657
        %v2375 = vunpack.c.l.b16 %v658
        %v2376 = vunpack.c.h.b16 %v658
        %v2377 = vunpack.c.l.b16 %v659
        %v2378 = vunpack.c.h.b16 %v659
        %v2379 = vunpack.c.l.b16 %v660
        %v2380 = vunpack.c.h.b16 %v660
        %v2381 = vunpack.c.l.b16 %v661
        %v2382 = vunpack.c.h.b16 %v661
        %v2383 = vunpack.c.l.b16 %v662
        %v2384 = vunpack.c.h.b16 %v662
        %v2385 = vunpack.c.l.b16 %v663
        %v2386 = vunpack.c.h.b16 %v663
        %v2387 = vunpack.c.l.b16 %v664
        %v2388 = vunpack.c.h.b16 %v664
        %v2389 = vunpack.c.l.b16 %v665
        %v2390 = vunpack.c.h.b16 %v665
        %v2391 = vunpack.c.l.b16 %v666
        %v2392 = vunpack.c.h.b16 %v666
        %v2393 = vunpack.c.l.b16 %v667
        %v2394 = vunpack.c.h.b16 %v667
        %v2395 = vunpack.c.l.b16 %v668
        %v2396 = vunpack.c.h.b16 %v668
        %v2397 = vunpack.c.l.b16 %v669
        %v2398 = vunpack.c.h.b16 %v669
        %v2399 = vunpack.c.l.b16 %v670
        %v2400 = vunpack.c.h.b16 %v670
        %v2401 = vunpack.c.l.b16 %v671
        %v2402 = vunpack.c.h.b16 %v671
        %v2403 = vunpack.c.l.b16 %v672
        %v2404 = vunpack.c.h.b16 %v672
        %v2405 = vunpack.c.l.b16 %v673
        %v2406 = vunpack.c.h.b16 %v673
        %v2407 = vunpack.c.l.b16 %v674
        %v2408 = vunpack.c.h.b16 %v674
        %v2409 = vunpack.c.l.b16 %v675
        %v2410 = vunpack.c.h.b16 %v675
        %v2411 = vunpack.c.l.b16 %v676
        %v2412 = vunpack.c.h.b16 %v676
        %v2413 = vunpack.c.l.b16 %v677
        %v2414 = vunpack.c.h.b16 %v677
        %v2415 = vunpack.c.l.b16 %v678
        %v2416 = vunpack.c.h.b16 %v678
        %v2417 = vunpack.c.l.b16 %v679
        %v2418 = vunpack.c.h.b16 %v679
        %v2419 = vunpack.c.l.b16 %v680
        %v2420 = vunpack.c.h.b16 %v680
        %v2421 = vunpack.c.l.b16 %v681
        %v2422 = vunpack.c.h.b16 %v681
        %v2423 = vunpack.c.l.b16 %v682
        %v2424 = vunpack.c.h.b16 %v682
        %v2425 = vunpack.c.l.b16 %v683
        %v2426 = vunpack.c.h.b16 %v683
        %v2427 = vunpack.c.l.b16 %v684
        %v2428 = vunpack.c.h.b16 %v684
        %v2429 = vunpack.c.l.b16 %v685
        %v2430 = vunpack.c.h.b16 %v685
        %v2431 = vunpack.c.l.b16 %v686
        %v2432 = vunpack.c.h.b16 %v686
        %v2433 = vunpack.c.l.b16 %v687
        %v2434 = vunpack.c.h.b16 %v687
        %v2435 = vunpack.c.l.b16 %v688
        %v2436 = vunpack.c.h.b16 %v688
        %v2437 = vunpack.c.l.b16 %v689
        %v2438 = vunpack.c.h.b16 %v689
        %v2439 = vunpack.c.l.b16 %v690
        %v2440 = vunpack.c.h.b16 %v690
        %v2441 = vunpack.c.l.b16 %v691
        %v2442 = vunpack.c.h.b16 %v691
        %v2443 = vunpack.c.l.b16 %v692
        %v2444 = vunpack.c.h.b16 %v692
        %v2445 = vunpack.c.l.b16 %v693
        %v2446 = vunpack.c.h.b16 %v693
        %v2447 = vunpack.c.l.b16 %v694
        %v2448 = vunpack.c.h.b16 %v694
        %v2449 = vunpack.c.l.b16 %v695
        %v2450 = vunpack.c.h.b16 %v695
        %v2451 = vunpack.c.l.b16 %v696
        %v2452 = vunpack.c.h.b16 %v696
        %v2453 = vunpack.c.l.b16 %v697
        %v2454 = vunpack.c.h.b16 %v697
        %v2455 = vunpack.c.l.b16 %v698
        %v2456 = vunpack.c.h.b16 %v698
        %v2457 = vunpack.c.l.b16 %v699
        %v2458 = vunpack.c.h.b16 %v699
        %v2459 = vunpack.c.l.b16 %v700
        %v2460 = vunpack.c.h.b16 %v700
        %v2461 = vunpack.c.l.b16 %v701
        %v2462 = vunpack.c.h.b16 %v701
        %v2463 = vunpack.c.l.b16 %v702
        %v2464 = vunpack.c.h.b16 %v702
        %v2465 = vunpack.c.l.b16 %v703
        %v2466 = vunpack.c.h.b16 %v703
        %v2467 = vunpack.c.l.b16 %v704
        %v2468 = vunpack.c.h.b16 %v704
        %v2469 = vunpack.c.l.b16 %v705
        %v2470 = vunpack.c.h.b16 %v705
        %v2471 = vunpack.c.l.b16 %v706
        %v2472 = vunpack.c.h.b16 %v706
        %v2473 = vunpack.c.l.b16 %v707
        %v2474 = vunpack.c.h.b16 %v707
        %v2475 = vunpack.c.l.b16 %v708
        %v2476 = vunpack.c.h.b16 %v708
        %v2477 = vunpack.c.l.b16 %v709
        %v2478 = vunpack.c.h.b16 %v709
        %v2479 = vunpack.c.l.b16 %v710
        %v2480 = vunpack.c.h.b16 %v710
        %v2481 = vunpack.c.l.b16 %v711
        %v2482 = vunpack.c.h.b16 %v711
        %v2483 = vunpack.c.l.b16 %v712
        %v2484 = vunpack.c.h.b16 %v712
        %v2485 = vunpack.c.l.b16 %v713
        %v2486 = vunpack.c.h.b16 %v713
        %v2487 = vunpack.c.l.b16 %v714
        %v2488 = vunpack.c.h.b16 %v714
        %v2489 = vunpack.c.l.b16 %v715
        %v2490 = vunpack.c.h.b16 %v715
        %v2491 = vunpack.c.l.b16 %v716
        %v2492 = vunpack.c.h.b16 %v716
        %v2493 = vunpack.c.l.b16 %v717
        %v2494 = vunpack.c.h.b16 %v717
        %v2495 = vunpack.c.l.b16 %v718
        %v2496 = vunpack.c.h.b16 %v718
        %v2497 = vunpack.c.l.b16 %v719
        %v2498 = vunpack.c.h.b16 %v719
        %v2499 = vunpack.c.l.b16 %v720
        %v2500 = vunpack.c.h.b16 %v720
        %v2501 = vunpack.c.l.b16 %v721
        %v2502 = vunpack.c.h.b16 %v721
        %v2503 = vunpack.c.l.b16 %v722
        %v2504 = vunpack.c.h.b16 %v722
        %v2505 = vunpack.c.l.b16 %v723
        %v2506 = vunpack.c.h.b16 %v723
        %v2507 = vunpack.c.l.b16 %v724
        %v2508 = vunpack.c.h.b16 %v724
        %v2509 = vunpack.c.l.b16 %v725
        %v2510 = vunpack.c.h.b16 %v725
        %v2511 = vunpack.c.l.b16 %v726
        %v2512 = vunpack.c.h.b16 %v726
        %v2513 = vunpack.c.l.b16 %v727
        %v2514 = vunpack.c.h.b16 %v727
        %v2515 = vunpack.c.l.b16 %v728
        %v2516 = vunpack.c.h.b16 %v728
        %v2517 = vunpack.c.l.b16 %v729
        %v2518 = vunpack.c.h.b16 %v729
        %v2519 = vunpack.c.l.b16 %v730
        %v2520 = vunpack.c.h.b16 %v730
        %v2521 = vunpack.c.l.b16 %v731
        %v2522 = vunpack.c.h.b16 %v731
        %v2523 = vunpack.c.l.b16 %v732
        %v2524 = vunpack.c.h.b16 %v732
        %v2525 = vunpack.c.l.b16 %v733
        %v2526 = vunpack.c.h.b16 %v733
        %v2527 = vunpack.c.l.b16 %v734
        %v2528 = vunpack.c.h.b16 %v734
        %v2529 = vunpack.c.l.b16 %v735
        %v2530 = vunpack.c.h.b16 %v735
        %v2531 = vunpack.c.l.b16 %v736
        %v2532 = vunpack.c.h.b16 %v736
        %v2533 = vunpack.c.l.b16 %v737
        %v2534 = vunpack.c.h.b16 %v737
        %v2535 = vunpack.c.l.b16 %v738
        %v2536 = vunpack.c.h.b16 %v738
        %v2537 = vunpack.c.l.b16 %v739
        %v2538 = vunpack.c.h.b16 %v739
        %v2539 = vunpack.c.l.b16 %v740
        %v2540 = vunpack.c.h.b16 %v740
        %v2541 = vunpack.c.l.b16 %v741
        %v2542 = vunpack.c.h.b16 %v741
        %v2543 = vunpack.c.l.b16 %v742
        %v2544 = vunpack.c.h.b16 %v742
        %v2545 = vunpack.c.l.b16 %v743
        %v2546 = vunpack.c.h.b16 %v743
        %v2547 = vunpack.c.l.b16 %v744
        %v2548 = vunpack.c.h.b16 %v744
        %v2549 = vunpack.c.l.b16 %v745
        %v2550 = vunpack.c.h.b16 %v745
        %v2551 = vunpack.c.l.b16 %v746
        %v2552 = vunpack.c.h.b16 %v746
        %v2553 = vunpack.c.l.b16 %v747
        %v2554 = vunpack.c.h.b16 %v747
        %v2555 = vunpack.c.l.b16 %v748
        %v2556 = vunpack.c.h.b16 %v748
        %v2557 = vunpack.c.l.b16 %v749
        %v2558 = vunpack.c.h.b16 %v749
        %v2559 = vunpack.c.l.b16 %v750
        %v2560 = vunpack.c.h.b16 %v750
        %v2561 = vunpack.c.l.b16 %v751
        %v2562 = vunpack.c.h.b16 %v751
        %v2563 = vunpack.c.l.b16 %v752
        %v2564 = vunpack.c.h.b16 %v752
        %v2565 = vunpack.c.l.b16 %v753
        %v2566 = vunpack.c.h.b16 %v753
        %v2567 = vunpack.c.l.b16 %v754
        %v2568 = vunpack.c.h.b16 %v754
        %v2569 = vunpack.c.l.b16 %v755
        %v2570 = vunpack.c.h.b16 %v755
        %v2571 = vunpack.c.l.b16 %v756
        %v2572 = vunpack.c.h.b16 %v756
        %v2573 = vunpack.c.l.b16 %v757
        %v2574 = vunpack.c.h.b16 %v757
        %v2575 = vunpack.c.l.b16 %v758
        %v2576 = vunpack.c.h.b16 %v758
        %v2577 = vunpack.c.l.b16 %v759
        %v2578 = vunpack.c.h.b16 %v759
        %v2579 = vunpack.c.l.b16 %v760
        %v2580 = vunpack.c.h.b16 %v760
        %v2581 = vunpack.c.l.b16 %v761
        %v2582 = vunpack.c.h.b16 %v761
        %v2583 = vunpack.c.l.b16 %v762
        %v2584 = vunpack.c.h.b16 %v762
        %v2585 = vunpack.c.l.b16 %v763
        %v2586 = vunpack.c.h.b16 %v763
        %v2587 = vunpack.c.l.b16 %v764
        %v2588 = vunpack.c.h.b16 %v764
        %v2589 = vunpack.c.l.b16 %v765
        %v2590 = vunpack.c.h.b16 %v765
        %v2591 = vunpack.c.l.b16 %v766
        %v2592 = vunpack.c.h.b16 %v766
        %v2593 = vunpack.c.l.b16 %v767
        %v2594 = vunpack.c.h.b16 %v767
        %v2595 = vunpack.c.l.b16 %v768
        %v2596 = vunpack.c.h.b16 %v768
        %v2597 = vunpack.c.l.b16 %v769
        %v2598 = vunpack.c.h.b16 %v769
        %v2599 = vunpack.c.l.b16 %v770
        %v2600 = vunpack.c.h.b16 %v770
        %v2601 = vunpack.c.l.b16 %v771
        %v2602 = vunpack.c.h.b16 %v771
        %v2603 = vunpack.c.l.b16 %v772
        %v2604 = vunpack.c.h.b16 %v772
        %v2605 = vunpack.c.l.b16 %v773
        %v2606 = vunpack.c.h.b16 %v773
        %v2607 = vunpack.c.l.b16 %v774
        %v2608 = vunpack.c.h.b16 %v774
        %v2609 = vunpack.c.l.b16 %v775
        %v2610 = vunpack.c.h.b16 %v775
        %v2611 = vunpack.c.l.b16 %v776
        %v2612 = vunpack.c.h.b16 %v776
        %v2613 = vunpack.c.l.b16 %v777
        %v2614 = vunpack.c.h.b16 %v777
        %v2615 = vunpack.c.l.b16 %v778
        %v2616 = vunpack.c.h.b16 %v778
        %v2617 = vunpack.c.l.b16 %v779
        %v2618 = vunpack.c.h.b16 %v779
        %v2619 = vunpack.c.l.b16 %v780
        %v2620 = vunpack.c.h.b16 %v780
        %v2621 = vunpack.c.l.b16 %v781
        %v2622 = vunpack.c.h.b16 %v781
        %v2623 = vunpack.c.l.b16 %v782
        %v2624 = vunpack.c.h.b16 %v782
        %v2625 = vunpack.c.l.b16 %v783
        %v2626 = vunpack.c.h.b16 %v783
        %v2627 = vunpack.c.l.b16 %v784
        %v2628 = vunpack.c.h.b16 %v784
        %v2629 = vunpack.c.l.b16 %v785
        %v2630 = vunpack.c.h.b16 %v785
        %v2631 = vunpack.c.l.b16 %v786
        %v2632 = vunpack.c.h.b16 %v786
        %v2633 = vunpack.c.l.b16 %v787
        %v2634 = vunpack.c.h.b16 %v787
        %v2635 = vunpack.c.l.b16 %v788
        %v2636 = vunpack.c.h.b16 %v788
        %v2637 = vunpack.c.l.b16 %v789
        %v2638 = vunpack.c.h.b16 %v789
        %v2639 = vunpack.c.l.b16 %v790
        %v2640 = vunpack.c.h.b16 %v790
        %v2641 = vunpack.c.l.b16 %v791
        %v2642 = vunpack.c.h.b16 %v791
        %v2643 = vunpack.c.l.b16 %v792
        %v2644 = vunpack.c.h.b16 %v792
        %v2645 = vunpack.c.l.b16 %v793
        %v2646 = vunpack.c.h.b16 %v793
        %v2647 = vunpack.c.l.b16 %v794
        %v2648 = vunpack.c.h.b16 %v794
        %v2649 = vunpack.c.l.b16 %v795
        %v2650 = vunpack.c.h.b16 %v795
        %v2651 = vunpack.c.l.b16 %v796
        %v2652 = vunpack.c.h.b16 %v796
        %v2653 = vunpack.c.l.b16 %v797
        %v2654 = vunpack.c.h.b16 %v797
        %v2655 = vunpack.c.l.b16 %v798
        %v2656 = vunpack.c.h.b16 %v798
        %v2657 = vunpack.c.l.b16 %v799
        %v2658 = vunpack.c.h.b16 %v799
        %v2659 = vunpack.c.l.b16 %v800
        %v2660 = vunpack.c.h.b16 %v800
        %v2661 = vunpack.c.l.b16 %v801
        %v2662 = vunpack.c.h.b16 %v801
        %v2663 = vunpack.c.l.b16 %v802
        %v2664 = vunpack.c.h.b16 %v802
        %v2665 = vunpack.c.l.b16 %v803
        %v2666 = vunpack.c.h.b16 %v803
        %v2667 = vunpack.c.l.b16 %v804
        %v2668 = vunpack.c.h.b16 %v804
        %v2669 = vunpack.c.l.b16 %v805
        %v2670 = vunpack.c.h.b16 %v805
        %v2671 = vunpack.c.l.b16 %v806
        %v2672 = vunpack.c.h.b16 %v806
        %v2673 = vunpack.c.l.b16 %v807
        %v2674 = vunpack.c.h.b16 %v807
        %v2675 = vunpack.c.l.b16 %v808
        %v2676 = vunpack.c.h.b16 %v808
        %v2677 = vunpack.c.l.b16 %v809
        %v2678 = vunpack.c.h.b16 %v809
        %v2679 = vunpack.c.l.b16 %v810
        %v2680 = vunpack.c.h.b16 %v810
        %v2681 = vunpack.c.l.b16 %v811
        %v2682 = vunpack.c.h.b16 %v811
        %v2683 = vunpack.c.l.b16 %v812
        %v2684 = vunpack.c.h.b16 %v812
        %v2685 = vunpack.c.l.b16 %v813
        %v2686 = vunpack.c.h.b16 %v813
        %v2687 = vunpack.c.l.b16 %v814
        %v2688 = vunpack.c.h.b16 %v814
        %v2689 = vunpack.c.l.b16 %v815
        %v2690 = vunpack.c.h.b16 %v815
        %v2691 = vunpack.c.l.b16 %v816
        %v2692 = vunpack.c.h.b16 %v816
        %v2693 = vunpack.c.l.b16 %v817
        %v2694 = vunpack.c.h.b16 %v817
        %v2695 = vunpack.c.l.b16 %v818
        %v2696 = vunpack.c.h.b16 %v818
        %v2697 = vunpack.c.l.b16 %v819
        %v2698 = vunpack.c.h.b16 %v819
        %v2699 = vunpack.c.l.b16 %v820
        %v2700 = vunpack.c.h.b16 %v820
        %v2701 = vunpack.c.l.b16 %v821
        %v2702 = vunpack.c.h.b16 %v821
        %v2703 = vunpack.c.l.b16 %v822
        %v2704 = vunpack.c.h.b16 %v822
        %v2705 = vunpack.c.l.b16 %v823
        %v2706 = vunpack.c.h.b16 %v823
        %v2707 = vunpack.c.l.b16 %v824
        %v2708 = vunpack.c.h.b16 %v824
        %v2709 = vunpack.c.l.b16 %v825
        %v2710 = vunpack.c.h.b16 %v825
        %v2711 = vunpack.c.l.b16 %v826
        %v2712 = vunpack.c.h.b16 %v826
        %v2713 = vunpack.c.l.b16 %v827
        %v2714 = vunpack.c.h.b16 %v827
        %v2715 = vunpack.c.l.b16 %v828
        %v2716 = vunpack.c.h.b16 %v828
        %v2717 = vunpack.c.l.b16 %v829
        %v2718 = vunpack.c.h.b16 %v829
        %v2719 = vunpack.c.l.b16 %v830
        %v2720 = vunpack.c.h.b16 %v830
        %v2721 = vunpack.c.l.b16 %v831
        %v2722 = vunpack.c.h.b16 %v831
        %v2723 = vunpack.c.l.b16 %v832
        %v2724 = vunpack.c.h.b16 %v832
        %v2725 = vunpack.c.l.b16 %v833
        %v2726 = vunpack.c.h.b16 %v833
        %v2727 = vunpack.c.l.b16 %v834
        %v2728 = vunpack.c.h.b16 %v834
        %v2729 = vunpack.c.l.b16 %v835
        %v2730 = vunpack.c.h.b16 %v835
        %v2731 = vunpack.c.l.b16 %v836
        %v2732 = vunpack.c.h.b16 %v836
        %v2733 = vunpack.c.l.b16 %v837
        %v2734 = vunpack.c.h.b16 %v837
        %v2735 = vunpack.c.l.b16 %v838
        %v2736 = vunpack.c.h.b16 %v838
        %v2737 = vunpack.c.l.b16 %v839
        %v2738 = vunpack.c.h.b16 %v839
        %v2739 = vunpack.c.l.b16 %v840
        %v2740 = vunpack.c.h.b16 %v840
        %v2741 = vunpack.c.l.b16 %v841
        %v2742 = vunpack.c.h.b16 %v841
        %v2743 = vunpack.c.l.b16 %v842
        %v2744 = vunpack.c.h.b16 %v842
        %v2745 = vunpack.c.l.b16 %v843
        %v2746 = vunpack.c.h.b16 %v843
        %v2747 = vunpack.c.l.b16 %v844
        %v2748 = vunpack.c.h.b16 %v844
        %v2749 = vunpack.c.l.b16 %v845
        %v2750 = vunpack.c.h.b16 %v845
        %v2751 = vunpack.c.l.b16 %v846
        %v2752 = vunpack.c.h.b16 %v846
        %v2753 = vunpack.c.l.b16 %v847
        %v2754 = vunpack.c.h.b16 %v847
        %v2755 = vunpack.c.l.b16 %v848
        %v2756 = vunpack.c.h.b16 %v848
        %v2757 = vunpack.c.l.b16 %v849
        %v2758 = vunpack.c.h.b16 %v849
        %v2759 = vunpack.c.l.b16 %v850
        %v2760 = vunpack.c.h.b16 %v850
        %v2761 = vunpack.c.l.b16 %v851
        %v2762 = vunpack.c.h.b16 %v851
        %v2763 = vunpack.c.l.b16 %v852
        %v2764 = vunpack.c.h.b16 %v852
        %v2765 = vunpack.c.l.b16 %v853
        %v2766 = vunpack.c.h.b16 %v853
        %v2767 = vunpack.c.l.b16 %v854
        %v2768 = vunpack.c.h.b16 %v854
        %v2769 = vunpack.c.l.b16 %v855
        %v2770 = vunpack.c.h.b16 %v855
        %v2771 = vunpack.c.l.b16 %v856
        %v2772 = vunpack.c.h.b16 %v856
        %v2773 = vunpack.c.l.b16 %v857
        %v2774 = vunpack.c.h.b16 %v857
        %v2775 = vunpack.c.l.b16 %v858
        %v2776 = vunpack.c.h.b16 %v858
        %v2777 = vunpack.c.l.b16 %v859
        %v2778 = vunpack.c.h.b16 %v859
        %v2779 = vunpack.c.l.b16 %v860
        %v2780 = vunpack.c.h.b16 %v860
        %v2781 = vunpack.c.l.b16 %v861
        %v2782 = vunpack.c.h.b16 %v861
        %v2783 = vunpack.c.l.b16 %v862
        %v2784 = vunpack.c.h.b16 %v862
        %v2785 = vunpack.c.l.b16 %v863
        %v2786 = vunpack.c.h.b16 %v863
        %v2787 = vunpack.c.l.b16 %v864
        %v2788 = vunpack.c.h.b16 %v864
        %v2789 = vunpack.c.l.b16 %v865
        %v2790 = vunpack.c.h.b16 %v865
        %v2791 = vunpack.c.l.b16 %v866
        %v2792 = vunpack.c.h.b16 %v866
        %v2793 = vunpack.c.l.b16 %v867
        %v2794 = vunpack.c.h.b16 %v867
        %v2795 = vunpack.c.l.b16 %v868
        %v2796 = vunpack.c.h.b16 %v868
        %v2797 = vunpack.c.l.b16 %v869
        %v2798 = vunpack.c.h.b16 %v869
        %v2799 = vunpack.c.l.b16 %v870
        %v2800 = vunpack.c.h.b16 %v870
        %v2801 = vunpack.c.l.b16 %v871
        %v2802 = vunpack.c.h.b16 %v871
        %v2803 = vunpack.c.l.b16 %v872
        %v2804 = vunpack.c.h.b16 %v872
        %v2805 = vunpack.c.l.b16 %v873
        %v2806 = vunpack.c.h.b16 %v873
        %v2807 = vunpack.c.l.b16 %v874
        %v2808 = vunpack.c.h.b16 %v874
        %v2809 = vunpack.c.l.b16 %v875
        %v2810 = vunpack.c.h.b16 %v875
        %v2811 = vunpack.c.l.b16 %v876
        %v2812 = vunpack.c.h.b16 %v876
        %v2813 = vunpack.c.l.b16 %v877
        %v2814 = vunpack.c.h.b16 %v877
        %v2815 = vunpack.c.l.b16 %v878
        %v2816 = vunpack.c.h.b16 %v878
        %v2817 = vunpack.c.l.b16 %v879
        %v2818 = vunpack.c.h.b16 %v879
        %v2819 = vunpack.c.l.b16 %v880
        %v2820 = vunpack.c.h.b16 %v880
        %v2821 = vunpack.c.l.b16 %v881
        %v2822 = vunpack.c.h.b16 %v881
        %v2823 = vunpack.c.l.b16 %v882
        %v2824 = vunpack.c.h.b16 %v882
        %v2825 = vunpack.c.l.b16 %v883
        %v2826 = vunpack.c.h.b16 %v883
        %v2827 = vunpack.c.l.b16 %v884
        %v2828 = vunpack.c.h.b16 %v884
        %v2829 = vunpack.c.l.b16 %v885
        %v2830 = vunpack.c.h.b16 %v885
        %v2831 = vunpack.c.l.b16 %v886
        %v2832 = vunpack.c.h.b16 %v886
        %v2833 = vunpack.c.l.b16 %v887
        %v2834 = vunpack.c.h.b16 %v887
        %v2835 = vunpack.c.l.b16 %v888
        %v2836 = vunpack.c.h.b16 %v888
        %v2837 = vunpack.c.l.b16 %v889
        %v2838 = vunpack.c.h.b16 %v889
        %v2839 = vunpack.c.l.b16 %v890
        %v2840 = vunpack.c.h.b16 %v890
        %v2841 = vunpack.c.l.b16 %v891
        %v2842 = vunpack.c.h.b16 %v891
        %v2843 = vunpack.c.l.b16 %v892
        %v2844 = vunpack.c.h.b16 %v892
        %v2845 = vunpack.c.l.b16 %v893
        %v2846 = vunpack.c.h.b16 %v893
        %v2847 = vunpack.c.l.b16 %v894
        %v2848 = vunpack.c.h.b16 %v894
        %v2849 = vunpack.c.l.b16 %v895
        %v2850 = vunpack.c.h.b16 %v895
        %v2851 = vunpack.c.l.b16 %v896
        %v2852 = vunpack.c.h.b16 %v896
        %v2853 = vunpack.c.l.b16 %v897
        %v2854 = vunpack.c.h.b16 %v897
        %v2855 = vunpack.c.l.b16 %v898
        %v2856 = vunpack.c.h.b16 %v898
        %v2857 = vunpack.c.l.b16 %v899
        %v2858 = vunpack.c.h.b16 %v899
        %v2859 = vunpack.c.l.b16 %v900
        %v2860 = vunpack.c.h.b16 %v900
        %v2861 = vunpack.c.l.b16 %v901
        %v2862 = vunpack.c.h.b16 %v901
        %v2863 = vunpack.c.l.b16 %v902
        %v2864 = vunpack.c.h.b16 %v902
        %v2865 = vunpack.c.l.b16 %v903
        %v2866 = vunpack.c.h.b16 %v903
        %v2867 = vunpack.c.l.b16 %v904
        %v2868 = vunpack.c.h.b16 %v904
        %v2869 = vunpack.c.l.b16 %v905
        %v2870 = vunpack.c.h.b16 %v905
        %v2871 = vunpack.c.l.b16 %v906
        %v2872 = vunpack.c.h.b16 %v906
        %v2873 = vunpack.c.l.b16 %v907
        %v2874 = vunpack.c.h.b16 %v907
        %v2875 = vunpack.c.l.b16 %v908
        %v2876 = vunpack.c.h.b16 %v908
        %v2877 = vunpack.c.l.b16 %v909
        %v2878 = vunpack.c.h.b16 %v909
        %v2879 = vunpack.c.l.b16 %v910
        %v2880 = vunpack.c.h.b16 %v910
        %v2881 = vunpack.c.l.b16 %v911
        %v2882 = vunpack.c.h.b16 %v911
        %v2883 = vunpack.c.l.b16 %v912
        %v2884 = vunpack.c.h.b16 %v912
        %v2885 = vunpack.c.l.b16 %v913
        %v2886 = vunpack.c.h.b16 %v913
        %v2887 = vunpack.c.l.b16 %v914
        %v2888 = vunpack.c.h.b16 %v914
        %v2889 = vunpack.c.l.b16 %v915
        %v2890 = vunpack.c.h.b16 %v915
        %v2891 = vunpack.c.l.b16 %v916
        %v2892 = vunpack.c.h.b16 %v916
        %v2893 = vunpack.c.l.b16 %v917
        %v2894 = vunpack.c.h.b16 %v917
        %v2895 = vunpack.c.l.b16 %v918
        %v2896 = vunpack.c.h.b16 %v918
        %v2897 = vunpack.c.l.b16 %v919
        %v2898 = vunpack.c.h.b16 %v919
        %v2899 = vunpack.c.l.b16 %v920
        %v2900 = vunpack.c.h.b16 %v920
        %v2901 = vunpack.c.l.b16 %v921
        %v2902 = vunpack.c.h.b16 %v921
        %v2903 = vunpack.c.l.b16 %v922
        %v2904 = vunpack.c.h.b16 %v922
        %v2905 = vunpack.c.l.b16 %v923
        %v2906 = vunpack.c.h.b16 %v923
        %v2907 = vunpack.c.l.b16 %v924
        %v2908 = vunpack.c.h.b16 %v924
        %v2909 = vunpack.c.l.b16 %v925
        %v2910 = vunpack.c.h.b16 %v925
        %v2911 = vunpack.c.l.b16 %v926
        %v2912 = vunpack.c.h.b16 %v926
        %v2913 = vunpack.c.l.b16 %v927
        %v2914 = vunpack.c.h.b16 %v927
        %v2915 = vunpack.c.l.b16 %v928
        %v2916 = vunpack.c.h.b16 %v928
        %v2917 = vunpack.c.l.b16 %v929
        %v2918 = vunpack.c.h.b16 %v929
        %v2919 = vunpack.c.l.b16 %v930
        %v2920 = vunpack.c.h.b16 %v930
        %v2921 = vunpack.c.l.b16 %v931
        %v2922 = vunpack.c.h.b16 %v931
        %v2923 = vunpack.c.l.b16 %v932
        %v2924 = vunpack.c.h.b16 %v932
        %v2925 = vunpack.c.l.b16 %v933
        %v2926 = vunpack.c.h.b16 %v933
        %v2927 = vunpack.c.l.b16 %v934
        %v2928 = vunpack.c.h.b16 %v934
        %v2929 = vunpack.c.l.b16 %v935
        %v2930 = vunpack.c.h.b16 %v935
        %v2931 = vunpack.c.l.b16 %v936
        %v2932 = vunpack.c.h.b16 %v936
        %v2933 = vunpack.c.l.b16 %v937
        %v2934 = vunpack.c.h.b16 %v937
        %v2935 = vunpack.c.l.b16 %v938
        %v2936 = vunpack.c.h.b16 %v938
        %v2937 = vunpack.c.l.b16 %v939
        %v2938 = vunpack.c.h.b16 %v939
        %v2939 = vunpack.c.l.b16 %v940
        %v2940 = vunpack.c.h.b16 %v940
        %v2941 = vunpack.c.l.b16 %v941
        %v2942 = vunpack.c.h.b16 %v941
        %v2943 = vunpack.c.l.b16 %v942
        %v2944 = vunpack.c.h.b16 %v942
        %v2945 = vunpack.c.l.b16 %v943
        %v2946 = vunpack.c.h.b16 %v943
        %v2947 = vunpack.c.l.b16 %v944
        %v2948 = vunpack.c.h.b16 %v944
        %v2949 = vunpack.c.l.b16 %v945
        %v2950 = vunpack.c.h.b16 %v945
        %v2951 = vunpack.c.l.b16 %v946
        %v2952 = vunpack.c.h.b16 %v946
        %v2953 = vunpack.c.l.b16 %v947
        %v2954 = vunpack.c.h.b16 %v947
        %v2955 = vunpack.c.l.b16 %v948
        %v2956 = vunpack.c.h.b16 %v948
        %v2957 = vunpack.c.l.b16 %v949
        %v2958 = vunpack.c.h.b16 %v949
        %v2959 = vunpack.c.l.b16 %v950
        %v2960 = vunpack.c.h.b16 %v950
        %v2961 = vunpack.c.l.b16 %v951
        %v2962 = vunpack.c.h.b16 %v951
        %v2963 = vunpack.c.l.b16 %v952
        %v2964 = vunpack.c.h.b16 %v952
        %v2965 = vunpack.c.l.b16 %v953
        %v2966 = vunpack.c.h.b16 %v953
        %v2967 = vunpack.c.l.b16 %v954
        %v2968 = vunpack.c.h.b16 %v954
        %v2969 = vunpack.c.l.b16 %v955
        %v2970 = vunpack.c.h.b16 %v955
        %v2971 = vunpack.c.l.b16 %v956
        %v2972 = vunpack.c.h.b16 %v956
        %v2973 = vunpack.c.l.b16 %v957
        %v2974 = vunpack.c.h.b16 %v957
        %v2975 = vunpack.c.l.b16 %v958
        %v2976 = vunpack.c.h.b16 %v958
        %v2977 = vunpack.c.l.b16 %v959
        %v2978 = vunpack.c.h.b16 %v959
        %v2979 = vunpack.c.l.b16 %v960
        %v2980 = vunpack.c.h.b16 %v960
        %v2981 = vunpack.c.l.b16 %v961
        %v2982 = vunpack.c.h.b16 %v961
        %v2983 = vunpack.c.l.b16 %v962
        %v2984 = vunpack.c.h.b16 %v962
        %v2985 = vunpack.c.l.b16 %v963
        %v2986 = vunpack.c.h.b16 %v963
        %v2987 = vunpack.c.l.b16 %v964
        %v2988 = vunpack.c.h.b16 %v964
        %v2989 = vunpack.c.l.b16 %v965
        %v2990 = vunpack.c.h.b16 %v965
        %v2991 = vunpack.c.l.b16 %v966
        %v2992 = vunpack.c.h.b16 %v966
        %v2993 = vunpack.c.l.b16 %v967
        %v2994 = vunpack.c.h.b16 %v967
        %v2995 = vunpack.c.l.b16 %v968
        %v2996 = vunpack.c.h.b16 %v968
        %v2997 = vunpack.c.l.b16 %v969
        %v2998 = vunpack.c.h.b16 %v969
        %v2999 = vunpack.c.l.b16 %v970
        %v3000 = vunpack.c.h.b16 %v970
        %v3001 = vunpack.c.l.b16 %v971
        %v3002 = vunpack.c.h.b16 %v971
        %v3003 = vunpack.c.l.b16 %v972
        %v3004 = vunpack.c.h.b16 %v972
        %v3005 = vunpack.c.l.b16 %v973
        %v3006 = vunpack.c.h.b16 %v973
        %v3007 = vunpack.c.l.b16 %v974
        %v3008 = vunpack.c.h.b16 %v974
        %v3009 = vunpack.c.l.b16 %v975
        %v3010 = vunpack.c.h.b16 %v975
        %v3011 = vunpack.c.l.b16 %v976
        %v3012 = vunpack.c.h.b16 %v976
        %v3013 = vunpack.c.l.b16 %v977
        %v3014 = vunpack.c.h.b16 %v977
        %v3015 = vunpack.c.l.b16 %v978
        %v3016 = vunpack.c.h.b16 %v978
        %v3017 = vunpack.c.l.b16 %v979
        %v3018 = vunpack.c.h.b16 %v979
        %v3019 = vunpack.c.l.b16 %v980
        %v3020 = vunpack.c.h.b16 %v980
        %v3021 = vunpack.c.l.b16 %v981
        %v3022 = vunpack.c.h.b16 %v981
        %v3023 = vunpack.c.l.b16 %v982
        %v3024 = vunpack.c.h.b16 %v982
        %v3025 = vunpack.c.l.b16 %v983
        %v3026 = vunpack.c.h.b16 %v983
        %v3027 = vunpack.c.l.b16 %v984
        %v3028 = vunpack.c.h.b16 %v984
        %v3029 = vunpack.c.l.b16 %v985
        %v3030 = vunpack.c.h.b16 %v985
        %v3031 = vunpack.c.l.b16 %v986
        %v3032 = vunpack.c.h.b16 %v986
        %v3033 = vunpack.c.l.b16 %v987
        %v3034 = vunpack.c.h.b16 %v987
        %v3035 = vunpack.c.l.b16 %v988
        %v3036 = vunpack.c.h.b16 %v988
        %v3037 = vunpack.c.l.b16 %v989
        %v3038 = vunpack.c.h.b16 %v989
        %v3039 = vunpack.c.l.b16 %v990
        %v3040 = vunpack.c.h.b16 %v990
        %v3041 = vunpack.c.l.b16 %v991
        %v3042 = vunpack.c.h.b16 %v991
        %v3043 = vunpack.c.l.b16 %v992
        %v3044 = vunpack.c.h.b16 %v992
        %v3045 = vunpack.c.l.b16 %v993
        %v3046 = vunpack.c.h.b16 %v993
        %v3047 = vunpack.c.l.b16 %v994
        %v3048 = vunpack.c.h.b16 %v994
        %v3049 = vunpack.c.l.b16 %v995
        %v3050 = vunpack.c.h.b16 %v995
        %v3051 = vunpack.c.l.b16 %v996
        %v3052 = vunpack.c.h.b16 %v996
        %v3053 = vunpack.c.l.b16 %v997
        %v3054 = vunpack.c.h.b16 %v997
        %v3055 = vunpack.c.l.b16 %v998
        %v3056 = vunpack.c.h.b16 %v998
        %v3057 = vunpack.c.l.b16 %v999
        %v3058 = vunpack.c.h.b16 %v999
        %v3059 = vunpack.c.l.b16 %v1000
        %v3060 = vunpack.c.h.b16 %v1000
        %v3061 = vunpack.c.l.b16 %v1001
        %v3062 = vunpack.c.h.b16 %v1001
        %v3063 = vunpack.c.l.b16 %v1002
        %v3064 = vunpack.c.h.b16 %v1002
        %v3065 = vunpack.c.l.b16 %v1003
        %v3066 = vunpack.c.h.b16 %v1003
        %v3067 = vunpack.c.l.b16 %v1004
        %v3068 = vunpack.c.h.b16 %v1004
        %v3069 = vunpack.c.l.b16 %v1005
        %v3070 = vunpack.c.h.b16 %v1005
        %v3071 = vunpack.c.l.b16 %v1006
        %v3072 = vunpack.c.h.b16 %v1006
        %v3073 = vunpack.c.l.b16 %v1007
        %v3074 = vunpack.c.h.b16 %v1007
        %v3075 = vunpack.c.l.b16 %v1008
        %v3076 = vunpack.c.h.b16 %v1008
        %v3077 = vunpack.c.l.b16 %v1009
        %v3078 = vunpack.c.h.b16 %v1009
        %v3079 = vunpack.c.l.b16 %v1010
        %v3080 = vunpack.c.h.b16 %v1010
        %v3081 = vunpack.c.l.b16 %v1011
        %v3082 = vunpack.c.h.b16 %v1011
        %v3083 = vunpack.c.l.b16 %v1012
        %v3084 = vunpack.c.h.b16 %v1012
        %v3085 = vunpack.c.l.b16 %v1013
        %v3086 = vunpack.c.h.b16 %v1013
        %v3087 = vunpack.c.l.b16 %v1014
        %v3088 = vunpack.c.h.b16 %v1014
        %v3089 = vunpack.c.l.b16 %v1015
        %v3090 = vunpack.c.h.b16 %v1015
        %v3091 = vunpack.c.l.b16 %v1016
        %v3092 = vunpack.c.h.b16 %v1016
        %v3093 = vunpack.c.l.b16 %v1017
        %v3094 = vunpack.c.h.b16 %v1017
        %v3095 = vunpack.c.l.b16 %v1018
        %v3096 = vunpack.c.h.b16 %v1018
        %v3097 = vunpack.c.l.b16 %v1019
        %v3098 = vunpack.c.h.b16 %v1019
        %v3099 = vunpack.c.l.b16 %v1020
        %v3100 = vunpack.c.h.b16 %v1020
        %v3101 = vunpack.c.l.b16 %v1021
        %v3102 = vunpack.c.h.b16 %v1021
        %v3103 = vunpack.c.l.b16 %v1022
        %v3104 = vunpack.c.h.b16 %v1022
        %v3105 = vunpack.c.l.b16 %v1023
        %v3106 = vunpack.c.h.b16 %v1023
        %v3107 = vunpack.c.l.b16 %v1024
        %v3108 = vunpack.c.h.b16 %v1024
        %v3109 = vunpack.c.l.b16 %v1025
        %v3110 = vunpack.c.h.b16 %v1025
        %v3111 = vunpack.c.l.b16 %v1026
        %v3112 = vunpack.c.h.b16 %v1026
        %v3113 = vunpack.c.l.b16 %v1027
        %v3114 = vunpack.c.h.b16 %v1027
        %v3115 = vunpack.c.l.b16 %v1028
        %v3116 = vunpack.c.h.b16 %v1028
        %v3117 = vunpack.c.l.b16 %v1029
        %v3118 = vunpack.c.h.b16 %v1029
        %v3119 = vunpack.c.l.b16 %v1030
        %v3120 = vunpack.c.h.b16 %v1030
        %v3121 = vunpack.c.l.b16 %v1031
        %v3122 = vunpack.c.h.b16 %v1031
        %v3123 = vunpack.c.l.b16 %v1032
        %v3124 = vunpack.c.h.b16 %v1032
        %v3125 = vunpack.c.l.b16 %v1033
        %v3126 = vunpack.c.h.b16 %v1033
        %v3127 = vunpack.c.l.b16 %v1034
        %v3128 = vunpack.c.h.b16 %v1034
        %v3129 = vunpack.c.l.b16 %v1035
        %v3130 = vunpack.c.h.b16 %v1035
        %v3131 = vunpack.c.l.b16 %v1036
        %v3132 = vunpack.c.h.b16 %v1036
        %v3133 = vunpack.c.l.b16 %v1037
        %v3134 = vunpack.c.h.b16 %v1037
        %v3135 = vunpack.c.l.b16 %v1038
        %v3136 = vunpack.c.h.b16 %v1038
        %v3137 = vunpack.c.l.b16 %v1039
        %v3138 = vunpack.c.h.b16 %v1039
        %v3139 = vunpack.c.l.b16 %v1040
        %v3140 = vunpack.c.h.b16 %v1040
        %v3141 = vunpack.c.l.b16 %v1041
        %v3142 = vunpack.c.h.b16 %v1041
        %v3143 = vunpack.c.l.b16 %v1042
        %v3144 = vunpack.c.h.b16 %v1042
        %v3145 = vunpack.c.l.b16 %v1043
        %v3146 = vunpack.c.h.b16 %v1043
        %v3147 = vunpack.c.l.b16 %v1044
        %v3148 = vunpack.c.h.b16 %v1044
        %v3149 = vunpack.c.l.b16 %v1045
        %v3150 = vunpack.c.h.b16 %v1045
        %v3151 = vunpack.c.l.b16 %v1046
        %v3152 = vunpack.c.h.b16 %v1046
        %v3153 = vunpack.c.l.b16 %v1047
        %v3154 = vunpack.c.h.b16 %v1047
        %v3155 = vunpack.c.l.b16 %v1048
        %v3156 = vunpack.c.h.b16 %v1048
        %v3157 = vunpack.c.l.b16 %v1049
        %v3158 = vunpack.c.h.b16 %v1049
        %v3159 = vunpack.c.l.b16 %v1050
        %v3160 = vunpack.c.h.b16 %v1050
        %v3161 = vunpack.c.l.b16 %v1051
        %v3162 = vunpack.c.h.b16 %v1051
        %v3163 = vunpack.c.l.b16 %v1052
        %v3164 = vunpack.c.h.b16 %v1052
        %v3165 = vunpack.c.l.b16 %v1053
        %v3166 = vunpack.c.h.b16 %v1053
        %v3167 = vunpack.c.l.b16 %v1054
        %v3168 = vunpack.c.h.b16 %v1054
        %v3169 = vunpack.c.l.b16 %v1055
        %v3170 = vunpack.c.h.b16 %v1055
        %v3171 = vunpack.c.l.b16 %v1056
        %v3172 = vunpack.c.h.b16 %v1056
        %v3173 = vunpack.c.l.b16 %v1057
        %v3174 = vunpack.c.h.b16 %v1057
        %v3175 = vunpack.c.l.b16 %v1058
        %v3176 = vunpack.c.h.b16 %v1058
        %v3177 = vunpack.c.l.b16 %v1059
        %v3178 = vunpack.c.h.b16 %v1059
        %v3179 = vunpack.c.l.b16 %v1060
        %v3180 = vunpack.c.h.b16 %v1060
        %v3181 = vunpack.c.l.b16 %v1061
        %v3182 = vunpack.c.h.b16 %v1061
        %v3183 = vunpack.c.l.b16 %v1062
        %v3184 = vunpack.c.h.b16 %v1062
        %v3185 = vunpack.c.l.b16 %v1063
        %v3186 = vunpack.c.h.b16 %v1063
        %v3187 = vunpack.c.l.b16 %v1064
        %v3188 = vunpack.c.h.b16 %v1064
        %v3189 = vunpack.c.l.b16 %v1065
        %v3190 = vunpack.c.h.b16 %v1065
        %v3191 = vunpack.c.l.b16 %v1066
        %v3192 = vunpack.c.h.b16 %v1066
        %v3193 = vunpack.c.l.b16 %v1067
        %v3194 = vunpack.c.h.b16 %v1067
        %v3195 = vunpack.c.l.b16 %v1068
        %v3196 = vunpack.c.h.b16 %v1068
        %v3197 = vunpack.c.l.b16 %v1069
        %v3198 = vunpack.c.h.b16 %v1069
        %v3199 = vunpack.c.l.b16 %v1070
        %v3200 = vunpack.c.h.b16 %v1070
        %v3201 = vunpack.c.l.b16 %v1071
        %v3202 = vunpack.c.h.b16 %v1071
        %v3203 = vunpack.c.l.b16 %v1072
        %v3204 = vunpack.c.h.b16 %v1072
        %v3205 = vunpack.c.l.b16 %v1073
        %v3206 = vunpack.c.h.b16 %v1073
        %v3207 = vunpack.c.l.b16 %v1074
        %v3208 = vunpack.c.h.b16 %v1074
        %v3209 = vunpack.c.l.b16 %v1075
        %v3210 = vunpack.c.h.b16 %v1075
        %v3211 = vunpack.c.l.b16 %v1076
        %v3212 = vunpack.c.h.b16 %v1076
        %v3213 = vunpack.c.l.b16 %v1077
        %v3214 = vunpack.c.h.b16 %v1077
        %v3215 = vunpack.c.l.b16 %v1078
        %v3216 = vunpack.c.h.b16 %v1078
        %v3217 = vunpack.c.l.b16 %v1079
        %v3218 = vunpack.c.h.b16 %v1079
        %v3219 = vunpack.c.l.b16 %v1080
        %v3220 = vunpack.c.h.b16 %v1080
        %v3221 = vunpack.c.l.b16 %v1081
        %v3222 = vunpack.c.h.b16 %v1081
        %v3223 = vunpack.c.l.b16 %v1082
        %v3224 = vunpack.c.h.b16 %v1082
        %v3225 = vunpack.c.l.b16 %v1083
        %v3226 = vunpack.c.h.b16 %v1083
        %v3227 = vunpack.c.l.b16 %v1084
        %v3228 = vunpack.c.h.b16 %v1084
        %v3229 = vunpack.c.l.b16 %v1085
        %v3230 = vunpack.c.h.b16 %v1085
        %v3231 = vunpack.c.l.b16 %v1086
        %v3232 = vunpack.c.h.b16 %v1086
        %v3233 = vunpack.c.l.b16 %v1087
        %v3234 = vunpack.c.h.b16 %v1087
        %v3235 = vunpack.c.l.b16 %v1088
        %v3236 = vunpack.c.h.b16 %v1088
        %v3237 = vunpack.c.l.b16 %v1089
        %v3238 = vunpack.c.h.b16 %v1089
        %v3239 = vunpack.c.l.b16 %v1090
        %v3240 = vunpack.c.h.b16 %v1090
        %v3241 = vunpack.c.l.b16 %v1091
        %v3242 = vunpack.c.h.b16 %v1091
        %v3243 = vunpack.c.l.b16 %v1092
        %v3244 = vunpack.c.h.b16 %v1092
        %v3245 = vunpack.c.l.b16 %v1093
        %v3246 = vunpack.c.h.b16 %v1093
        %v3247 = vunpack.c.l.b16 %v1094
        %v3248 = vunpack.c.h.b16 %v1094
        %v3249 = vunpack.c.l.b16 %v1095
        %v3250 = vunpack.c.h.b16 %v1095
        %v3251 = vunpack.c.l.b16 %v1096
        %v3252 = vunpack.c.h.b16 %v1096
        %v3253 = vunpack.c.l.b16 %v1097
        %v3254 = vunpack.c.h.b16 %v1097
        %v3255 = vunpack.c.l.b16 %v1098
        %v3256 = vunpack.c.h.b16 %v1098
        %v3257 = vunpack.c.l.b16 %v1099
        %v3258 = vunpack.c.h.b16 %v1099
        %v3259 = vunpack.c.l.b16 %v1100
        %v3260 = vunpack.c.h.b16 %v1100
        %v3261 = vunpack.c.l.b16 %v1101
        %v3262 = vunpack.c.h.b16 %v1101
        %v3263 = vunpack.c.l.b16 %v1102
        %v3264 = vunpack.c.h.b16 %v1102
        %v3265 = vunpack.c.l.b16 %v1103
        %v3266 = vunpack.c.h.b16 %v1103
        %v3267 = vunpack.c.l.b16 %v1104
        %v3268 = vunpack.c.h.b16 %v1104
        %v3269 = vunpack.c.l.b16 %v1105
        %v3270 = vunpack.c.h.b16 %v1105
        %v3271 = vunpack.c.l.b16 %v1106
        %v3272 = vunpack.c.h.b16 %v1106
        %v3273 = vunpack.c.l.b16 %v1107
        %v3274 = vunpack.c.h.b16 %v1107
        %v3275 = vunpack.c.l.b16 %v1108
        %v3276 = vunpack.c.h.b16 %v1108
        %v3277 = vunpack.c.l.b16 %v1109
        %v3278 = vunpack.c.h.b16 %v1109
        %v3279 = vunpack.c.l.b16 %v1110
        %v3280 = vunpack.c.h.b16 %v1110
        %v3281 = vunpack.c.l.b16 %v1111
        %v3282 = vunpack.c.h.b16 %v1111
        %v3283 = vunpack.c.l.b16 %v1112
        %v3284 = vunpack.c.h.b16 %v1112
        %v3285 = vunpack.c.l.b16 %v1113
        %v3286 = vunpack.c.h.b16 %v1113
        %v3287 = vunpack.c.l.b16 %v1114
        %v3288 = vunpack.c.h.b16 %v1114
        %v3289 = vunpack.c.l.b16 %v1115
        %v3290 = vunpack.c.h.b16 %v1115
        %v3291 = vunpack.c.l.b16 %v1116
        %v3292 = vunpack.c.h.b16 %v1116
        %v3293 = vunpack.c.l.b16 %v1117
        %v3294 = vunpack.c.h.b16 %v1117
        %v3295 = vunpack.c.l.b16 %v1118
        %v3296 = vunpack.c.h.b16 %v1118
        %v3297 = vunpack.c.l.b16 %v1119
        %v3298 = vunpack.c.h.b16 %v1119
        %v3299 = vunpack.c.l.b16 %v1120
        %v3300 = vunpack.c.h.b16 %v1120
        %v3301 = vunpack.c.l.b16 %v1121
        %v3302 = vunpack.c.h.b16 %v1121
        %v3303 = vunpack.c.l.b16 %v1122
        %v3304 = vunpack.c.h.b16 %v1122
        %v3305 = vunpack.c.l.b16 %v1123
        %v3306 = vunpack.c.h.b16 %v1123
        %v3307 = vunpack.c.l.b16 %v1124
        %v3308 = vunpack.c.h.b16 %v1124
        %v3309 = vunpack.c.l.b16 %v1125
        %v3310 = vunpack.c.h.b16 %v1125
        %v3311 = vunpack.c.l.b16 %v1126
        %v3312 = vunpack.c.h.b16 %v1126
        %v3313 = vunpack.c.l.b16 %v1127
        %v3314 = vunpack.c.h.b16 %v1127
        %v3315 = vunpack.c.l.b16 %v1128
        %v3316 = vunpack.c.h.b16 %v1128
        %v3317 = vunpack.c.l.b16 %v1129
        %v3318 = vunpack.c.h.b16 %v1129
        %v3319 = vunpack.c.l.b16 %v1130
        %v3320 = vunpack.c.h.b16 %v1130
        %v3321 = vunpack.c.l.b16 %v1131
        %v3322 = vunpack.c.h.b16 %v1131
        %v3323 = vunpack.c.l.b16 %v1132
        %v3324 = vunpack.c.h.b16 %v1132
        %v3325 = vunpack.c.l.b16 %v1133
        %v3326 = vunpack.c.h.b16 %v1133
        %v3327 = vunpack.c.l.b16 %v1134
        %v3328 = vunpack.c.h.b16 %v1134
        %v3329 = vunpack.c.l.b16 %v1135
        %v3330 = vunpack.c.h.b16 %v1135
        %v3331 = vunpack.c.l.b16 %v1136
        %v3332 = vunpack.c.h.b16 %v1136
        %v3333 = vunpack.c.l.b16 %v1137
        %v3334 = vunpack.c.h.b16 %v1137
        %v3335 = vunpack.c.l.b16 %v1138
        %v3336 = vunpack.c.h.b16 %v1138
        %v3337 = vunpack.c.l.b16 %v1139
        %v3338 = vunpack.c.h.b16 %v1139
        %v3339 = vunpack.c.l.b16 %v1140
        %v3340 = vunpack.c.h.b16 %v1140
        %v3341 = vunpack.c.l.b16 %v1141
        %v3342 = vunpack.c.h.b16 %v1141
        %v3343 = vunpack.c.l.b16 %v1142
        %v3344 = vunpack.c.h.b16 %v1142
        %v3345 = vunpack.c.l.b16 %v1143
        %v3346 = vunpack.c.h.b16 %v1143
        %v3347 = vunpack.c.l.b16 %v1144
        %v3348 = vunpack.c.h.b16 %v1144
        %v3349 = vunpack.c.l.b16 %v1145
        %v3350 = vunpack.c.h.b16 %v1145
        %v3351 = vunpack.c.l.b16 %v1146
        %v3352 = vunpack.c.h.b16 %v1146
        %v3353 = vunpack.c.l.b16 %v1147
        %v3354 = vunpack.c.h.b16 %v1147
        %v3355 = vunpack.c.l.b16 %v1148
        %v3356 = vunpack.c.h.b16 %v1148
        %v3357 = vunpack.c.l.b16 %v1149
        %v3358 = vunpack.c.h.b16 %v1149
        %v3359 = vunpack.c.l.b16 %v1150
        %v3360 = vunpack.c.h.b16 %v1150
        %v3361 = vunpack.c.l.b16 %v1151
        %v3362 = vunpack.c.h.b16 %v1151
        %v3363 = vunpack.c.l.b16 %v1152
        %v3364 = vunpack.c.h.b16 %v1152
        %v3365 = vunpack.c.l.b16 %v1153
        %v3366 = vunpack.c.h.b16 %v1153
        %v3367 = vunpack.c.l.b16 %v1154
        %v3368 = vunpack.c.h.b16 %v1154
        %v3369 = vunpack.c.l.b16 %v1155
        %v3370 = vunpack.c.h.b16 %v1155
        %v3371 = vunpack.c.l.b16 %v1156
        %v3372 = vunpack.c.h.b16 %v1156
        %v3373 = vunpack.c.l.b16 %v1157
        %v3374 = vunpack.c.h.b16 %v1157
        %v3375 = vunpack.c.l.b16 %v1158
        %v3376 = vunpack.c.h.b16 %v1158
        %v3377 = vunpack.c.l.b16 %v1159
        %v3378 = vunpack.c.h.b16 %v1159
        %v3379 = vunpack.c.l.b16 %v1160
        %v3380 = vunpack.c.h.b16 %v1160
        %v3381 = vunpack.c.l.b16 %v1161
        %v3382 = vunpack.c.h.b16 %v1161
        %v3383 = vunpack.c.l.b16 %v1162
        %v3384 = vunpack.c.h.b16 %v1162
        %v3385 = vunpack.c.l.b16 %v1163
        %v3386 = vunpack.c.h.b16 %v1163
        %v3387 = vunpack.c.l.b16 %v1164
        %v3388 = vunpack.c.h.b16 %v1164
        %v3389 = vunpack.c.l.b16 %v1165
        %v3390 = vunpack.c.h.b16 %v1165
        %v3391 = vunpack.c.l.b16 %v1166
        %v3392 = vunpack.c.h.b16 %v1166
        %v3393 = vunpack.c.l.b16 %v1167
        %v3394 = vunpack.c.h.b16 %v1167
        %v3395 = vunpack.c.l.b16 %v1168
        %v3396 = vunpack.c.h.b16 %v1168
        %v3397 = vunpack.c.l.b16 %v1169
        %v3398 = vunpack.c.h.b16 %v1169
        %v3399 = vunpack.c.l.b16 %v1170
        %v3400 = vunpack.c.h.b16 %v1170
        %v3401 = vunpack.c.l.b16 %v1171
        %v3402 = vunpack.c.h.b16 %v1171
        %v3403 = vunpack.c.l.b16 %v1172
        %v3404 = vunpack.c.h.b16 %v1172
        %v3405 = vunpack.c.l.b16 %v1173
        %v3406 = vunpack.c.h.b16 %v1173
        %v3407 = vunpack.c.l.b16 %v1174
        %v3408 = vunpack.c.h.b16 %v1174
        %v3409 = vunpack.c.l.b16 %v1175
        %v3410 = vunpack.c.h.b16 %v1175
        %v3411 = vunpack.c.l.b16 %v1176
        %v3412 = vunpack.c.h.b16 %v1176
        %v3413 = vunpack.c.l.b16 %v1177
        %v3414 = vunpack.c.h.b16 %v1177
        %v3415 = vunpack.c.l.b16 %v1178
        %v3416 = vunpack.c.h.b16 %v1178
        %v3417 = vunpack.c.l.b16 %v1179
        %v3418 = vunpack.c.h.b16 %v1179
        %v3419 = vunpack.c.l.b16 %v1180
        %v3420 = vunpack.c.h.b16 %v1180
        %v3421 = vunpack.c.l.b16 %v1181
        %v3422 = vunpack.c.h.b16 %v1181
        %v3423 = vunpack.c.l.b16 %v1182
        %v3424 = vunpack.c.h.b16 %v1182
        %v3425 = vunpack.c.l.b16 %v1183
        %v3426 = vunpack.c.h.b16 %v1183
        %v3427 = vunpack.c.l.b16 %v1184
        %v3428 = vunpack.c.h.b16 %v1184
        %v3429 = vunpack.c.l.b16 %v1185
        %v3430 = vunpack.c.h.b16 %v1185
        %v3431 = vunpack.c.l.b16 %v1186
        %v3432 = vunpack.c.h.b16 %v1186
        %v3433 = vunpack.c.l.b16 %v1187
        %v3434 = vunpack.c.h.b16 %v1187
        %v3435 = vunpack.c.l.b16 %v1188
        %v3436 = vunpack.c.h.b16 %v1188
        %v3437 = vunpack.c.l.b16 %v1189
        %v3438 = vunpack.c.h.b16 %v1189
        %v3439 = vunpack.c.l.b16 %v1190
        %v3440 = vunpack.c.h.b16 %v1190
        %v3441 = vunpack.c.l.b16 %v1191
        %v3442 = vunpack.c.h.b16 %v1191
        %v3443 = vunpack.c.l.b16 %v1192
        %v3444 = vunpack.c.h.b16 %v1192
        %v3445 = vunpack.c.l.b16 %v1193
        %v3446 = vunpack.c.h.b16 %v1193
        %v3447 = vunpack.c.l.b16 %v1194
        %v3448 = vunpack.c.h.b16 %v1194
        %v3449 = vunpack.c.l.b16 %v1195
        %v3450 = vunpack.c.h.b16 %v1195
        %v3451 = vunpack.c.l.b16 %v1196
        %v3452 = vunpack.c.h.b16 %v1196
        %v3453 = vunpack.c.l.b16 %v1197
        %v3454 = vunpack.c.h.b16 %v1197
        %v3455 = vunpack.c.l.b16 %v1198
        %v3456 = vunpack.c.h.b16 %v1198
        %v3457 = vunpack.c.l.b16 %v1199
        %v3458 = vunpack.c.h.b16 %v1199
        %v3459 = vunpack.c.l.b16 %v1200
        %v3460 = vunpack.c.h.b16 %v1200
        %v3461 = vunpack.c.l.b16 %v1201
        %v3462 = vunpack.c.h.b16 %v1201
        %v3463 = vunpack.c.l.b16 %v1202
        %v3464 = vunpack.c.h.b16 %v1202
        %v3465 = vunpack.c.l.b16 %v1203
        %v3466 = vunpack.c.h.b16 %v1203
        %v3467 = vunpack.c.l.b16 %v1204
        %v3468 = vunpack.c.h.b16 %v1204
        %v3469 = vunpack.c.l.b16 %v1205
        %v3470 = vunpack.c.h.b16 %v1205
        %v3471 = vunpack.c.l.b16 %v1206
        %v3472 = vunpack.c.h.b16 %v1206
        %v3473 = vunpack.c.l.b16 %v1207
        %v3474 = vunpack.c.h.b16 %v1207
        %v3475 = vunpack.c.l.b16 %v1208
        %v3476 = vunpack.c.h.b16 %v1208
        %v3477 = vunpack.c.l.b16 %v1209
        %v3478 = vunpack.c.h.b16 %v1209
        %v3479 = vunpack.c.l.b16 %v1210
        %v3480 = vunpack.c.h.b16 %v1210
        %v3481 = vunpack.c.l.b16 %v1211
        %v3482 = vunpack.c.h.b16 %v1211
        %v3483 = vunpack.c.l.b16 %v1212
        %v3484 = vunpack.c.h.b16 %v1212
        %v3485 = vunpack.c.l.b16 %v1213
        %v3486 = vunpack.c.h.b16 %v1213
        %v3487 = vunpack.c.l.b16 %v1214
        %v3488 = vunpack.c.h.b16 %v1214
        %v3489 = vunpack.c.l.b16 %v1215
        %v3490 = vunpack.c.h.b16 %v1215
        %v3491 = vunpack.c.l.b16 %v1216
        %v3492 = vunpack.c.h.b16 %v1216
        %v3493 = vunpack.c.l.b16 %v1217
        %v3494 = vunpack.c.h.b16 %v1217
        %v3495 = vunpack.c.l.b16 %v1218
        %v3496 = vunpack.c.h.b16 %v1218
        %v3497 = vunpack.c.l.b16 %v1219
        %v3498 = vunpack.c.h.b16 %v1219
        %v3499 = vunpack.c.l.b16 %v1220
        %v3500 = vunpack.c.h.b16 %v1220
        %v3501 = vunpack.c.l.b16 %v1221
        %v3502 = vunpack.c.h.b16 %v1221
        %v3503 = vunpack.c.l.b16 %v1222
        %v3504 = vunpack.c.h.b16 %v1222
        %v3505 = vunpack.c.l.b16 %v1223
        %v3506 = vunpack.c.h.b16 %v1223
        %v3507 = vunpack.c.l.b16 %v1224
        %v3508 = vunpack.c.h.b16 %v1224
        %v3509 = vunpack.c.l.b16 %v1225
        %v3510 = vunpack.c.h.b16 %v1225
        %v3511 = vunpack.c.l.b16 %v1226
        %v3512 = vunpack.c.h.b16 %v1226
        %v3513 = vunpack.c.l.b16 %v1227
        %v3514 = vunpack.c.h.b16 %v1227
        %v3515 = vunpack.c.l.b16 %v1228
        %v3516 = vunpack.c.h.b16 %v1228
        %v3517 = vunpack.c.l.b16 %v1229
        %v3518 = vunpack.c.h.b16 %v1229
        %v3519 = vunpack.c.l.b16 %v1230
        %v3520 = vunpack.c.h.b16 %v1230
        %v3521 = vunpack.c.l.b16 %v1231
        %v3522 = vunpack.c.h.b16 %v1231
        %v3523 = vunpack.c.l.b16 %v1232
        %v3524 = vunpack.c.h.b16 %v1232
        %v3525 = vunpack.c.l.b16 %v1233
        %v3526 = vunpack.c.h.b16 %v1233
        %v3527 = vunpack.c.l.b16 %v1234
        %v3528 = vunpack.c.h.b16 %v1234
        %v3529 = vunpack.c.l.b16 %v1235
        %v3530 = vunpack.c.h.b16 %v1235
        %v3531 = vunpack.c.l.b16 %v1236
        %v3532 = vunpack.c.h.b16 %v1236
        %v3533 = vunpack.c.l.b16 %v1237
        %v3534 = vunpack.c.h.b16 %v1237
        %v3535 = vunpack.c.l.b16 %v1238
        %v3536 = vunpack.c.h.b16 %v1238
        %v3537 = vunpack.c.l.b16 %v1239
        %v3538 = vunpack.c.h.b16 %v1239
        %v3539 = vunpack.c.l.b16 %v1240
        %v3540 = vunpack.c.h.b16 %v1240
        %v3541 = vunpack.c.l.b16 %v1241
        %v3542 = vunpack.c.h.b16 %v1241
        %v3543 = vunpack.c.l.b16 %v1242
        %v3544 = vunpack.c.h.b16 %v1242
        %v3545 = vunpack.c.l.b16 %v1243
        %v3546 = vunpack.c.h.b16 %v1243
        %v3547 = vunpack.c.l.b16 %v1244
        %v3548 = vunpack.c.h.b16 %v1244
        %v3549 = vunpack.c.l.b16 %v1245
        %v3550 = vunpack.c.h.b16 %v1245
        %v3551 = vunpack.c.l.b16 %v1246
        %v3552 = vunpack.c.h.b16 %v1246
        %v3553 = vunpack.c.l.b16 %v1247
        %v3554 = vunpack.c.h.b16 %v1247
        %v3555 = vunpack.c.l.b16 %v1248
        %v3556 = vunpack.c.h.b16 %v1248
        %v3557 = vunpack.c.l.b16 %v1249
        %v3558 = vunpack.c.h.b16 %v1249
        %v3559 = vunpack.c.l.b16 %v1250
        %v3560 = vunpack.c.h.b16 %v1250
        %v3561 = vunpack.c.l.b16 %v1251
        %v3562 = vunpack.c.h.b16 %v1251
        %v3563 = vunpack.c.l.b16 %v1252
        %v3564 = vunpack.c.h.b16 %v1252
        %v3565 = vunpack.c.l.b16 %v1253
        %v3566 = vunpack.c.h.b16 %v1253
        %v3567 = vunpack.c.l.b16 %v1254
        %v3568 = vunpack.c.h.b16 %v1254
        %v3569 = vunpack.c.l.b16 %v1255
        %v3570 = vunpack.c.h.b16 %v1255
        %v3571 = vunpack.c.l.b16 %v1256
        %v3572 = vunpack.c.h.b16 %v1256
        %v3573 = vunpack.c.l.b16 %v1257
        %v3574 = vunpack.c.h.b16 %v1257
        %v3575 = vunpack.c.l.b16 %v1258
        %v3576 = vunpack.c.h.b16 %v1258
        %v3577 = vunpack.c.l.b16 %v1259
        %v3578 = vunpack.c.h.b16 %v1259
        %v3579 = vunpack.c.l.b16 %v1260
        %v3580 = vunpack.c.h.b16 %v1260
        %v3581 = vunpack.c.l.b16 %v1261
        %v3582 = vunpack.c.h.b16 %v1261
        %v3583 = vunpack.c.l.b16 %v1262
        %v3584 = vunpack.c.h.b16 %v1262
        %v3585 = vunpack.c.l.b16 %v1263
        %v3586 = vunpack.c.h.b16 %v1263
        %v3587 = vunpack.c.l.b16 %v1264
        %v3588 = vunpack.c.h.b16 %v1264
        %v3589 = vunpack.c.l.b16 %v1265
        %v3590 = vunpack.c.h.b16 %v1265
        %v3591 = vunpack.c.l.b16 %v1266
        %v3592 = vunpack.c.h.b16 %v1266
        %v3593 = vunpack.c.l.b16 %v1267
        %v3594 = vunpack.c.h.b16 %v1267
        %v3595 = vunpack.c.l.b16 %v1268
        %v3596 = vunpack.c.h.b16 %v1268
        %v3597 = vunpack.c.l.b16 %v1269
        %v3598 = vunpack.c.h.b16 %v1269
        %v3599 = vunpack.c.l.b16 %v1270
        %v3600 = vunpack.c.h.b16 %v1270
        %v3601 = vunpack.c.l.b16 %v1271
        %v3602 = vunpack.c.h.b16 %v1271
        %v3603 = vunpack.c.l.b16 %v1272
        %v3604 = vunpack.c.h.b16 %v1272
        %v3605 = vunpack.c.l.b16 %v1273
        %v3606 = vunpack.c.h.b16 %v1273
        %v3607 = vunpack.c.l.b16 %v1274
        %v3608 = vunpack.c.h.b16 %v1274
        %v3609 = vunpack.c.l.b16 %v1275
        %v3610 = vunpack.c.h.b16 %v1275
        %v3611 = vunpack.c.l.b16 %v1276
        %v3612 = vunpack.c.h.b16 %v1276
        %v3613 = vunpack.c.l.b16 %v1277
        %v3614 = vunpack.c.h.b16 %v1277
        %v3615 = vunpack.c.l.b16 %v1278
        %v3616 = vunpack.c.h.b16 %v1278
        %v3617 = vunpack.c.l.b16 %v1279
        %v3618 = vunpack.c.h.b16 %v1279
        %v3619 = vunpack.c.l.b16 %v1280
        %v3620 = vunpack.c.h.b16 %v1280
        %v3621 = vunpack.c.l.b16 %v1281
        %v3622 = vunpack.c.h.b16 %v1281
        %v3623 = vunpack.c.l.b16 %v1282
        %v3624 = vunpack.c.h.b16 %v1282
        %v3625 = vunpack.c.l.b16 %v1283
        %v3626 = vunpack.c.h.b16 %v1283
        %v3627 = vunpack.c.l.b16 %v1284
        %v3628 = vunpack.c.h.b16 %v1284
        %v3629 = vunpack.c.l.b16 %v1285
        %v3630 = vunpack.c.h.b16 %v1285
        %v3631 = vunpack.c.l.b16 %v1286
        %v3632 = vunpack.c.h.b16 %v1286
        %v3633 = vpack.c.b16 %v2105, %v2097
        %v3634 = vpack.c.b16 %v2106, %v2098
        %v3635 = vpack.c.b16 %v2107, %v2099
        %v3636 = vpack.c.b16 %v2108, %v2100
        %v3637 = vpack.c.b16 %v2109, %v2101
        %v3638 = vpack.c.b16 %v2110, %v2102
        %v3639 = vpack.c.b16 %v2111, %v2103
        %v3640 = vpack.c.b16 %v2112, %v2104
        %v3641 = vpack.c.b16 %v2121, %v2113
        %v3642 = vpack.c.b16 %v2122, %v2114
        %v3643 = vpack.c.b16 %v2123, %v2115
        %v3644 = vpack.c.b16 %v2124, %v2116
        %v3645 = vpack.c.b16 %v2125, %v2117
        %v3646 = vpack.c.b16 %v2126, %v2118
        %v3647 = vpack.c.b16 %v2127, %v2119
        %v3648 = vpack.c.b16 %v2128, %v2120
        %v3649 = vpack.c.b16 %v2137, %v2129
        %v3650 = vpack.c.b16 %v2138, %v2130
        %v3651 = vpack.c.b16 %v2139, %v2131
        %v3652 = vpack.c.b16 %v2140, %v2132
        %v3653 = vpack.c.b16 %v2141, %v2133
        %v3654 = vpack.c.b16 %v2142, %v2134
        %v3655 = vpack.c.b16 %v2143, %v2135
        %v3656 = vpack.c.b16 %v2144, %v2136
        %v3657 = vpack.c.b16 %v2153, %v2145
        %v3658 = vpack.c.b16 %v2154, %v2146
        %v3659 = vpack.c.b16 %v2155, %v2147
        %v3660 = vpack.c.b16 %v2156, %v2148
        %v3661 = vpack.c.b16 %v2157, %v2149
        %v3662 = vpack.c.b16 %v2158, %v2150
        %v3663 = vpack.c.b16 %v2159, %v2151
        %v3664 = vpack.c.b16 %v2160, %v2152
        %v3665 = vpack.c.b16 %v2169, %v2161
        %v3666 = vpack.c.b16 %v2170, %v2162
        %v3667 = vpack.c.b16 %v2171, %v2163
        %v3668 = vpack.c.b16 %v2172, %v2164
        %v3669 = vpack.c.b16 %v2173, %v2165
        %v3670 = vpack.c.b16 %v2174, %v2166
        %v3671 = vpack.c.b16 %v2175, %v2167
        %v3672 = vpack.c.b16 %v2176, %v2168
        %v3673 = vpack.c.b16 %v2185, %v2177
        %v3674 = vpack.c.b16 %v2186, %v2178
        %v3675 = vpack.c.b16 %v2187, %v2179
        %v3676 = vpack.c.b16 %v2188, %v2180
        %v3677 = vpack.c.b16 %v2189, %v2181
        %v3678 = vpack.c.b16 %v2190, %v2182
        %v3679 = vpack.c.b16 %v2191, %v2183
        %v3680 = vpack.c.b16 %v2192, %v2184
        %v3681 = vpack.c.b16 %v2201, %v2193
        %v3682 = vpack.c.b16 %v2202, %v2194
        %v3683 = vpack.c.b16 %v2203, %v2195
        %v3684 = vpack.c.b16 %v2204, %v2196
        %v3685 = vpack.c.b16 %v2205, %v2197
        %v3686 = vpack.c.b16 %v2206, %v2198
        %v3687 = vpack.c.b16 %v2207, %v2199
        %v3688 = vpack.c.b16 %v2208, %v2200
        %v3689 = vpack.c.b16 %v2217, %v2209
        %v3690 = vpack.c.b16 %v2218, %v2210
        %v3691 = vpack.c.b16 %v2219, %v2211
        %v3692 = vpack.c.b16 %v2220, %v2212
        %v3693 = vpack.c.b16 %v2221, %v2213
        %v3694 = vpack.c.b16 %v2222, %v2214
        %v3695 = vpack.c.b16 %v2223, %v2215
        %v3696 = vpack.c.b16 %v2224, %v2216
        %v3697 = vpack.c.b16 %v2233, %v2225
        %v3698 = vpack.c.b16 %v2234, %v2226
        %v3699 = vpack.c.b16 %v2235, %v2227
        %v3700 = vpack.c.b16 %v2236, %v2228
        %v3701 = vpack.c.b16 %v2237, %v2229
        %v3702 = vpack.c.b16 %v2238, %v2230
        %v3703 = vpack.c.b16 %v2239, %v2231
        %v3704 = vpack.c.b16 %v2240, %v2232
        %v3705 = vpack.c.b16 %v2249, %v2241
        %v3706 = vpack.c.b16 %v2250, %v2242
        %v3707 = vpack.c.b16 %v2251, %v2243
        %v3708 = vpack.c.b16 %v2252, %v2244
        %v3709 = vpack.c.b16 %v2253, %v2245
        %v3710 = vpack.c.b16 %v2254, %v2246
        %v3711 = vpack.c.b16 %v2255, %v2247
        %v3712 = vpack.c.b16 %v2256, %v2248
        %v3713 = vpack.c.b16 %v2265, %v2257
        %v3714 = vpack.c.b16 %v2266, %v2258
        %v3715 = vpack.c.b16 %v2267, %v2259
        %v3716 = vpack.c.b16 %v2268, %v2260
        %v3717 = vpack.c.b16 %v2269, %v2261
        %v3718 = vpack.c.b16 %v2270, %v2262
        %v3719 = vpack.c.b16 %v2271, %v2263
        %v3720 = vpack.c.b16 %v2272, %v2264
        %v3721 = vpack.c.b16 %v2281, %v2273
        %v3722 = vpack.c.b16 %v2282, %v2274
        %v3723 = vpack.c.b16 %v2283, %v2275
        %v3724 = vpack.c.b16 %v2284, %v2276
        %v3725 = vpack.c.b16 %v2285, %v2277
        %v3726 = vpack.c.b16 %v2286, %v2278
        %v3727 = vpack.c.b16 %v2287, %v2279
        %v3728 = vpack.c.b16 %v2288, %v2280
        %v3729 = vpack.c.b16 %v2297, %v2289
        %v3730 = vpack.c.b16 %v2298, %v2290
        %v3731 = vpack.c.b16 %v2299, %v2291
        %v3732 = vpack.c.b16 %v2300, %v2292
        %v3733 = vpack.c.b16 %v2301, %v2293
        %v3734 = vpack.c.b16 %v2302, %v2294
        %v3735 = vpack.c.b16 %v2303, %v2295
        %v3736 = vpack.c.b16 %v2304, %v2296
        %v3737 = vpack.c.b16 %v2313, %v2305
        %v3738 = vpack.c.b16 %v2314, %v2306
        %v3739 = vpack.c.b16 %v2315, %v2307
        %v3740 = vpack.c.b16 %v2316, %v2308
        %v3741 = vpack.c.b16 %v2317, %v2309
        %v3742 = vpack.c.b16 %v2318, %v2310
        %v3743 = vpack.c.b16 %v2319, %v2311
        %v3744 = vpack.c.b16 %v2320, %v2312
        %v3745 = vpack.c.b16 %v2329, %v2321
        %v3746 = vpack.c.b16 %v2330, %v2322
        %v3747 = vpack.c.b16 %v2331, %v2323
        %v3748 = vpack.c.b16 %v2332, %v2324
        %v3749 = vpack.c.b16 %v2333, %v2325
        %v3750 = vpack.c.b16 %v2334, %v2326
        %v3751 = vpack.c.b16 %v2335, %v2327
        %v3752 = vpack.c.b16 %v2336, %v2328
        %v3753 = vpack.c.b16 %v2345, %v2337
        %v3754 = vpack.c.b16 %v2346, %v2338
        %v3755 = vpack.c.b16 %v2347, %v2339
        %v3756 = vpack.c.b16 %v2348, %v2340
        %v3757 = vpack.c.b16 %v2349, %v2341
        %v3758 = vpack.c.b16 %v2350, %v2342
        %v3759 = vpack.c.b16 %v2351, %v2343
        %v3760 = vpack.c.b16 %v2352, %v2344
        %v3761 = vpack.c.b16 %v2361, %v2353
        %v3762 = vpack.c.b16 %v2362, %v2354
        %v3763 = vpack.c.b16 %v2363, %v2355
        %v3764 = vpack.c.b16 %v2364, %v2356
        %v3765 = vpack.c.b16 %v2365, %v2357
        %v3766 = vpack.c.b16 %v2366, %v2358
        %v3767 = vpack.c.b16 %v2367, %v2359
        %v3768 = vpack.c.b16 %v2368, %v2360
        %v3769 = vpack.c.b16 %v2377, %v2369
        %v3770 = vpack.c.b16 %v2378, %v2370
        %v3771 = vpack.c.b16 %v2379, %v2371
        %v3772 = vpack.c.b16 %v2380, %v2372
        %v3773 = vpack.c.b16 %v2381, %v2373
        %v3774 = vpack.c.b16 %v2382, %v2374
        %v3775 = vpack.c.b16 %v2383, %v2375
        %v3776 = vpack.c.b16 %v2384, %v2376
        %v3777 = vpack.c.b16 %v2393, %v2385
        %v3778 = vpack.c.b16 %v2394, %v2386
        %v3779 = vpack.c.b16 %v2395, %v2387
        %v3780 = vpack.c.b16 %v2396, %v2388
        %v3781 = vpack.c.b16 %v2397, %v2389
        %v3782 = vpack.c.b16 %v2398, %v2390
        %v3783 = vpack.c.b16 %v2399, %v2391
        %v3784 = vpack.c.b16 %v2400, %v2392
        %v3785 = vpack.c.b16 %v2409, %v2401
        %v3786 = vpack.c.b16 %v2410, %v2402
        %v3787 = vpack.c.b16 %v2411, %v2403
        %v3788 = vpack.c.b16 %v2412, %v2404
        %v3789 = vpack.c.b16 %v2413, %v2405
        %v3790 = vpack.c.b16 %v2414, %v2406
        %v3791 = vpack.c.b16 %v2415, %v2407
        %v3792 = vpack.c.b16 %v2416, %v2408
        %v3793 = vpack.c.b16 %v2425, %v2417
        %v3794 = vpack.c.b16 %v2426, %v2418
        %v3795 = vpack.c.b16 %v2427, %v2419
        %v3796 = vpack.c.b16 %v2428, %v2420
        %v3797 = vpack.c.b16 %v2429, %v2421
        %v3798 = vpack.c.b16 %v2430, %v2422
        %v3799 = vpack.c.b16 %v2431, %v2423
        %v3800 = vpack.c.b16 %v2432, %v2424
        %v3801 = vpack.c.b16 %v2441, %v2433
        %v3802 = vpack.c.b16 %v2442, %v2434
        %v3803 = vpack.c.b16 %v2443, %v2435
        %v3804 = vpack.c.b16 %v2444, %v2436
        %v3805 = vpack.c.b16 %v2445, %v2437
        %v3806 = vpack.c.b16 %v2446, %v2438
        %v3807 = vpack.c.b16 %v2447, %v2439
        %v3808 = vpack.c.b16 %v2448, %v2440
        %v3809 = vpack.c.b16 %v2457, %v2449
        %v3810 = vpack.c.b16 %v2458, %v2450
        %v3811 = vpack.c.b16 %v2459, %v2451
        %v3812 = vpack.c.b16 %v2460, %v2452
        %v3813 = vpack.c.b16 %v2461, %v2453
        %v3814 = vpack.c.b16 %v2462, %v2454
        %v3815 = vpack.c.b16 %v2463, %v2455
        %v3816 = vpack.c.b16 %v2464, %v2456
        %v3817 = vpack.c.b16 %v2473, %v2465
        %v3818 = vpack.c.b16 %v2474, %v2466
        %v3819 = vpack.c.b16 %v2475, %v2467
        %v3820 = vpack.c.b16 %v2476, %v2468
        %v3821 = vpack.c.b16 %v2477, %v2469
        %v3822 = vpack.c.b16 %v2478, %v2470
        %v3823 = vpack.c.b16 %v2479, %v2471
        %v3824 = vpack.c.b16 %v2480, %v2472
        %v3825 = vpack.c.b16 %v2489, %v2481
        %v3826 = vpack.c.b16 %v2490, %v2482
        %v3827 = vpack.c.b16 %v2491, %v2483
        %v3828 = vpack.c.b16 %v2492, %v2484
        %v3829 = vpack.c.b16 %v2493, %v2485
        %v3830 = vpack.c.b16 %v2494, %v2486
        %v3831 = vpack.c.b16 %v2495, %v2487
        %v3832 = vpack.c.b16 %v2496, %v2488
        %v3833 = vpack.c.b16 %v2505, %v2497
        %v3834 = vpack.c.b16 %v2506, %v2498
        %v3835 = vpack.c.b16 %v2507, %v2499
        %v3836 = vpack.c.b16 %v2508, %v2500
        %v3837 = vpack.c.b16 %v2509, %v2501
        %v3838 = vpack.c.b16 %v2510, %v2502
        %v3839 = vpack.c.b16 %v2511, %v2503
        %v3840 = vpack.c.b16 %v2512, %v2504
        %v3841 = vpack.c.b16 %v2521, %v2513
        %v3842 = vpack.c.b16 %v2522, %v2514
        %v3843 = vpack.c.b16 %v2523, %v2515
        %v3844 = vpack.c.b16 %v2524, %v2516
        %v3845 = vpack.c.b16 %v2525, %v2517
        %v3846 = vpack.c.b16 %v2526, %v2518
        %v3847 = vpack.c.b16 %v2527, %v2519
        %v3848 = vpack.c.b16 %v2528, %v2520
        %v3849 = vpack.c.b16 %v2537, %v2529
        %v3850 = vpack.c.b16 %v2538, %v2530
        %v3851 = vpack.c.b16 %v2539, %v2531
        %v3852 = vpack.c.b16 %v2540, %v2532
        %v3853 = vpack.c.b16 %v2541, %v2533
        %v3854 = vpack.c.b16 %v2542, %v2534
        %v3855 = vpack.c.b16 %v2543, %v2535
        %v3856 = vpack.c.b16 %v2544, %v2536
        %v3857 = vpack.c.b16 %v2553, %v2545
        %v3858 = vpack.c.b16 %v2554, %v2546
        %v3859 = vpack.c.b16 %v2555, %v2547
        %v3860 = vpack.c.b16 %v2556, %v2548
        %v3861 = vpack.c.b16 %v2557, %v2549
        %v3862 = vpack.c.b16 %v2558, %v2550
        %v3863 = vpack.c.b16 %v2559, %v2551
        %v3864 = vpack.c.b16 %v2560, %v2552
        %v3865 = vpack.c.b16 %v2569, %v2561
        %v3866 = vpack.c.b16 %v2570, %v2562
        %v3867 = vpack.c.b16 %v2571, %v2563
        %v3868 = vpack.c.b16 %v2572, %v2564
        %v3869 = vpack.c.b16 %v2573, %v2565
        %v3870 = vpack.c.b16 %v2574, %v2566
        %v3871 = vpack.c.b16 %v2575, %v2567
        %v3872 = vpack.c.b16 %v2576, %v2568
        %v3873 = vpack.c.b16 %v2585, %v2577
        %v3874 = vpack.c.b16 %v2586, %v2578
        %v3875 = vpack.c.b16 %v2587, %v2579
        %v3876 = vpack.c.b16 %v2588, %v2580
        %v3877 = vpack.c.b16 %v2589, %v2581
        %v3878 = vpack.c.b16 %v2590, %v2582
        %v3879 = vpack.c.b16 %v2591, %v2583
        %v3880 = vpack.c.b16 %v2592, %v2584
        %v3881 = vpack.c.b16 %v2601, %v2593
        %v3882 = vpack.c.b16 %v2602, %v2594
        %v3883 = vpack.c.b16 %v2603, %v2595
        %v3884 = vpack.c.b16 %v2604, %v2596
        %v3885 = vpack.c.b16 %v2605, %v2597
        %v3886 = vpack.c.b16 %v2606, %v2598
        %v3887 = vpack.c.b16 %v2607, %v2599
        %v3888 = vpack.c.b16 %v2608, %v2600
        %v3889 = vpack.c.b16 %v2617, %v2609
        %v3890 = vpack.c.b16 %v2618, %v2610
        %v3891 = vpack.c.b16 %v2619, %v2611
        %v3892 = vpack.c.b16 %v2620, %v2612
        %v3893 = vpack.c.b16 %v2621, %v2613
        %v3894 = vpack.c.b16 %v2622, %v2614
        %v3895 = vpack.c.b16 %v2623, %v2615
        %v3896 = vpack.c.b16 %v2624, %v2616
        %v3897 = vpack.c.b16 %v2633, %v2625
        %v3898 = vpack.c.b16 %v2634, %v2626
        %v3899 = vpack.c.b16 %v2635, %v2627
        %v3900 = vpack.c.b16 %v2636, %v2628
        %v3901 = vpack.c.b16 %v2637, %v2629
        %v3902 = vpack.c.b16 %v2638, %v2630
        %v3903 = vpack.c.b16 %v2639, %v2631
        %v3904 = vpack.c.b16 %v2640, %v2632
        %v3905 = vpack.c.b16 %v2649, %v2641
        %v3906 = vpack.c.b16 %v2650, %v2642
        %v3907 = vpack.c.b16 %v2651, %v2643
        %v3908 = vpack.c.b16 %v2652, %v2644
        %v3909 = vpack.c.b16 %v2653, %v2645
        %v3910 = vpack.c.b16 %v2654, %v2646
        %v3911 = vpack.c.b16 %v2655, %v2647
        %v3912 = vpack.c.b16 %v2656, %v2648
        %v3913 = vpack.c.b16 %v2665, %v2657
        %v3914 = vpack.c.b16 %v2666, %v2658
        %v3915 = vpack.c.b16 %v2667, %v2659
        %v3916 = vpack.c.b16 %v2668, %v2660
        %v3917 = vpack.c.b16 %v2669, %v2661
        %v3918 = vpack.c.b16 %v2670, %v2662
        %v3919 = vpack.c.b16 %v2671, %v2663
        %v3920 = vpack.c.b16 %v2672, %v2664
        %v3921 = vpack.c.b16 %v2681, %v2673
        %v3922 = vpack.c.b16 %v2682, %v2674
        %v3923 = vpack.c.b16 %v2683, %v2675
        %v3924 = vpack.c.b16 %v2684, %v2676
        %v3925 = vpack.c.b16 %v2685, %v2677
        %v3926 = vpack.c.b16 %v2686, %v2678
        %v3927 = vpack.c.b16 %v2687, %v2679
        %v3928 = vpack.c.b16 %v2688, %v2680
        %v3929 = vpack.c.b16 %v2697, %v2689
        %v3930 = vpack.c.b16 %v2698, %v2690
        %v3931 = vpack.c.b16 %v2699, %v2691
        %v3932 = vpack.c.b16 %v2700, %v2692
        %v3933 = vpack.c.b16 %v2701, %v2693
        %v3934 = vpack.c.b16 %v2702, %v2694
        %v3935 = vpack.c.b16 %v2703, %v2695
        %v3936 = vpack.c.b16 %v2704, %v2696
        %v3937 = vpack.c.b16 %v2713, %v2705
        %v3938 = vpack.c.b16 %v2714, %v2706
        %v3939 = vpack.c.b16 %v2715, %v2707
        %v3940 = vpack.c.b16 %v2716, %v2708
        %v3941 = vpack.c.b16 %v2717, %v2709
        %v3942 = vpack.c.b16 %v2718, %v2710
        %v3943 = vpack.c.b16 %v2719, %v2711
        %v3944 = vpack.c.b16 %v2720, %v2712
        %v3945 = vpack.c.b16 %v2729, %v2721
        %v3946 = vpack.c.b16 %v2730, %v2722
        %v3947 = vpack.c.b16 %v2731, %v2723
        %v3948 = vpack.c.b16 %v2732, %v2724
        %v3949 = vpack.c.b16 %v2733, %v2725
        %v3950 = vpack.c.b16 %v2734, %v2726
        %v3951 = vpack.c.b16 %v2735, %v2727
        %v3952 = vpack.c.b16 %v2736, %v2728
        %v3953 = vpack.c.b16 %v2745, %v2737
        %v3954 = vpack.c.b16 %v2746, %v2738
        %v3955 = vpack.c.b16 %v2747, %v2739
        %v3956 = vpack.c.b16 %v2748, %v2740
        %v3957 = vpack.c.b16 %v2749, %v2741
        %v3958 = vpack.c.b16 %v2750, %v2742
        %v3959 = vpack.c.b16 %v2751, %v2743
        %v3960 = vpack.c.b16 %v2752, %v2744
        %v3961 = vpack.c.b16 %v2761, %v2753
        %v3962 = vpack.c.b16 %v2762, %v2754
        %v3963 = vpack.c.b16 %v2763, %v2755
        %v3964 = vpack.c.b16 %v2764, %v2756
        %v3965 = vpack.c.b16 %v2765, %v2757
        %v3966 = vpack.c.b16 %v2766, %v2758
        %v3967 = vpack.c.b16 %v2767, %v2759
        %v3968 = vpack.c.b16 %v2768, %v2760
        %v3969 = vpack.c.b16 %v2777, %v2769
        %v3970 = vpack.c.b16 %v2778, %v2770
        %v3971 = vpack.c.b16 %v2779, %v2771
        %v3972 = vpack.c.b16 %v2780, %v2772
        %v3973 = vpack.c.b16 %v2781, %v2773
        %v3974 = vpack.c.b16 %v2782, %v2774
        %v3975 = vpack.c.b16 %v2783, %v2775
        %v3976 = vpack.c.b16 %v2784, %v2776
        %v3977 = vpack.c.b16 %v2793, %v2785
        %v3978 = vpack.c.b16 %v2794, %v2786
        %v3979 = vpack.c.b16 %v2795, %v2787
        %v3980 = vpack.c.b16 %v2796, %v2788
        %v3981 = vpack.c.b16 %v2797, %v2789
        %v3982 = vpack.c.b16 %v2798, %v2790
        %v3983 = vpack.c.b16 %v2799, %v2791
        %v3984 = vpack.c.b16 %v2800, %v2792
        %v3985 = vpack.c.b16 %v2809, %v2801
        %v3986 = vpack.c.b16 %v2810, %v2802
        %v3987 = vpack.c.b16 %v2811, %v2803
        %v3988 = vpack.c.b16 %v2812, %v2804
        %v3989 = vpack.c.b16 %v2813, %v2805
        %v3990 = vpack.c.b16 %v2814, %v2806
        %v3991 = vpack.c.b16 %v2815, %v2807
        %v3992 = vpack.c.b16 %v2816, %v2808
        %v3993 = vpack.c.b16 %v2825, %v2817
        %v3994 = vpack.c.b16 %v2826, %v2818
        %v3995 = vpack.c.b16 %v2827, %v2819
        %v3996 = vpack.c.b16 %v2828, %v2820
        %v3997 = vpack.c.b16 %v2829, %v2821
        %v3998 = vpack.c.b16 %v2830, %v2822
        %v3999 = vpack.c.b16 %v2831, %v2823
        %v4000 = vpack.c.b16 %v2832, %v2824
        %v4001 = vpack.c.b16 %v2841, %v2833
        %v4002 = vpack.c.b16 %v2842, %v2834
        %v4003 = vpack.c.b16 %v2843, %v2835
        %v4004 = vpack.c.b16 %v2844, %v2836
        %v4005 = vpack.c.b16 %v2845, %v2837
        %v4006 = vpack.c.b16 %v2846, %v2838
        %v4007 = vpack.c.b16 %v2847, %v2839
        %v4008 = vpack.c.b16 %v2848, %v2840
        %v4009 = vpack.c.b16 %v2857, %v2849
        %v4010 = vpack.c.b16 %v2858, %v2850
        %v4011 = vpack.c.b16 %v2859, %v2851
        %v4012 = vpack.c.b16 %v2860, %v2852
        %v4013 = vpack.c.b16 %v2861, %v2853
        %v4014 = vpack.c.b16 %v2862, %v2854
        %v4015 = vpack.c.b16 %v2863, %v2855
        %v4016 = vpack.c.b16 %v2864, %v2856
        %v4017 = vpack.c.b16 %v2873, %v2865
        %v4018 = vpack.c.b16 %v2874, %v2866
        %v4019 = vpack.c.b16 %v2875, %v2867
        %v4020 = vpack.c.b16 %v2876, %v2868
        %v4021 = vpack.c.b16 %v2877, %v2869
        %v4022 = vpack.c.b16 %v2878, %v2870
        %v4023 = vpack.c.b16 %v2879, %v2871
        %v4024 = vpack.c.b16 %v2880, %v2872
        %v4025 = vpack.c.b16 %v2889, %v2881
        %v4026 = vpack.c.b16 %v2890, %v2882
        %v4027 = vpack.c.b16 %v2891, %v2883
        %v4028 = vpack.c.b16 %v2892, %v2884
        %v4029 = vpack.c.b16 %v2893, %v2885
        %v4030 = vpack.c.b16 %v2894, %v2886
        %v4031 = vpack.c.b16 %v2895, %v2887
        %v4032 = vpack.c.b16 %v2896, %v2888
        %v4033 = vpack.c.b16 %v2905, %v2897
        %v4034 = vpack.c.b16 %v2906, %v2898
        %v4035 = vpack.c.b16 %v2907, %v2899
        %v4036 = vpack.c.b16 %v2908, %v2900
        %v4037 = vpack.c.b16 %v2909, %v2901
        %v4038 = vpack.c.b16 %v2910, %v2902
        %v4039 = vpack.c.b16 %v2911, %v2903
        %v4040 = vpack.c.b16 %v2912, %v2904
        %v4041 = vpack.c.b16 %v2921, %v2913
        %v4042 = vpack.c.b16 %v2922, %v2914
        %v4043 = vpack.c.b16 %v2923, %v2915
        %v4044 = vpack.c.b16 %v2924, %v2916
        %v4045 = vpack.c.b16 %v2925, %v2917
        %v4046 = vpack.c.b16 %v2926, %v2918
        %v4047 = vpack.c.b16 %v2927, %v2919
        %v4048 = vpack.c.b16 %v2928, %v2920
        %v4049 = vpack.c.b16 %v2937, %v2929
        %v4050 = vpack.c.b16 %v2938, %v2930
        %v4051 = vpack.c.b16 %v2939, %v2931
        %v4052 = vpack.c.b16 %v2940, %v2932
        %v4053 = vpack.c.b16 %v2941, %v2933
        %v4054 = vpack.c.b16 %v2942, %v2934
        %v4055 = vpack.c.b16 %v2943, %v2935
        %v4056 = vpack.c.b16 %v2944, %v2936
        %v4057 = vpack.c.b16 %v2953, %v2945
        %v4058 = vpack.c.b16 %v2954, %v2946
        %v4059 = vpack.c.b16 %v2955, %v2947
        %v4060 = vpack.c.b16 %v2956, %v2948
        %v4061 = vpack.c.b16 %v2957, %v2949
        %v4062 = vpack.c.b16 %v2958, %v2950
        %v4063 = vpack.c.b16 %v2959, %v2951
        %v4064 = vpack.c.b16 %v2960, %v2952
        %v4065 = vpack.c.b16 %v2969, %v2961
        %v4066 = vpack.c.b16 %v2970, %v2962
        %v4067 = vpack.c.b16 %v2971, %v2963
        %v4068 = vpack.c.b16 %v2972, %v2964
        %v4069 = vpack.c.b16 %v2973, %v2965
        %v4070 = vpack.c.b16 %v2974, %v2966
        %v4071 = vpack.c.b16 %v2975, %v2967
        %v4072 = vpack.c.b16 %v2976, %v2968
        %v4073 = vpack.c.b16 %v2985, %v2977
        %v4074 = vpack.c.b16 %v2986, %v2978
        %v4075 = vpack.c.b16 %v2987, %v2979
        %v4076 = vpack.c.b16 %v2988, %v2980
        %v4077 = vpack.c.b16 %v2989, %v2981
        %v4078 = vpack.c.b16 %v2990, %v2982
        %v4079 = vpack.c.b16 %v2991, %v2983
        %v4080 = vpack.c.b16 %v2992, %v2984
        %v4081 = vpack.c.b16 %v3001, %v2993
        %v4082 = vpack.c.b16 %v3002, %v2994
        %v4083 = vpack.c.b16 %v3003, %v2995
        %v4084 = vpack.c.b16 %v3004, %v2996
        %v4085 = vpack.c.b16 %v3005, %v2997
        %v4086 = vpack.c.b16 %v3006, %v2998
        %v4087 = vpack.c.b16 %v3007, %v2999
        %v4088 = vpack.c.b16 %v3008, %v3000
        %v4089 = vpack.c.b16 %v3017, %v3009
        %v4090 = vpack.c.b16 %v3018, %v3010
        %v4091 = vpack.c.b16 %v3019, %v3011
        %v4092 = vpack.c.b16 %v3020, %v3012
        %v4093 = vpack.c.b16 %v3021, %v3013
        %v4094 = vpack.c.b16 %v3022, %v3014
        %v4095 = vpack.c.b16 %v3023, %v3015
        %v4096 = vpack.c.b16 %v3024, %v3016
        %v4097 = vpack.c.b16 %v3033, %v3025
        %v4098 = vpack.c.b16 %v3034, %v3026
        %v4099 = vpack.c.b16 %v3035, %v3027
        %v4100 = vpack.c.b16 %v3036, %v3028
        %v4101 = vpack.c.b16 %v3037, %v3029
        %v4102 = vpack.c.b16 %v3038, %v3030
        %v4103 = vpack.c.b16 %v3039, %v3031
        %v4104 = vpack.c.b16 %v3040, %v3032
        %v4105 = vpack.c.b16 %v3049, %v3041
        %v4106 = vpack.c.b16 %v3050, %v3042
        %v4107 = vpack.c.b16 %v3051, %v3043
        %v4108 = vpack.c.b16 %v3052, %v3044
        %v4109 = vpack.c.b16 %v3053, %v3045
        %v4110 = vpack.c.b16 %v3054, %v3046
        %v4111 = vpack.c.b16 %v3055, %v3047
        %v4112 = vpack.c.b16 %v3056, %v3048
        %v4113 = vpack.c.b16 %v3065, %v3057
        %v4114 = vpack.c.b16 %v3066, %v3058
        %v4115 = vpack.c.b16 %v3067, %v3059
        %v4116 = vpack.c.b16 %v3068, %v3060
        %v4117 = vpack.c.b16 %v3069, %v3061
        %v4118 = vpack.c.b16 %v3070, %v3062
        %v4119 = vpack.c.b16 %v3071, %v3063
        %v4120 = vpack.c.b16 %v3072, %v3064
        %v4121 = vpack.c.b16 %v3081, %v3073
        %v4122 = vpack.c.b16 %v3082, %v3074
        %v4123 = vpack.c.b16 %v3083, %v3075
        %v4124 = vpack.c.b16 %v3084, %v3076
        %v4125 = vpack.c.b16 %v3085, %v3077
        %v4126 = vpack.c.b16 %v3086, %v3078
        %v4127 = vpack.c.b16 %v3087, %v3079
        %v4128 = vpack.c.b16 %v3088, %v3080
        %v4129 = vpack.c.b16 %v3097, %v3089
        %v4130 = vpack.c.b16 %v3098, %v3090
        %v4131 = vpack.c.b16 %v3099, %v3091
        %v4132 = vpack.c.b16 %v3100, %v3092
        %v4133 = vpack.c.b16 %v3101, %v3093
        %v4134 = vpack.c.b16 %v3102, %v3094
        %v4135 = vpack.c.b16 %v3103, %v3095
        %v4136 = vpack.c.b16 %v3104, %v3096
        %v4137 = vpack.c.b16 %v3113, %v3105
        %v4138 = vpack.c.b16 %v3114, %v3106
        %v4139 = vpack.c.b16 %v3115, %v3107
        %v4140 = vpack.c.b16 %v3116, %v3108
        %v4141 = vpack.c.b16 %v3117, %v3109
        %v4142 = vpack.c.b16 %v3118, %v3110
        %v4143 = vpack.c.b16 %v3119, %v3111
        %v4144 = vpack.c.b16 %v3120, %v3112
        %v4145 = vpack.c.b16 %v3129, %v3121
        %v4146 = vpack.c.b16 %v3130, %v3122
        %v4147 = vpack.c.b16 %v3131, %v3123
        %v4148 = vpack.c.b16 %v3132, %v3124
        %v4149 = vpack.c.b16 %v3133, %v3125
        %v4150 = vpack.c.b16 %v3134, %v3126
        %v4151 = vpack.c.b16 %v3135, %v3127
        %v4152 = vpack.c.b16 %v3136, %v3128
        %v4153 = vpack.c.b16 %v3145, %v3137
        %v4154 = vpack.c.b16 %v3146, %v3138
        %v4155 = vpack.c.b16 %v3147, %v3139
        %v4156 = vpack.c.b16 %v3148, %v3140
        %v4157 = vpack.c.b16 %v3149, %v3141
        %v4158 = vpack.c.b16 %v3150, %v3142
        %v4159 = vpack.c.b16 %v3151, %v3143
        %v4160 = vpack.c.b16 %v3152, %v3144
        %v4161 = vpack.c.b16 %v3161, %v3153
        %v4162 = vpack.c.b16 %v3162, %v3154
        %v4163 = vpack.c.b16 %v3163, %v3155
        %v4164 = vpack.c.b16 %v3164, %v3156
        %v4165 = vpack.c.b16 %v3165, %v3157
        %v4166 = vpack.c.b16 %v3166, %v3158
        %v4167 = vpack.c.b16 %v3167, %v3159
        %v4168 = vpack.c.b16 %v3168, %v3160
        %v4169 = vpack.c.b16 %v3177, %v3169
        %v4170 = vpack.c.b16 %v3178, %v3170
        %v4171 = vpack.c.b16 %v3179, %v3171
        %v4172 = vpack.c.b16 %v3180, %v3172
        %v4173 = vpack.c.b16 %v3181, %v3173
        %v4174 = vpack.c.b16 %v3182, %v3174
        %v4175 = vpack.c.b16 %v3183, %v3175
        %v4176 = vpack.c.b16 %v3184, %v3176
        %v4177 = vpack.c.b16 %v3193, %v3185
        %v4178 = vpack.c.b16 %v3194, %v3186
        %v4179 = vpack.c.b16 %v3195, %v3187
        %v4180 = vpack.c.b16 %v3196, %v3188
        %v4181 = vpack.c.b16 %v3197, %v3189
        %v4182 = vpack.c.b16 %v3198, %v3190
        %v4183 = vpack.c.b16 %v3199, %v3191
        %v4184 = vpack.c.b16 %v3200, %v3192
        %v4185 = vpack.c.b16 %v3209, %v3201
        %v4186 = vpack.c.b16 %v3210, %v3202
        %v4187 = vpack.c.b16 %v3211, %v3203
        %v4188 = vpack.c.b16 %v3212, %v3204
        %v4189 = vpack.c.b16 %v3213, %v3205
        %v4190 = vpack.c.b16 %v3214, %v3206
        %v4191 = vpack.c.b16 %v3215, %v3207
        %v4192 = vpack.c.b16 %v3216, %v3208
        %v4193 = vpack.c.b16 %v3225, %v3217
        %v4194 = vpack.c.b16 %v3226, %v3218
        %v4195 = vpack.c.b16 %v3227, %v3219
        %v4196 = vpack.c.b16 %v3228, %v3220
        %v4197 = vpack.c.b16 %v3229, %v3221
        %v4198 = vpack.c.b16 %v3230, %v3222
        %v4199 = vpack.c.b16 %v3231, %v3223
        %v4200 = vpack.c.b16 %v3232, %v3224
        %v4201 = vpack.c.b16 %v3241, %v3233
        %v4202 = vpack.c.b16 %v3242, %v3234
        %v4203 = vpack.c.b16 %v3243, %v3235
        %v4204 = vpack.c.b16 %v3244, %v3236
        %v4205 = vpack.c.b16 %v3245, %v3237
        %v4206 = vpack.c.b16 %v3246, %v3238
        %v4207 = vpack.c.b16 %v3247, %v3239
        %v4208 = vpack.c.b16 %v3248, %v3240
        %v4209 = vpack.c.b16 %v3257, %v3249
        %v4210 = vpack.c.b16 %v3258, %v3250
        %v4211 = vpack.c.b16 %v3259, %v3251
        %v4212 = vpack.c.b16 %v3260, %v3252
        %v4213 = vpack.c.b16 %v3261, %v3253
        %v4214 = vpack.c.b16 %v3262, %v3254
        %v4215 = vpack.c.b16 %v3263, %v3255
        %v4216 = vpack.c.b16 %v3264, %v3256
        %v4217 = vpack.c.b16 %v3273, %v3265
        %v4218 = vpack.c.b16 %v3274, %v3266
        %v4219 = vpack.c.b16 %v3275, %v3267
        %v4220 = vpack.c.b16 %v3276, %v3268
        %v4221 = vpack.c.b16 %v3277, %v3269
        %v4222 = vpack.c.b16 %v3278, %v3270
        %v4223 = vpack.c.b16 %v3279, %v3271
        %v4224 = vpack.c.b16 %v3280, %v3272
        %v4225 = vpack.c.b16 %v3289, %v3281
        %v4226 = vpack.c.b16 %v3290, %v3282
        %v4227 = vpack.c.b16 %v3291, %v3283
        %v4228 = vpack.c.b16 %v3292, %v3284
        %v4229 = vpack.c.b16 %v3293, %v3285
        %v4230 = vpack.c.b16 %v3294, %v3286
        %v4231 = vpack.c.b16 %v3295, %v3287
        %v4232 = vpack.c.b16 %v3296, %v3288
        %v4233 = vpack.c.b16 %v3305, %v3297
        %v4234 = vpack.c.b16 %v3306, %v3298
        %v4235 = vpack.c.b16 %v3307, %v3299
        %v4236 = vpack.c.b16 %v3308, %v3300
        %v4237 = vpack.c.b16 %v3309, %v3301
        %v4238 = vpack.c.b16 %v3310, %v3302
        %v4239 = vpack.c.b16 %v3311, %v3303
        %v4240 = vpack.c.b16 %v3312, %v3304
        %v4241 = vpack.c.b16 %v3321, %v3313
        %v4242 = vpack.c.b16 %v3322, %v3314
        %v4243 = vpack.c.b16 %v3323, %v3315
        %v4244 = vpack.c.b16 %v3324, %v3316
        %v4245 = vpack.c.b16 %v3325, %v3317
        %v4246 = vpack.c.b16 %v3326, %v3318
        %v4247 = vpack.c.b16 %v3327, %v3319
        %v4248 = vpack.c.b16 %v3328, %v3320
        %v4249 = vpack.c.b16 %v3337, %v3329
        %v4250 = vpack.c.b16 %v3338, %v3330
        %v4251 = vpack.c.b16 %v3339, %v3331
        %v4252 = vpack.c.b16 %v3340, %v3332
        %v4253 = vpack.c.b16 %v3341, %v3333
        %v4254 = vpack.c.b16 %v3342, %v3334
        %v4255 = vpack.c.b16 %v3343, %v3335
        %v4256 = vpack.c.b16 %v3344, %v3336
        %v4257 = vpack.c.b16 %v3353, %v3345
        %v4258 = vpack.c.b16 %v3354, %v3346
        %v4259 = vpack.c.b16 %v3355, %v3347
        %v4260 = vpack.c.b16 %v3356, %v3348
        %v4261 = vpack.c.b16 %v3357, %v3349
        %v4262 = vpack.c.b16 %v3358, %v3350
        %v4263 = vpack.c.b16 %v3359, %v3351
        %v4264 = vpack.c.b16 %v3360, %v3352
        %v4265 = vpack.c.b16 %v3369, %v3361
        %v4266 = vpack.c.b16 %v3370, %v3362
        %v4267 = vpack.c.b16 %v3371, %v3363
        %v4268 = vpack.c.b16 %v3372, %v3364
        %v4269 = vpack.c.b16 %v3373, %v3365
        %v4270 = vpack.c.b16 %v3374, %v3366
        %v4271 = vpack.c.b16 %v3375, %v3367
        %v4272 = vpack.c.b16 %v3376, %v3368
        %v4273 = vpack.c.b16 %v3385, %v3377
        %v4274 = vpack.c.b16 %v3386, %v3378
        %v4275 = vpack.c.b16 %v3387, %v3379
        %v4276 = vpack.c.b16 %v3388, %v3380
        %v4277 = vpack.c.b16 %v3389, %v3381
        %v4278 = vpack.c.b16 %v3390, %v3382
        %v4279 = vpack.c.b16 %v3391, %v3383
        %v4280 = vpack.c.b16 %v3392, %v3384
        %v4281 = vpack.c.b16 %v3401, %v3393
        %v4282 = vpack.c.b16 %v3402, %v3394
        %v4283 = vpack.c.b16 %v3403, %v3395
        %v4284 = vpack.c.b16 %v3404, %v3396
        %v4285 = vpack.c.b16 %v3405, %v3397
        %v4286 = vpack.c.b16 %v3406, %v3398
        %v4287 = vpack.c.b16 %v3407, %v3399
        %v4288 = vpack.c.b16 %v3408, %v3400
        %v4289 = vpack.c.b16 %v3417, %v3409
        %v4290 = vpack.c.b16 %v3418, %v3410
        %v4291 = vpack.c.b16 %v3419, %v3411
        %v4292 = vpack.c.b16 %v3420, %v3412
        %v4293 = vpack.c.b16 %v3421, %v3413
        %v4294 = vpack.c.b16 %v3422, %v3414
        %v4295 = vpack.c.b16 %v3423, %v3415
        %v4296 = vpack.c.b16 %v3424, %v3416
        %v4297 = vpack.c.b16 %v3433, %v3425
        %v4298 = vpack.c.b16 %v3434, %v3426
        %v4299 = vpack.c.b16 %v3435, %v3427
        %v4300 = vpack.c.b16 %v3436, %v3428
        %v4301 = vpack.c.b16 %v3437, %v3429
        %v4302 = vpack.c.b16 %v3438, %v3430
        %v4303 = vpack.c.b16 %v3439, %v3431
        %v4304 = vpack.c.b16 %v3440, %v3432
        %v4305 = vpack.c.b16 %v3449, %v3441
        %v4306 = vpack.c.b16 %v3450, %v3442
        %v4307 = vpack.c.b16 %v3451, %v3443
        %v4308 = vpack.c.b16 %v3452, %v3444
        %v4309 = vpack.c.b16 %v3453, %v3445
        %v4310 = vpack.c.b16 %v3454, %v3446
        %v4311 = vpack.c.b16 %v3455, %v3447
        %v4312 = vpack.c.b16 %v3456, %v3448
        %v4313 = vpack.c.b16 %v3465, %v3457
        %v4314 = vpack.c.b16 %v3466, %v3458
        %v4315 = vpack.c.b16 %v3467, %v3459
        %v4316 = vpack.c.b16 %v3468, %v3460
        %v4317 = vpack.c.b16 %v3469, %v3461
        %v4318 = vpack.c.b16 %v3470, %v3462
        %v4319 = vpack.c.b16 %v3471, %v3463
        %v4320 = vpack.c.b16 %v3472, %v3464
        %v4321 = vpack.c.b16 %v3481, %v3473
        %v4322 = vpack.c.b16 %v3482, %v3474
        %v4323 = vpack.c.b16 %v3483, %v3475
        %v4324 = vpack.c.b16 %v3484, %v3476
        %v4325 = vpack.c.b16 %v3485, %v3477
        %v4326 = vpack.c.b16 %v3486, %v3478
        %v4327 = vpack.c.b16 %v3487, %v3479
        %v4328 = vpack.c.b16 %v3488, %v3480
        %v4329 = vpack.c.b16 %v3497, %v3489
        %v4330 = vpack.c.b16 %v3498, %v3490
        %v4331 = vpack.c.b16 %v3499, %v3491
        %v4332 = vpack.c.b16 %v3500, %v3492
        %v4333 = vpack.c.b16 %v3501, %v3493
        %v4334 = vpack.c.b16 %v3502, %v3494
        %v4335 = vpack.c.b16 %v3503, %v3495
        %v4336 = vpack.c.b16 %v3504, %v3496
        %v4337 = vpack.c.b16 %v3513, %v3505
        %v4338 = vpack.c.b16 %v3514, %v3506
        %v4339 = vpack.c.b16 %v3515, %v3507
        %v4340 = vpack.c.b16 %v3516, %v3508
        %v4341 = vpack.c.b16 %v3517, %v3509
        %v4342 = vpack.c.b16 %v3518, %v3510
        %v4343 = vpack.c.b16 %v3519, %v3511
        %v4344 = vpack.c.b16 %v3520, %v3512
        %v4345 = vpack.c.b16 %v3529, %v3521
        %v4346 = vpack.c.b16 %v3530, %v3522
        %v4347 = vpack.c.b16 %v3531, %v3523
        %v4348 = vpack.c.b16 %v3532, %v3524
        %v4349 = vpack.c.b16 %v3533, %v3525
        %v4350 = vpack.c.b16 %v3534, %v3526
        %v4351 = vpack.c.b16 %v3535, %v3527
        %v4352 = vpack.c.b16 %v3536, %v3528
        %v4353 = vpack.c.b16 %v3545, %v3537
        %v4354 = vpack.c.b16 %v3546, %v3538
        %v4355 = vpack.c.b16 %v3547, %v3539
        %v4356 = vpack.c.b16 %v3548, %v3540
        %v4357 = vpack.c.b16 %v3549, %v3541
        %v4358 = vpack.c.b16 %v3550, %v3542
        %v4359 = vpack.c.b16 %v3551, %v3543
        %v4360 = vpack.c.b16 %v3552, %v3544
        %v4361 = vpack.c.b16 %v3561, %v3553
        %v4362 = vpack.c.b16 %v3562, %v3554
        %v4363 = vpack.c.b16 %v3563, %v3555
        %v4364 = vpack.c.b16 %v3564, %v3556
        %v4365 = vpack.c.b16 %v3565, %v3557
        %v4366 = vpack.c.b16 %v3566, %v3558
        %v4367 = vpack.c.b16 %v3567, %v3559
        %v4368 = vpack.c.b16 %v3568, %v3560
        %v4369 = vpack.c.b16 %v3577, %v3569
        %v4370 = vpack.c.b16 %v3578, %v3570
        %v4371 = vpack.c.b16 %v3579, %v3571
        %v4372 = vpack.c.b16 %v3580, %v3572
        %v4373 = vpack.c.b16 %v3581, %v3573
        %v4374 = vpack.c.b16 %v3582, %v3574
        %v4375 = vpack.c.b16 %v3583, %v3575
        %v4376 = vpack.c.b16 %v3584, %v3576
        %v4377 = vpack.c.b16 %v3593, %v3585
        %v4378 = vpack.c.b16 %v3594, %v3586
        %v4379 = vpack.c.b16 %v3595, %v3587
        %v4380 = vpack.c.b16 %v3596, %v3588
        %v4381 = vpack.c.b16 %v3597, %v3589
        %v4382 = vpack.c.b16 %v3598, %v3590
        %v4383 = vpack.c.b16 %v3599, %v3591
        %v4384 = vpack.c.b16 %v3600, %v3592
        %v4385 = vpack.c.b16 %v3609, %v3601
        %v4386 = vpack.c.b16 %v3610, %v3602
        %v4387 = vpack.c.b16 %v3611, %v3603
        %v4388 = vpack.c.b16 %v3612, %v3604
        %v4389 = vpack.c.b16 %v3613, %v3605
        %v4390 = vpack.c.b16 %v3614, %v3606
        %v4391 = vpack.c.b16 %v3615, %v3607
        %v4392 = vpack.c.b16 %v3616, %v3608
        %v4393 = vpack.c.b16 %v3625, %v3617
        %v4394 = vpack.c.b16 %v3626, %v3618
        %v4395 = vpack.c.b16 %v3627, %v3619
        %v4396 = vpack.c.b16 %v3628, %v3620
        %v4397 = vpack.c.b16 %v3629, %v3621
        %v4398 = vpack.c.b16 %v3630, %v3622
        %v4399 = vpack.c.b16 %v3631, %v3623
        %v4400 = vpack.c.b16 %v3632, %v3624
        %5169 = vmatprep.subr.bf16.mxu0 %v3690
        %5170 = vmatpush1.bf16.msra.mxu0 %v3689
        %5171 = vmatprep.subr.bf16.mxu0 %v3682
        %5172 = vmatpush1.bf16.msra.mxu0 %v3681
        %5173 = vmatprep.subr.bf16.mxu0 %v3674
        %5174 = vmatpush1.bf16.msra.mxu0 %v3673
        %5175 = vmatprep.subr.bf16.mxu0 %v3666
        %5176 = vmatpush1.bf16.msra.mxu0 %v3665
        %5177 = vmatprep.subr.bf16.mxu0 %v3658
        %5178 = vmatpush1.bf16.msra.mxu0 %v3657
        %5179 = vmatprep.subr.bf16.mxu0 %v3650
        %5180 = vmatpush1.bf16.msra.mxu0 %v3649
        %5181 = vmatprep.subr.bf16.mxu0 %v3642
        %5182 = vmatpush1.bf16.msra.mxu0 %v3641
        %5183 = vmatprep.subr.bf16.mxu0 %v3634
        %5184 = vmatpush1.bf16.msra.mxu0 %v3633
        %5185 = vmatprep.subr.bf16.mxu0 %v3754
        %5186 = vmatpush2.bf16.msra.mxu0 %v3753
        %5187 = vmatprep.subr.bf16.mxu0 %v3746
        %5188 = vmatpush2.bf16.msra.mxu0 %v3745
        %5189 = vmatprep.subr.bf16.mxu0 %v3738
        %5190 = vmatpush2.bf16.msra.mxu0 %v3737
        %5191 = vmatprep.subr.bf16.mxu0 %v3730
        %5192 = vmatpush2.bf16.msra.mxu0 %v3729
        %5193 = vmatprep.subr.bf16.mxu0 %v3722
        %5194 = vmatpush2.bf16.msra.mxu0 %v3721
        %5195 = vmatprep.subr.bf16.mxu0 %v3714
        %5196 = vmatpush2.bf16.msra.mxu0 %v3713
        %5197 = vmatprep.subr.bf16.mxu0 %v3706
        %5198 = vmatpush2.bf16.msra.mxu0 %v3705
        %5199 = vmatprep.subr.bf16.mxu0 %v3698
        %5200 = vmatpush2.bf16.msra.mxu0 %v3697
        %5201 = vmatprep.mubr.bf16.mxu0 %v1306
        %5202 = vmatmul.mubr.bf16.gmra.mxu0 %v1305
        %v5203 = vpop.f32.mrf.mxu0
        %v5204 = vadd.f32 0.0, %v5203
        %v5205 = vpop.f32.mrf.mxu0
        %v5206 = vadd.f32 0.0, %v5205
        %v5207 = vpop.f32.mrf.mxu0
        %v5208 = vpop.f32.mrf.mxu0
        %5209 = vdwg.mxu0
        %5210 = vmatprep.subr.bf16.mxu0 %v3818
        %5211 = vmatpush1.bf16.msra.mxu0 %v3817
        %5212 = vmatprep.subr.bf16.mxu0 %v3810
        %5213 = vmatpush1.bf16.msra.mxu0 %v3809
        %5214 = vmatprep.subr.bf16.mxu0 %v3802
        %5215 = vmatpush1.bf16.msra.mxu0 %v3801
        %5216 = vmatprep.subr.bf16.mxu0 %v3794
        %5217 = vmatpush1.bf16.msra.mxu0 %v3793
        %5218 = vmatprep.subr.bf16.mxu0 %v3786
        %5219 = vmatpush1.bf16.msra.mxu0 %v3785
        %5220 = vmatprep.subr.bf16.mxu0 %v3778
        %5221 = vmatpush1.bf16.msra.mxu0 %v3777
        %5222 = vmatprep.subr.bf16.mxu0 %v3770
        %5223 = vmatpush1.bf16.msra.mxu0 %v3769
        %5224 = vmatprep.subr.bf16.mxu0 %v3762
        %5225 = vmatpush1.bf16.msra.mxu0 %v3761
        %5226 = vmatprep.subr.bf16.mxu0 %v3882
        %5227 = vmatpush2.bf16.msra.mxu0 %v3881
        %5228 = vmatprep.subr.bf16.mxu0 %v3874
        %5229 = vmatpush2.bf16.msra.mxu0 %v3873
        %5230 = vmatprep.subr.bf16.mxu0 %v3866
        %5231 = vmatpush2.bf16.msra.mxu0 %v3865
        %5232 = vmatprep.subr.bf16.mxu0 %v3858
        %5233 = vmatpush2.bf16.msra.mxu0 %v3857
        %5234 = vmatprep.subr.bf16.mxu0 %v3850
        %5235 = vmatpush2.bf16.msra.mxu0 %v3849
        %5236 = vmatprep.subr.bf16.mxu0 %v3842
        %5237 = vmatpush2.bf16.msra.mxu0 %v3841
        %5238 = vmatprep.subr.bf16.mxu0 %v3834
        %5239 = vmatpush2.bf16.msra.mxu0 %v3833
        %5240 = vmatprep.subr.bf16.mxu0 %v3826
        %5241 = vmatpush2.bf16.msra.mxu0 %v3825
        %5242 = vmatprep.mubr.bf16.mxu0 %v1308
        %5243 = vmatmul.mubr.bf16.gmra.mxu0 %v1307
        %v5244 = vpop.f32.mrf.mxu0
        %v5245 = vadd.f32 %v5204, %v5244
        %v5246 = vpop.f32.mrf.mxu0
        %v5247 = vadd.f32 %v5206, %v5246
        %v5248 = vpop.f32.mrf.mxu0
        %v5249 = vpop.f32.mrf.mxu0
        %5250 = vdwg.mxu0
        %5251 = vmatprep.subr.bf16.mxu0 %v3946
        %5252 = vmatpush1.bf16.msra.mxu0 %v3945
        %5253 = vmatprep.subr.bf16.mxu0 %v3938
        %5254 = vmatpush1.bf16.msra.mxu0 %v3937
        %5255 = vmatprep.subr.bf16.mxu0 %v3930
        %5256 = vmatpush1.bf16.msra.mxu0 %v3929
        %5257 = vmatprep.subr.bf16.mxu0 %v3922
        %5258 = vmatpush1.bf16.msra.mxu0 %v3921
        %5259 = vmatprep.subr.bf16.mxu0 %v3914
        %5260 = vmatpush1.bf16.msra.mxu0 %v3913
        %5261 = vmatprep.subr.bf16.mxu0 %v3906
        %5262 = vmatpush1.bf16.msra.mxu0 %v3905
        %5263 = vmatprep.subr.bf16.mxu0 %v3898
        %5264 = vmatpush1.bf16.msra.mxu0 %v3897
        %5265 = vmatprep.subr.bf16.mxu0 %v3890
        %5266 = vmatpush1.bf16.msra.mxu0 %v3889
        %5267 = vmatprep.subr.bf16.mxu0 %v4010
        %5268 = vmatpush2.bf16.msra.mxu0 %v4009
        %5269 = vmatprep.subr.bf16.mxu0 %v4002
        %5270 = vmatpush2.bf16.msra.mxu0 %v4001
        %5271 = vmatprep.subr.bf16.mxu0 %v3994
        %5272 = vmatpush2.bf16.msra.mxu0 %v3993
        %5273 = vmatprep.subr.bf16.mxu0 %v3986
        %5274 = vmatpush2.bf16.msra.mxu0 %v3985
        %5275 = vmatprep.subr.bf16.mxu0 %v3978
        %5276 = vmatpush2.bf16.msra.mxu0 %v3977
        %5277 = vmatprep.subr.bf16.mxu0 %v3970
        %5278 = vmatpush2.bf16.msra.mxu0 %v3969
        %5279 = vmatprep.subr.bf16.mxu0 %v3962
        %5280 = vmatpush2.bf16.msra.mxu0 %v3961
        %5281 = vmatprep.subr.bf16.mxu0 %v3954
        %5282 = vmatpush2.bf16.msra.mxu0 %v3953
        %5283 = vmatprep.mubr.bf16.mxu0 %v1310
        %5284 = vmatmul.mubr.bf16.gmra.mxu0 %v1309
        %v5285 = vpop.f32.mrf.mxu0
        %v5286 = vadd.f32 %v5245, %v5285
        %v5287 = vpop.f32.mrf.mxu0
        %v5288 = vadd.f32 %v5247, %v5287
        %v5289 = vpop.f32.mrf.mxu0
        %v5290 = vpop.f32.mrf.mxu0
        %5291 = vdwg.mxu0
        %5292 = vmatprep.subr.bf16.mxu0 %v4074
        %5293 = vmatpush1.bf16.msra.mxu0 %v4073
        %5294 = vmatprep.subr.bf16.mxu0 %v4066
        %5295 = vmatpush1.bf16.msra.mxu0 %v4065
        %5296 = vmatprep.subr.bf16.mxu0 %v4058
        %5297 = vmatpush1.bf16.msra.mxu0 %v4057
        %5298 = vmatprep.subr.bf16.mxu0 %v4050
        %5299 = vmatpush1.bf16.msra.mxu0 %v4049
        %5300 = vmatprep.subr.bf16.mxu0 %v4042
        %5301 = vmatpush1.bf16.msra.mxu0 %v4041
        %5302 = vmatprep.subr.bf16.mxu0 %v4034
        %5303 = vmatpush1.bf16.msra.mxu0 %v4033
        %5304 = vmatprep.subr.bf16.mxu0 %v4026
        %5305 = vmatpush1.bf16.msra.mxu0 %v4025
        %5306 = vmatprep.subr.bf16.mxu0 %v4018
        %5307 = vmatpush1.bf16.msra.mxu0 %v4017
        %5308 = vmatprep.subr.bf16.mxu0 %v4138
        %5309 = vmatpush2.bf16.msra.mxu0 %v4137
        %5310 = vmatprep.subr.bf16.mxu0 %v4130
        %5311 = vmatpush2.bf16.msra.mxu0 %v4129
        %5312 = vmatprep.subr.bf16.mxu0 %v4122
        %5313 = vmatpush2.bf16.msra.mxu0 %v4121
        %5314 = vmatprep.subr.bf16.mxu0 %v4114
        %5315 = vmatpush2.bf16.msra.mxu0 %v4113
        %5316 = vmatprep.subr.bf16.mxu0 %v4106
        %5317 = vmatpush2.bf16.msra.mxu0 %v4105
        %5318 = vmatprep.subr.bf16.mxu0 %v4098
        %5319 = vmatpush2.bf16.msra.mxu0 %v4097
        %5320 = vmatprep.subr.bf16.mxu0 %v4090
        %5321 = vmatpush2.bf16.msra.mxu0 %v4089
        %5322 = vmatprep.subr.bf16.mxu0 %v4082
        %5323 = vmatpush2.bf16.msra.mxu0 %v4081
        %5324 = vmatprep.mubr.bf16.mxu0 %v1312
        %5325 = vmatmul.mubr.bf16.gmra.mxu0 %v1311
        %v5326 = vpop.f32.mrf.mxu0
        %v5327 = vadd.f32 %v5286, %v5326
        %v5328 = vpop.f32.mrf.mxu0
        %v5329 = vadd.f32 %v5288, %v5328
        %v5330 = vpop.f32.mrf.mxu0
        %v5331 = vpop.f32.mrf.mxu0
        %5332 = vdwg.mxu0
        %5333 = vmatprep.subr.bf16.mxu0 %v4202
        %5334 = vmatpush1.bf16.msra.mxu0 %v4201
        %5335 = vmatprep.subr.bf16.mxu0 %v4194
        %5336 = vmatpush1.bf16.msra.mxu0 %v4193
        %5337 = vmatprep.subr.bf16.mxu0 %v4186
        %5338 = vmatpush1.bf16.msra.mxu0 %v4185
        %5339 = vmatprep.subr.bf16.mxu0 %v4178
        %5340 = vmatpush1.bf16.msra.mxu0 %v4177
        %5341 = vmatprep.subr.bf16.mxu0 %v4170
        %5342 = vmatpush1.bf16.msra.mxu0 %v4169
        %5343 = vmatprep.subr.bf16.mxu0 %v4162
        %5344 = vmatpush1.bf16.msra.mxu0 %v4161
        %5345 = vmatprep.subr.bf16.mxu0 %v4154
        %5346 = vmatpush1.bf16.msra.mxu0 %v4153
        %5347 = vmatprep.subr.bf16.mxu0 %v4146
        %5348 = vmatpush1.bf16.msra.mxu0 %v4145
        %5349 = vmatprep.subr.bf16.mxu0 %v4266
        %5350 = vmatpush2.bf16.msra.mxu0 %v4265
        %5351 = vmatprep.subr.bf16.mxu0 %v4258
        %5352 = vmatpush2.bf16.msra.mxu0 %v4257
        %5353 = vmatprep.subr.bf16.mxu0 %v4250
        %5354 = vmatpush2.bf16.msra.mxu0 %v4249
        %5355 = vmatprep.subr.bf16.mxu0 %v4242
        %5356 = vmatpush2.bf16.msra.mxu0 %v4241
        %5357 = vmatprep.subr.bf16.mxu0 %v4234
        %5358 = vmatpush2.bf16.msra.mxu0 %v4233
        %5359 = vmatprep.subr.bf16.mxu0 %v4226
        %5360 = vmatpush2.bf16.msra.mxu0 %v4225
        %5361 = vmatprep.subr.bf16.mxu0 %v4218
        %5362 = vmatpush2.bf16.msra.mxu0 %v4217
        %5363 = vmatprep.subr.bf16.mxu0 %v4210
        %5364 = vmatpush2.bf16.msra.mxu0 %v4209
        %5365 = vmatprep.mubr.bf16.mxu0 %v1314
        %5366 = vmatmul.mubr.bf16.gmra.mxu0 %v1313
        %v5367 = vpop.f32.mrf.mxu0
        %v5368 = vadd.f32 %v5327, %v5367
        %v5369 = vpop.f32.mrf.mxu0
        %v5370 = vadd.f32 %v5329, %v5369
        %v5371 = vpop.f32.mrf.mxu0
        %v5372 = vpop.f32.mrf.mxu0
        %5373 = vdwg.mxu0
        %5374 = vmatprep.subr.bf16.mxu0 %v4330
        %5375 = vmatpush1.bf16.msra.mxu0 %v4329
        %5376 = vmatprep.subr.bf16.mxu0 %v4322
        %5377 = vmatpush1.bf16.msra.mxu0 %v4321
        %5378 = vmatprep.subr.bf16.mxu0 %v4314
        %5379 = vmatpush1.bf16.msra.mxu0 %v4313
        %5380 = vmatprep.subr.bf16.mxu0 %v4306
        %5381 = vmatpush1.bf16.msra.mxu0 %v4305
        %5382 = vmatprep.subr.bf16.mxu0 %v4298
        %5383 = vmatpush1.bf16.msra.mxu0 %v4297
        %5384 = vmatprep.subr.bf16.mxu0 %v4290
        %5385 = vmatpush1.bf16.msra.mxu0 %v4289
        %5386 = vmatprep.subr.bf16.mxu0 %v4282
        %5387 = vmatpush1.bf16.msra.mxu0 %v4281
        %5388 = vmatprep.subr.bf16.mxu0 %v4274
        %5389 = vmatpush1.bf16.msra.mxu0 %v4273
        %5390 = vmatprep.subr.bf16.mxu0 %v4394
        %5391 = vmatpush2.bf16.msra.mxu0 %v4393
        %5392 = vmatprep.subr.bf16.mxu0 %v4386
        %5393 = vmatpush2.bf16.msra.mxu0 %v4385
        %5394 = vmatprep.subr.bf16.mxu0 %v4378
        %5395 = vmatpush2.bf16.msra.mxu0 %v4377
        %5396 = vmatprep.subr.bf16.mxu0 %v4370
        %5397 = vmatpush2.bf16.msra.mxu0 %v4369
        %5398 = vmatprep.subr.bf16.mxu0 %v4362
        %5399 = vmatpush2.bf16.msra.mxu0 %v4361
        %5400 = vmatprep.subr.bf16.mxu0 %v4354
        %5401 = vmatpush2.bf16.msra.mxu0 %v4353
        %5402 = vmatprep.subr.bf16.mxu0 %v4346
        %5403 = vmatpush2.bf16.msra.mxu0 %v4345
        %5404 = vmatprep.subr.bf16.mxu0 %v4338
        %5405 = vmatpush2.bf16.msra.mxu0 %v4337
        %5406 = vmatprep.mubr.bf16.mxu0 %v1316
        %5407 = vmatmul.mubr.bf16.gmra.mxu0 %v1315
        %v5408 = vpop.f32.mrf.mxu0
        %v5409 = vadd.f32 %v5368, %v5408
        %v5410 = vpop.f32.mrf.mxu0
        %v5411 = vadd.f32 %v5370, %v5410
        %v5412 = vpop.f32.mrf.mxu0
        %v5413 = vpop.f32.mrf.mxu0
        %5414 = vdwg.mxu0
        %5415 = vmatprep.subr.bf16.mxu0 %v3692
        %5416 = vmatpush1.bf16.msra.mxu0 %v3691
        %5417 = vmatprep.subr.bf16.mxu0 %v3684
        %5418 = vmatpush1.bf16.msra.mxu0 %v3683
        %5419 = vmatprep.subr.bf16.mxu0 %v3676
        %5420 = vmatpush1.bf16.msra.mxu0 %v3675
        %5421 = vmatprep.subr.bf16.mxu0 %v3668
        %5422 = vmatpush1.bf16.msra.mxu0 %v3667
        %5423 = vmatprep.subr.bf16.mxu0 %v3660
        %5424 = vmatpush1.bf16.msra.mxu0 %v3659
        %5425 = vmatprep.subr.bf16.mxu0 %v3652
        %5426 = vmatpush1.bf16.msra.mxu0 %v3651
        %5427 = vmatprep.subr.bf16.mxu0 %v3644
        %5428 = vmatpush1.bf16.msra.mxu0 %v3643
        %5429 = vmatprep.subr.bf16.mxu0 %v3636
        %5430 = vmatpush1.bf16.msra.mxu0 %v3635
        %5431 = vmatprep.subr.bf16.mxu0 %v3756
        %5432 = vmatpush2.bf16.msra.mxu0 %v3755
        %5433 = vmatprep.subr.bf16.mxu0 %v3748
        %5434 = vmatpush2.bf16.msra.mxu0 %v3747
        %5435 = vmatprep.subr.bf16.mxu0 %v3740
        %5436 = vmatpush2.bf16.msra.mxu0 %v3739
        %5437 = vmatprep.subr.bf16.mxu0 %v3732
        %5438 = vmatpush2.bf16.msra.mxu0 %v3731
        %5439 = vmatprep.subr.bf16.mxu0 %v3724
        %5440 = vmatpush2.bf16.msra.mxu0 %v3723
        %5441 = vmatprep.subr.bf16.mxu0 %v3716
        %5442 = vmatpush2.bf16.msra.mxu0 %v3715
        %5443 = vmatprep.subr.bf16.mxu0 %v3708
        %5444 = vmatpush2.bf16.msra.mxu0 %v3707
        %5445 = vmatprep.subr.bf16.mxu0 %v3700
        %5446 = vmatpush2.bf16.msra.mxu0 %v3699
        %5447 = vmatprep.mubr.bf16.mxu0 %v1306
        %5448 = vmatmul.mubr.bf16.gmra.mxu0 %v1305
        %v5449 = vpop.f32.mrf.mxu0
        %v5450 = vadd.f32 0.0, %v5449
        %v5451 = vpop.f32.mrf.mxu0
        %v5452 = vadd.f32 0.0, %v5451
        %v5453 = vpop.f32.mrf.mxu0
        %v5454 = vpop.f32.mrf.mxu0
        %5455 = vdwg.mxu0
        %5456 = vmatprep.subr.bf16.mxu0 %v3820
        %5457 = vmatpush1.bf16.msra.mxu0 %v3819
        %5458 = vmatprep.subr.bf16.mxu0 %v3812
        %5459 = vmatpush1.bf16.msra.mxu0 %v3811
        %5460 = vmatprep.subr.bf16.mxu0 %v3804
        %5461 = vmatpush1.bf16.msra.mxu0 %v3803
        %5462 = vmatprep.subr.bf16.mxu0 %v3796
        %5463 = vmatpush1.bf16.msra.mxu0 %v3795
        %5464 = vmatprep.subr.bf16.mxu0 %v3788
        %5465 = vmatpush1.bf16.msra.mxu0 %v3787
        %5466 = vmatprep.subr.bf16.mxu0 %v3780
        %5467 = vmatpush1.bf16.msra.mxu0 %v3779
        %5468 = vmatprep.subr.bf16.mxu0 %v3772
        %5469 = vmatpush1.bf16.msra.mxu0 %v3771
        %5470 = vmatprep.subr.bf16.mxu0 %v3764
        %5471 = vmatpush1.bf16.msra.mxu0 %v3763
        %5472 = vmatprep.subr.bf16.mxu0 %v3884
        %5473 = vmatpush2.bf16.msra.mxu0 %v3883
        %5474 = vmatprep.subr.bf16.mxu0 %v3876
        %5475 = vmatpush2.bf16.msra.mxu0 %v3875
        %5476 = vmatprep.subr.bf16.mxu0 %v3868
        %5477 = vmatpush2.bf16.msra.mxu0 %v3867
        %5478 = vmatprep.subr.bf16.mxu0 %v3860
        %5479 = vmatpush2.bf16.msra.mxu0 %v3859
        %5480 = vmatprep.subr.bf16.mxu0 %v3852
        %5481 = vmatpush2.bf16.msra.mxu0 %v3851
        %5482 = vmatprep.subr.bf16.mxu0 %v3844
        %5483 = vmatpush2.bf16.msra.mxu0 %v3843
        %5484 = vmatprep.subr.bf16.mxu0 %v3836
        %5485 = vmatpush2.bf16.msra.mxu0 %v3835
        %5486 = vmatprep.subr.bf16.mxu0 %v3828
        %5487 = vmatpush2.bf16.msra.mxu0 %v3827
        %5488 = vmatprep.mubr.bf16.mxu0 %v1308
        %5489 = vmatmul.mubr.bf16.gmra.mxu0 %v1307
        %v5490 = vpop.f32.mrf.mxu0
        %v5491 = vadd.f32 %v5450, %v5490
        %v5492 = vpop.f32.mrf.mxu0
        %v5493 = vadd.f32 %v5452, %v5492
        %v5494 = vpop.f32.mrf.mxu0
        %v5495 = vpop.f32.mrf.mxu0
        %5496 = vdwg.mxu0
        %5497 = vmatprep.subr.bf16.mxu0 %v3948
        %5498 = vmatpush1.bf16.msra.mxu0 %v3947
        %5499 = vmatprep.subr.bf16.mxu0 %v3940
        %5500 = vmatpush1.bf16.msra.mxu0 %v3939
        %5501 = vmatprep.subr.bf16.mxu0 %v3932
        %5502 = vmatpush1.bf16.msra.mxu0 %v3931
        %5503 = vmatprep.subr.bf16.mxu0 %v3924
        %5504 = vmatpush1.bf16.msra.mxu0 %v3923
        %5505 = vmatprep.subr.bf16.mxu0 %v3916
        %5506 = vmatpush1.bf16.msra.mxu0 %v3915
        %5507 = vmatprep.subr.bf16.mxu0 %v3908
        %5508 = vmatpush1.bf16.msra.mxu0 %v3907
        %5509 = vmatprep.subr.bf16.mxu0 %v3900
        %5510 = vmatpush1.bf16.msra.mxu0 %v3899
        %5511 = vmatprep.subr.bf16.mxu0 %v3892
        %5512 = vmatpush1.bf16.msra.mxu0 %v3891
        %5513 = vmatprep.subr.bf16.mxu0 %v4012
        %5514 = vmatpush2.bf16.msra.mxu0 %v4011
        %5515 = vmatprep.subr.bf16.mxu0 %v4004
        %5516 = vmatpush2.bf16.msra.mxu0 %v4003
        %5517 = vmatprep.subr.bf16.mxu0 %v3996
        %5518 = vmatpush2.bf16.msra.mxu0 %v3995
        %5519 = vmatprep.subr.bf16.mxu0 %v3988
        %5520 = vmatpush2.bf16.msra.mxu0 %v3987
        %5521 = vmatprep.subr.bf16.mxu0 %v3980
        %5522 = vmatpush2.bf16.msra.mxu0 %v3979
        %5523 = vmatprep.subr.bf16.mxu0 %v3972
        %5524 = vmatpush2.bf16.msra.mxu0 %v3971
        %5525 = vmatprep.subr.bf16.mxu0 %v3964
        %5526 = vmatpush2.bf16.msra.mxu0 %v3963
        %5527 = vmatprep.subr.bf16.mxu0 %v3956
        %5528 = vmatpush2.bf16.msra.mxu0 %v3955
        %5529 = vmatprep.mubr.bf16.mxu0 %v1310
        %5530 = vmatmul.mubr.bf16.gmra.mxu0 %v1309
        %v5531 = vpop.f32.mrf.mxu0
        %v5532 = vadd.f32 %v5491, %v5531
        %v5533 = vpop.f32.mrf.mxu0
        %v5534 = vadd.f32 %v5493, %v5533
        %v5535 = vpop.f32.mrf.mxu0
        %v5536 = vpop.f32.mrf.mxu0
        %5537 = vdwg.mxu0
        %5538 = vmatprep.subr.bf16.mxu0 %v4076
        %5539 = vmatpush1.bf16.msra.mxu0 %v4075
        %5540 = vmatprep.subr.bf16.mxu0 %v4068
        %5541 = vmatpush1.bf16.msra.mxu0 %v4067
        %5542 = vmatprep.subr.bf16.mxu0 %v4060
        %5543 = vmatpush1.bf16.msra.mxu0 %v4059
        %5544 = vmatprep.subr.bf16.mxu0 %v4052
        %5545 = vmatpush1.bf16.msra.mxu0 %v4051
        %5546 = vmatprep.subr.bf16.mxu0 %v4044
        %5547 = vmatpush1.bf16.msra.mxu0 %v4043
        %5548 = vmatprep.subr.bf16.mxu0 %v4036
        %5549 = vmatpush1.bf16.msra.mxu0 %v4035
        %5550 = vmatprep.subr.bf16.mxu0 %v4028
        %5551 = vmatpush1.bf16.msra.mxu0 %v4027
        %5552 = vmatprep.subr.bf16.mxu0 %v4020
        %5553 = vmatpush1.bf16.msra.mxu0 %v4019
        %5554 = vmatprep.subr.bf16.mxu0 %v4140
        %5555 = vmatpush2.bf16.msra.mxu0 %v4139
        %5556 = vmatprep.subr.bf16.mxu0 %v4132
        %5557 = vmatpush2.bf16.msra.mxu0 %v4131
        %5558 = vmatprep.subr.bf16.mxu0 %v4124
        %5559 = vmatpush2.bf16.msra.mxu0 %v4123
        %5560 = vmatprep.subr.bf16.mxu0 %v4116
        %5561 = vmatpush2.bf16.msra.mxu0 %v4115
        %5562 = vmatprep.subr.bf16.mxu0 %v4108
        %5563 = vmatpush2.bf16.msra.mxu0 %v4107
        %5564 = vmatprep.subr.bf16.mxu0 %v4100
        %5565 = vmatpush2.bf16.msra.mxu0 %v4099
        %5566 = vmatprep.subr.bf16.mxu0 %v4092
        %5567 = vmatpush2.bf16.msra.mxu0 %v4091
        %5568 = vmatprep.subr.bf16.mxu0 %v4084
        %5569 = vmatpush2.bf16.msra.mxu0 %v4083
        %5570 = vmatprep.mubr.bf16.mxu0 %v1312
        %5571 = vmatmul.mubr.bf16.gmra.mxu0 %v1311
        %v5572 = vpop.f32.mrf.mxu0
        %v5573 = vadd.f32 %v5532, %v5572
        %v5574 = vpop.f32.mrf.mxu0
        %v5575 = vadd.f32 %v5534, %v5574
        %v5576 = vpop.f32.mrf.mxu0
        %v5577 = vpop.f32.mrf.mxu0
        %5578 = vdwg.mxu0
        %5579 = vmatprep.subr.bf16.mxu0 %v4204
        %5580 = vmatpush1.bf16.msra.mxu0 %v4203
        %5581 = vmatprep.subr.bf16.mxu0 %v4196
        %5582 = vmatpush1.bf16.msra.mxu0 %v4195
        %5583 = vmatprep.subr.bf16.mxu0 %v4188
        %5584 = vmatpush1.bf16.msra.mxu0 %v4187
        %5585 = vmatprep.subr.bf16.mxu0 %v4180
        %5586 = vmatpush1.bf16.msra.mxu0 %v4179
        %5587 = vmatprep.subr.bf16.mxu0 %v4172
        %5588 = vmatpush1.bf16.msra.mxu0 %v4171
        %5589 = vmatprep.subr.bf16.mxu0 %v4164
        %5590 = vmatpush1.bf16.msra.mxu0 %v4163
        %5591 = vmatprep.subr.bf16.mxu0 %v4156
        %5592 = vmatpush1.bf16.msra.mxu0 %v4155
        %5593 = vmatprep.subr.bf16.mxu0 %v4148
        %5594 = vmatpush1.bf16.msra.mxu0 %v4147
        %5595 = vmatprep.subr.bf16.mxu0 %v4268
        %5596 = vmatpush2.bf16.msra.mxu0 %v4267
        %5597 = vmatprep.subr.bf16.mxu0 %v4260
        %5598 = vmatpush2.bf16.msra.mxu0 %v4259
        %5599 = vmatprep.subr.bf16.mxu0 %v4252
        %5600 = vmatpush2.bf16.msra.mxu0 %v4251
        %5601 = vmatprep.subr.bf16.mxu0 %v4244
        %5602 = vmatpush2.bf16.msra.mxu0 %v4243
        %5603 = vmatprep.subr.bf16.mxu0 %v4236
        %5604 = vmatpush2.bf16.msra.mxu0 %v4235
        %5605 = vmatprep.subr.bf16.mxu0 %v4228
        %5606 = vmatpush2.bf16.msra.mxu0 %v4227
        %5607 = vmatprep.subr.bf16.mxu0 %v4220
        %5608 = vmatpush2.bf16.msra.mxu0 %v4219
        %5609 = vmatprep.subr.bf16.mxu0 %v4212
        %5610 = vmatpush2.bf16.msra.mxu0 %v4211
        %5611 = vmatprep.mubr.bf16.mxu0 %v1314
        %5612 = vmatmul.mubr.bf16.gmra.mxu0 %v1313
        %v5613 = vpop.f32.mrf.mxu0
        %v5614 = vadd.f32 %v5573, %v5613
        %v5615 = vpop.f32.mrf.mxu0
        %v5616 = vadd.f32 %v5575, %v5615
        %v5617 = vpop.f32.mrf.mxu0
        %v5618 = vpop.f32.mrf.mxu0
        %5619 = vdwg.mxu0
        %5620 = vmatprep.subr.bf16.mxu0 %v4332
        %5621 = vmatpush1.bf16.msra.mxu0 %v4331
        %5622 = vmatprep.subr.bf16.mxu0 %v4324
        %5623 = vmatpush1.bf16.msra.mxu0 %v4323
        %5624 = vmatprep.subr.bf16.mxu0 %v4316
        %5625 = vmatpush1.bf16.msra.mxu0 %v4315
        %5626 = vmatprep.subr.bf16.mxu0 %v4308
        %5627 = vmatpush1.bf16.msra.mxu0 %v4307
        %5628 = vmatprep.subr.bf16.mxu0 %v4300
        %5629 = vmatpush1.bf16.msra.mxu0 %v4299
        %5630 = vmatprep.subr.bf16.mxu0 %v4292
        %5631 = vmatpush1.bf16.msra.mxu0 %v4291
        %5632 = vmatprep.subr.bf16.mxu0 %v4284
        %5633 = vmatpush1.bf16.msra.mxu0 %v4283
        %5634 = vmatprep.subr.bf16.mxu0 %v4276
        %5635 = vmatpush1.bf16.msra.mxu0 %v4275
        %5636 = vmatprep.subr.bf16.mxu0 %v4396
        %5637 = vmatpush2.bf16.msra.mxu0 %v4395
        %5638 = vmatprep.subr.bf16.mxu0 %v4388
        %5639 = vmatpush2.bf16.msra.mxu0 %v4387
        %5640 = vmatprep.subr.bf16.mxu0 %v4380
        %5641 = vmatpush2.bf16.msra.mxu0 %v4379
        %5642 = vmatprep.subr.bf16.mxu0 %v4372
        %5643 = vmatpush2.bf16.msra.mxu0 %v4371
        %5644 = vmatprep.subr.bf16.mxu0 %v4364
        %5645 = vmatpush2.bf16.msra.mxu0 %v4363
        %5646 = vmatprep.subr.bf16.mxu0 %v4356
        %5647 = vmatpush2.bf16.msra.mxu0 %v4355
        %5648 = vmatprep.subr.bf16.mxu0 %v4348
        %5649 = vmatpush2.bf16.msra.mxu0 %v4347
        %5650 = vmatprep.subr.bf16.mxu0 %v4340
        %5651 = vmatpush2.bf16.msra.mxu0 %v4339
        %5652 = vmatprep.mubr.bf16.mxu0 %v1316
        %5653 = vmatmul.mubr.bf16.gmra.mxu0 %v1315
        %v5654 = vpop.f32.mrf.mxu0
        %v5655 = vadd.f32 %v5614, %v5654
        %v5656 = vpop.f32.mrf.mxu0
        %v5657 = vadd.f32 %v5616, %v5656
        %v5658 = vpop.f32.mrf.mxu0
        %v5659 = vpop.f32.mrf.mxu0
        %5660 = vdwg.mxu0
        %5661 = vmatprep.subr.bf16.mxu0 %v3694
        %5662 = vmatpush1.bf16.msra.mxu0 %v3693
        %5663 = vmatprep.subr.bf16.mxu0 %v3686
        %5664 = vmatpush1.bf16.msra.mxu0 %v3685
        %5665 = vmatprep.subr.bf16.mxu0 %v3678
        %5666 = vmatpush1.bf16.msra.mxu0 %v3677
        %5667 = vmatprep.subr.bf16.mxu0 %v3670
        %5668 = vmatpush1.bf16.msra.mxu0 %v3669
        %5669 = vmatprep.subr.bf16.mxu0 %v3662
        %5670 = vmatpush1.bf16.msra.mxu0 %v3661
        %5671 = vmatprep.subr.bf16.mxu0 %v3654
        %5672 = vmatpush1.bf16.msra.mxu0 %v3653
        %5673 = vmatprep.subr.bf16.mxu0 %v3646
        %5674 = vmatpush1.bf16.msra.mxu0 %v3645
        %5675 = vmatprep.subr.bf16.mxu0 %v3638
        %5676 = vmatpush1.bf16.msra.mxu0 %v3637
        %5677 = vmatprep.subr.bf16.mxu0 %v3758
        %5678 = vmatpush2.bf16.msra.mxu0 %v3757
        %5679 = vmatprep.subr.bf16.mxu0 %v3750
        %5680 = vmatpush2.bf16.msra.mxu0 %v3749
        %5681 = vmatprep.subr.bf16.mxu0 %v3742
        %5682 = vmatpush2.bf16.msra.mxu0 %v3741
        %5683 = vmatprep.subr.bf16.mxu0 %v3734
        %5684 = vmatpush2.bf16.msra.mxu0 %v3733
        %5685 = vmatprep.subr.bf16.mxu0 %v3726
        %5686 = vmatpush2.bf16.msra.mxu0 %v3725
        %5687 = vmatprep.subr.bf16.mxu0 %v3718
        %5688 = vmatpush2.bf16.msra.mxu0 %v3717
        %5689 = vmatprep.subr.bf16.mxu0 %v3710
        %5690 = vmatpush2.bf16.msra.mxu0 %v3709
        %5691 = vmatprep.subr.bf16.mxu0 %v3702
        %5692 = vmatpush2.bf16.msra.mxu0 %v3701
        %5693 = vmatprep.mubr.bf16.mxu0 %v1306
        %5694 = vmatmul.mubr.bf16.gmra.mxu0 %v1305
        %v5695 = vpop.f32.mrf.mxu0
        %v5696 = vadd.f32 0.0, %v5695
        %v5697 = vpop.f32.mrf.mxu0
        %v5698 = vadd.f32 0.0, %v5697
        %v5699 = vpop.f32.mrf.mxu0
        %v5700 = vpop.f32.mrf.mxu0
        %5701 = vdwg.mxu0
        %5702 = vmatprep.subr.bf16.mxu0 %v3822
        %5703 = vmatpush1.bf16.msra.mxu0 %v3821
        %5704 = vmatprep.subr.bf16.mxu0 %v3814
        %5705 = vmatpush1.bf16.msra.mxu0 %v3813
        %5706 = vmatprep.subr.bf16.mxu0 %v3806
        %5707 = vmatpush1.bf16.msra.mxu0 %v3805
        %5708 = vmatprep.subr.bf16.mxu0 %v3798
        %5709 = vmatpush1.bf16.msra.mxu0 %v3797
        %5710 = vmatprep.subr.bf16.mxu0 %v3790
        %5711 = vmatpush1.bf16.msra.mxu0 %v3789
        %5712 = vmatprep.subr.bf16.mxu0 %v3782
        %5713 = vmatpush1.bf16.msra.mxu0 %v3781
        %5714 = vmatprep.subr.bf16.mxu0 %v3774
        %5715 = vmatpush1.bf16.msra.mxu0 %v3773
        %5716 = vmatprep.subr.bf16.mxu0 %v3766
        %5717 = vmatpush1.bf16.msra.mxu0 %v3765
        %5718 = vmatprep.subr.bf16.mxu0 %v3886
        %5719 = vmatpush2.bf16.msra.mxu0 %v3885
        %5720 = vmatprep.subr.bf16.mxu0 %v3878
        %5721 = vmatpush2.bf16.msra.mxu0 %v3877
        %5722 = vmatprep.subr.bf16.mxu0 %v3870
        %5723 = vmatpush2.bf16.msra.mxu0 %v3869
        %5724 = vmatprep.subr.bf16.mxu0 %v3862
        %5725 = vmatpush2.bf16.msra.mxu0 %v3861
        %5726 = vmatprep.subr.bf16.mxu0 %v3854
        %5727 = vmatpush2.bf16.msra.mxu0 %v3853
        %5728 = vmatprep.subr.bf16.mxu0 %v3846
        %5729 = vmatpush2.bf16.msra.mxu0 %v3845
        %5730 = vmatprep.subr.bf16.mxu0 %v3838
        %5731 = vmatpush2.bf16.msra.mxu0 %v3837
        %5732 = vmatprep.subr.bf16.mxu0 %v3830
        %5733 = vmatpush2.bf16.msra.mxu0 %v3829
        %5734 = vmatprep.mubr.bf16.mxu0 %v1308
        %5735 = vmatmul.mubr.bf16.gmra.mxu0 %v1307
        %v5736 = vpop.f32.mrf.mxu0
        %v5737 = vadd.f32 %v5696, %v5736
        %v5738 = vpop.f32.mrf.mxu0
        %v5739 = vadd.f32 %v5698, %v5738
        %v5740 = vpop.f32.mrf.mxu0
        %v5741 = vpop.f32.mrf.mxu0
        %5742 = vdwg.mxu0
        %5743 = vmatprep.subr.bf16.mxu0 %v3950
        %5744 = vmatpush1.bf16.msra.mxu0 %v3949
        %5745 = vmatprep.subr.bf16.mxu0 %v3942
        %5746 = vmatpush1.bf16.msra.mxu0 %v3941
        %5747 = vmatprep.subr.bf16.mxu0 %v3934
        %5748 = vmatpush1.bf16.msra.mxu0 %v3933
        %5749 = vmatprep.subr.bf16.mxu0 %v3926
        %5750 = vmatpush1.bf16.msra.mxu0 %v3925
        %5751 = vmatprep.subr.bf16.mxu0 %v3918
        %5752 = vmatpush1.bf16.msra.mxu0 %v3917
        %5753 = vmatprep.subr.bf16.mxu0 %v3910
        %5754 = vmatpush1.bf16.msra.mxu0 %v3909
        %5755 = vmatprep.subr.bf16.mxu0 %v3902
        %5756 = vmatpush1.bf16.msra.mxu0 %v3901
        %5757 = vmatprep.subr.bf16.mxu0 %v3894
        %5758 = vmatpush1.bf16.msra.mxu0 %v3893
        %5759 = vmatprep.subr.bf16.mxu0 %v4014
        %5760 = vmatpush2.bf16.msra.mxu0 %v4013
        %5761 = vmatprep.subr.bf16.mxu0 %v4006
        %5762 = vmatpush2.bf16.msra.mxu0 %v4005
        %5763 = vmatprep.subr.bf16.mxu0 %v3998
        %5764 = vmatpush2.bf16.msra.mxu0 %v3997
        %5765 = vmatprep.subr.bf16.mxu0 %v3990
        %5766 = vmatpush2.bf16.msra.mxu0 %v3989
        %5767 = vmatprep.subr.bf16.mxu0 %v3982
        %5768 = vmatpush2.bf16.msra.mxu0 %v3981
        %5769 = vmatprep.subr.bf16.mxu0 %v3974
        %5770 = vmatpush2.bf16.msra.mxu0 %v3973
        %5771 = vmatprep.subr.bf16.mxu0 %v3966
        %5772 = vmatpush2.bf16.msra.mxu0 %v3965
        %5773 = vmatprep.subr.bf16.mxu0 %v3958
        %5774 = vmatpush2.bf16.msra.mxu0 %v3957
        %5775 = vmatprep.mubr.bf16.mxu0 %v1310
        %5776 = vmatmul.mubr.bf16.gmra.mxu0 %v1309
        %v5777 = vpop.f32.mrf.mxu0
        %v5778 = vadd.f32 %v5737, %v5777
        %v5779 = vpop.f32.mrf.mxu0
        %v5780 = vadd.f32 %v5739, %v5779
        %v5781 = vpop.f32.mrf.mxu0
        %v5782 = vpop.f32.mrf.mxu0
        %5783 = vdwg.mxu0
        %5784 = vmatprep.subr.bf16.mxu0 %v4078
        %5785 = vmatpush1.bf16.msra.mxu0 %v4077
        %5786 = vmatprep.subr.bf16.mxu0 %v4070
        %5787 = vmatpush1.bf16.msra.mxu0 %v4069
        %5788 = vmatprep.subr.bf16.mxu0 %v4062
        %5789 = vmatpush1.bf16.msra.mxu0 %v4061
        %5790 = vmatprep.subr.bf16.mxu0 %v4054
        %5791 = vmatpush1.bf16.msra.mxu0 %v4053
        %5792 = vmatprep.subr.bf16.mxu0 %v4046
        %5793 = vmatpush1.bf16.msra.mxu0 %v4045
        %5794 = vmatprep.subr.bf16.mxu0 %v4038
        %5795 = vmatpush1.bf16.msra.mxu0 %v4037
        %5796 = vmatprep.subr.bf16.mxu0 %v4030
        %5797 = vmatpush1.bf16.msra.mxu0 %v4029
        %5798 = vmatprep.subr.bf16.mxu0 %v4022
        %5799 = vmatpush1.bf16.msra.mxu0 %v4021
        %5800 = vmatprep.subr.bf16.mxu0 %v4142
        %5801 = vmatpush2.bf16.msra.mxu0 %v4141
        %5802 = vmatprep.subr.bf16.mxu0 %v4134
        %5803 = vmatpush2.bf16.msra.mxu0 %v4133
        %5804 = vmatprep.subr.bf16.mxu0 %v4126
        %5805 = vmatpush2.bf16.msra.mxu0 %v4125
        %5806 = vmatprep.subr.bf16.mxu0 %v4118
        %5807 = vmatpush2.bf16.msra.mxu0 %v4117
        %5808 = vmatprep.subr.bf16.mxu0 %v4110
        %5809 = vmatpush2.bf16.msra.mxu0 %v4109
        %5810 = vmatprep.subr.bf16.mxu0 %v4102
        %5811 = vmatpush2.bf16.msra.mxu0 %v4101
        %5812 = vmatprep.subr.bf16.mxu0 %v4094
        %5813 = vmatpush2.bf16.msra.mxu0 %v4093
        %5814 = vmatprep.subr.bf16.mxu0 %v4086
        %5815 = vmatpush2.bf16.msra.mxu0 %v4085
        %5816 = vmatprep.mubr.bf16.mxu0 %v1312
        %5817 = vmatmul.mubr.bf16.gmra.mxu0 %v1311
        %v5818 = vpop.f32.mrf.mxu0
        %v5819 = vadd.f32 %v5778, %v5818
        %v5820 = vpop.f32.mrf.mxu0
        %v5821 = vadd.f32 %v5780, %v5820
        %v5822 = vpop.f32.mrf.mxu0
        %v5823 = vpop.f32.mrf.mxu0
        %5824 = vdwg.mxu0
        %5825 = vmatprep.subr.bf16.mxu0 %v4206
        %5826 = vmatpush1.bf16.msra.mxu0 %v4205
        %5827 = vmatprep.subr.bf16.mxu0 %v4198
        %5828 = vmatpush1.bf16.msra.mxu0 %v4197
        %5829 = vmatprep.subr.bf16.mxu0 %v4190
        %5830 = vmatpush1.bf16.msra.mxu0 %v4189
        %5831 = vmatprep.subr.bf16.mxu0 %v4182
        %5832 = vmatpush1.bf16.msra.mxu0 %v4181
        %5833 = vmatprep.subr.bf16.mxu0 %v4174
        %5834 = vmatpush1.bf16.msra.mxu0 %v4173
        %5835 = vmatprep.subr.bf16.mxu0 %v4166
        %5836 = vmatpush1.bf16.msra.mxu0 %v4165
        %5837 = vmatprep.subr.bf16.mxu0 %v4158
        %5838 = vmatpush1.bf16.msra.mxu0 %v4157
        %5839 = vmatprep.subr.bf16.mxu0 %v4150
        %5840 = vmatpush1.bf16.msra.mxu0 %v4149
        %5841 = vmatprep.subr.bf16.mxu0 %v4270
        %5842 = vmatpush2.bf16.msra.mxu0 %v4269
        %5843 = vmatprep.subr.bf16.mxu0 %v4262
        %5844 = vmatpush2.bf16.msra.mxu0 %v4261
        %5845 = vmatprep.subr.bf16.mxu0 %v4254
        %5846 = vmatpush2.bf16.msra.mxu0 %v4253
        %5847 = vmatprep.subr.bf16.mxu0 %v4246
        %5848 = vmatpush2.bf16.msra.mxu0 %v4245
        %5849 = vmatprep.subr.bf16.mxu0 %v4238
        %5850 = vmatpush2.bf16.msra.mxu0 %v4237
        %5851 = vmatprep.subr.bf16.mxu0 %v4230
        %5852 = vmatpush2.bf16.msra.mxu0 %v4229
        %5853 = vmatprep.subr.bf16.mxu0 %v4222
        %5854 = vmatpush2.bf16.msra.mxu0 %v4221
        %5855 = vmatprep.subr.bf16.mxu0 %v4214
        %5856 = vmatpush2.bf16.msra.mxu0 %v4213
        %5857 = vmatprep.mubr.bf16.mxu0 %v1314
        %5858 = vmatmul.mubr.bf16.gmra.mxu0 %v1313
        %v5859 = vpop.f32.mrf.mxu0
        %v5860 = vadd.f32 %v5819, %v5859
        %v5861 = vpop.f32.mrf.mxu0
        %v5862 = vadd.f32 %v5821, %v5861
        %v5863 = vpop.f32.mrf.mxu0
        %v5864 = vpop.f32.mrf.mxu0
        %5865 = vdwg.mxu0
        %5866 = vmatprep.subr.bf16.mxu0 %v4334
        %5867 = vmatpush1.bf16.msra.mxu0 %v4333
        %5868 = vmatprep.subr.bf16.mxu0 %v4326
        %5869 = vmatpush1.bf16.msra.mxu0 %v4325
        %5870 = vmatprep.subr.bf16.mxu0 %v4318
        %5871 = vmatpush1.bf16.msra.mxu0 %v4317
        %5872 = vmatprep.subr.bf16.mxu0 %v4310
        %5873 = vmatpush1.bf16.msra.mxu0 %v4309
        %5874 = vmatprep.subr.bf16.mxu0 %v4302
        %5875 = vmatpush1.bf16.msra.mxu0 %v4301
        %5876 = vmatprep.subr.bf16.mxu0 %v4294
        %5877 = vmatpush1.bf16.msra.mxu0 %v4293
        %5878 = vmatprep.subr.bf16.mxu0 %v4286
        %5879 = vmatpush1.bf16.msra.mxu0 %v4285
        %5880 = vmatprep.subr.bf16.mxu0 %v4278
        %5881 = vmatpush1.bf16.msra.mxu0 %v4277
        %5882 = vmatprep.subr.bf16.mxu0 %v4398
        %5883 = vmatpush2.bf16.msra.mxu0 %v4397
        %5884 = vmatprep.subr.bf16.mxu0 %v4390
        %5885 = vmatpush2.bf16.msra.mxu0 %v4389
        %5886 = vmatprep.subr.bf16.mxu0 %v4382
        %5887 = vmatpush2.bf16.msra.mxu0 %v4381
        %5888 = vmatprep.subr.bf16.mxu0 %v4374
        %5889 = vmatpush2.bf16.msra.mxu0 %v4373
        %5890 = vmatprep.subr.bf16.mxu0 %v4366
        %5891 = vmatpush2.bf16.msra.mxu0 %v4365
        %5892 = vmatprep.subr.bf16.mxu0 %v4358
        %5893 = vmatpush2.bf16.msra.mxu0 %v4357
        %5894 = vmatprep.subr.bf16.mxu0 %v4350
        %5895 = vmatpush2.bf16.msra.mxu0 %v4349
        %5896 = vmatprep.subr.bf16.mxu0 %v4342
        %5897 = vmatpush2.bf16.msra.mxu0 %v4341
        %5898 = vmatprep.mubr.bf16.mxu0 %v1316
        %5899 = vmatmul.mubr.bf16.gmra.mxu0 %v1315
        %v5900 = vpop.f32.mrf.mxu0
        %v5901 = vadd.f32 %v5860, %v5900
        %v5902 = vpop.f32.mrf.mxu0
        %v5903 = vadd.f32 %v5862, %v5902
        %v5904 = vpop.f32.mrf.mxu0
        %v5905 = vpop.f32.mrf.mxu0
        %5906 = vdwg.mxu0
        %5907 = vmatprep.subr.bf16.mxu0 %v3696
        %5908 = vmatpush1.bf16.msra.mxu0 %v3695
        %5909 = vmatprep.subr.bf16.mxu0 %v3688
        %5910 = vmatpush1.bf16.msra.mxu0 %v3687
        %5911 = vmatprep.subr.bf16.mxu0 %v3680
        %5912 = vmatpush1.bf16.msra.mxu0 %v3679
        %5913 = vmatprep.subr.bf16.mxu0 %v3672
        %5914 = vmatpush1.bf16.msra.mxu0 %v3671
        %5915 = vmatprep.subr.bf16.mxu0 %v3664
        %5916 = vmatpush1.bf16.msra.mxu0 %v3663
        %5917 = vmatprep.subr.bf16.mxu0 %v3656
        %5918 = vmatpush1.bf16.msra.mxu0 %v3655
        %5919 = vmatprep.subr.bf16.mxu0 %v3648
        %5920 = vmatpush1.bf16.msra.mxu0 %v3647
        %5921 = vmatprep.subr.bf16.mxu0 %v3640
        %5922 = vmatpush1.bf16.msra.mxu0 %v3639
        %5923 = vmatprep.subr.bf16.mxu0 %v3760
        %5924 = vmatpush2.bf16.msra.mxu0 %v3759
        %5925 = vmatprep.subr.bf16.mxu0 %v3752
        %5926 = vmatpush2.bf16.msra.mxu0 %v3751
        %5927 = vmatprep.subr.bf16.mxu0 %v3744
        %5928 = vmatpush2.bf16.msra.mxu0 %v3743
        %5929 = vmatprep.subr.bf16.mxu0 %v3736
        %5930 = vmatpush2.bf16.msra.mxu0 %v3735
        %5931 = vmatprep.subr.bf16.mxu0 %v3728
        %5932 = vmatpush2.bf16.msra.mxu0 %v3727
        %5933 = vmatprep.subr.bf16.mxu0 %v3720
        %5934 = vmatpush2.bf16.msra.mxu0 %v3719
        %5935 = vmatprep.subr.bf16.mxu0 %v3712
        %5936 = vmatpush2.bf16.msra.mxu0 %v3711
        %5937 = vmatprep.subr.bf16.mxu0 %v3704
        %5938 = vmatpush2.bf16.msra.mxu0 %v3703
        %5939 = vmatprep.mubr.bf16.mxu0 %v1306
        %5940 = vmatmul.mubr.bf16.gmra.mxu0 %v1305
        %v5941 = vpop.f32.mrf.mxu0
        %v5942 = vadd.f32 0.0, %v5941
        %v5943 = vpop.f32.mrf.mxu0
        %v5944 = vadd.f32 0.0, %v5943
        %v5945 = vpop.f32.mrf.mxu0
        %v5946 = vpop.f32.mrf.mxu0
        %5947 = vdwg.mxu0
        %5948 = vmatprep.subr.bf16.mxu0 %v3824
        %5949 = vmatpush1.bf16.msra.mxu0 %v3823
        %5950 = vmatprep.subr.bf16.mxu0 %v3816
        %5951 = vmatpush1.bf16.msra.mxu0 %v3815
        %5952 = vmatprep.subr.bf16.mxu0 %v3808
        %5953 = vmatpush1.bf16.msra.mxu0 %v3807
        %5954 = vmatprep.subr.bf16.mxu0 %v3800
        %5955 = vmatpush1.bf16.msra.mxu0 %v3799
        %5956 = vmatprep.subr.bf16.mxu0 %v3792
        %5957 = vmatpush1.bf16.msra.mxu0 %v3791
        %5958 = vmatprep.subr.bf16.mxu0 %v3784
        %5959 = vmatpush1.bf16.msra.mxu0 %v3783
        %5960 = vmatprep.subr.bf16.mxu0 %v3776
        %5961 = vmatpush1.bf16.msra.mxu0 %v3775
        %5962 = vmatprep.subr.bf16.mxu0 %v3768
        %5963 = vmatpush1.bf16.msra.mxu0 %v3767
        %5964 = vmatprep.subr.bf16.mxu0 %v3888
        %5965 = vmatpush2.bf16.msra.mxu0 %v3887
        %5966 = vmatprep.subr.bf16.mxu0 %v3880
        %5967 = vmatpush2.bf16.msra.mxu0 %v3879
        %5968 = vmatprep.subr.bf16.mxu0 %v3872
        %5969 = vmatpush2.bf16.msra.mxu0 %v3871
        %5970 = vmatprep.subr.bf16.mxu0 %v3864
        %5971 = vmatpush2.bf16.msra.mxu0 %v3863
        %5972 = vmatprep.subr.bf16.mxu0 %v3856
        %5973 = vmatpush2.bf16.msra.mxu0 %v3855
        %5974 = vmatprep.subr.bf16.mxu0 %v3848
        %5975 = vmatpush2.bf16.msra.mxu0 %v3847
        %5976 = vmatprep.subr.bf16.mxu0 %v3840
        %5977 = vmatpush2.bf16.msra.mxu0 %v3839
        %5978 = vmatprep.subr.bf16.mxu0 %v3832
        %5979 = vmatpush2.bf16.msra.mxu0 %v3831
        %5980 = vmatprep.mubr.bf16.mxu0 %v1308
        %5981 = vmatmul.mubr.bf16.gmra.mxu0 %v1307
        %v5982 = vpop.f32.mrf.mxu0
        %v5983 = vadd.f32 %v5942, %v5982
        %v5984 = vpop.f32.mrf.mxu0
        %v5985 = vadd.f32 %v5944, %v5984
        %v5986 = vpop.f32.mrf.mxu0
        %v5987 = vpop.f32.mrf.mxu0
        %5988 = vdwg.mxu0
        %5989 = vmatprep.subr.bf16.mxu0 %v3952
        %5990 = vmatpush1.bf16.msra.mxu0 %v3951
        %5991 = vmatprep.subr.bf16.mxu0 %v3944
        %5992 = vmatpush1.bf16.msra.mxu0 %v3943
        %5993 = vmatprep.subr.bf16.mxu0 %v3936
        %5994 = vmatpush1.bf16.msra.mxu0 %v3935
        %5995 = vmatprep.subr.bf16.mxu0 %v3928
        %5996 = vmatpush1.bf16.msra.mxu0 %v3927
        %5997 = vmatprep.subr.bf16.mxu0 %v3920
        %5998 = vmatpush1.bf16.msra.mxu0 %v3919
        %5999 = vmatprep.subr.bf16.mxu0 %v3912
        %6000 = vmatpush1.bf16.msra.mxu0 %v3911
        %6001 = vmatprep.subr.bf16.mxu0 %v3904
        %6002 = vmatpush1.bf16.msra.mxu0 %v3903
        %6003 = vmatprep.subr.bf16.mxu0 %v3896
        %6004 = vmatpush1.bf16.msra.mxu0 %v3895
        %6005 = vmatprep.subr.bf16.mxu0 %v4016
        %6006 = vmatpush2.bf16.msra.mxu0 %v4015
        %6007 = vmatprep.subr.bf16.mxu0 %v4008
        %6008 = vmatpush2.bf16.msra.mxu0 %v4007
        %6009 = vmatprep.subr.bf16.mxu0 %v4000
        %6010 = vmatpush2.bf16.msra.mxu0 %v3999
        %6011 = vmatprep.subr.bf16.mxu0 %v3992
        %6012 = vmatpush2.bf16.msra.mxu0 %v3991
        %6013 = vmatprep.subr.bf16.mxu0 %v3984
        %6014 = vmatpush2.bf16.msra.mxu0 %v3983
        %6015 = vmatprep.subr.bf16.mxu0 %v3976
        %6016 = vmatpush2.bf16.msra.mxu0 %v3975
        %6017 = vmatprep.subr.bf16.mxu0 %v3968
        %6018 = vmatpush2.bf16.msra.mxu0 %v3967
        %6019 = vmatprep.subr.bf16.mxu0 %v3960
        %6020 = vmatpush2.bf16.msra.mxu0 %v3959
        %6021 = vmatprep.mubr.bf16.mxu0 %v1310
        %6022 = vmatmul.mubr.bf16.gmra.mxu0 %v1309
        %v6023 = vpop.f32.mrf.mxu0
        %v6024 = vadd.f32 %v5983, %v6023
        %v6025 = vpop.f32.mrf.mxu0
        %v6026 = vadd.f32 %v5985, %v6025
        %v6027 = vpop.f32.mrf.mxu0
        %v6028 = vpop.f32.mrf.mxu0
        %6029 = vdwg.mxu0
        %6030 = vmatprep.subr.bf16.mxu0 %v4080
        %6031 = vmatpush1.bf16.msra.mxu0 %v4079
        %6032 = vmatprep.subr.bf16.mxu0 %v4072
        %6033 = vmatpush1.bf16.msra.mxu0 %v4071
        %6034 = vmatprep.subr.bf16.mxu0 %v4064
        %6035 = vmatpush1.bf16.msra.mxu0 %v4063
        %6036 = vmatprep.subr.bf16.mxu0 %v4056
        %6037 = vmatpush1.bf16.msra.mxu0 %v4055
        %6038 = vmatprep.subr.bf16.mxu0 %v4048
        %6039 = vmatpush1.bf16.msra.mxu0 %v4047
        %6040 = vmatprep.subr.bf16.mxu0 %v4040
        %6041 = vmatpush1.bf16.msra.mxu0 %v4039
        %6042 = vmatprep.subr.bf16.mxu0 %v4032
        %6043 = vmatpush1.bf16.msra.mxu0 %v4031
        %6044 = vmatprep.subr.bf16.mxu0 %v4024
        %6045 = vmatpush1.bf16.msra.mxu0 %v4023
        %6046 = vmatprep.subr.bf16.mxu0 %v4144
        %6047 = vmatpush2.bf16.msra.mxu0 %v4143
        %6048 = vmatprep.subr.bf16.mxu0 %v4136
        %6049 = vmatpush2.bf16.msra.mxu0 %v4135
        %6050 = vmatprep.subr.bf16.mxu0 %v4128
        %6051 = vmatpush2.bf16.msra.mxu0 %v4127
        %6052 = vmatprep.subr.bf16.mxu0 %v4120
        %6053 = vmatpush2.bf16.msra.mxu0 %v4119
        %6054 = vmatprep.subr.bf16.mxu0 %v4112
        %6055 = vmatpush2.bf16.msra.mxu0 %v4111
        %6056 = vmatprep.subr.bf16.mxu0 %v4104
        %6057 = vmatpush2.bf16.msra.mxu0 %v4103
        %6058 = vmatprep.subr.bf16.mxu0 %v4096
        %6059 = vmatpush2.bf16.msra.mxu0 %v4095
        %6060 = vmatprep.subr.bf16.mxu0 %v4088
        %6061 = vmatpush2.bf16.msra.mxu0 %v4087
        %6062 = vmatprep.mubr.bf16.mxu0 %v1312
        %6063 = vmatmul.mubr.bf16.gmra.mxu0 %v1311
        %v6064 = vpop.f32.mrf.mxu0
        %v6065 = vadd.f32 %v6024, %v6064
        %v6066 = vpop.f32.mrf.mxu0
        %v6067 = vadd.f32 %v6026, %v6066
        %v6068 = vpop.f32.mrf.mxu0
        %v6069 = vpop.f32.mrf.mxu0
        %6070 = vdwg.mxu0
        %6071 = vmatprep.subr.bf16.mxu0 %v4208
        %6072 = vmatpush1.bf16.msra.mxu0 %v4207
        %6073 = vmatprep.subr.bf16.mxu0 %v4200
        %6074 = vmatpush1.bf16.msra.mxu0 %v4199
        %6075 = vmatprep.subr.bf16.mxu0 %v4192
        %6076 = vmatpush1.bf16.msra.mxu0 %v4191
        %6077 = vmatprep.subr.bf16.mxu0 %v4184
        %6078 = vmatpush1.bf16.msra.mxu0 %v4183
        %6079 = vmatprep.subr.bf16.mxu0 %v4176
        %6080 = vmatpush1.bf16.msra.mxu0 %v4175
        %6081 = vmatprep.subr.bf16.mxu0 %v4168
        %6082 = vmatpush1.bf16.msra.mxu0 %v4167
        %6083 = vmatprep.subr.bf16.mxu0 %v4160
        %6084 = vmatpush1.bf16.msra.mxu0 %v4159
        %6085 = vmatprep.subr.bf16.mxu0 %v4152
        %6086 = vmatpush1.bf16.msra.mxu0 %v4151
        %6087 = vmatprep.subr.bf16.mxu0 %v4272
        %6088 = vmatpush2.bf16.msra.mxu0 %v4271
        %6089 = vmatprep.subr.bf16.mxu0 %v4264
        %6090 = vmatpush2.bf16.msra.mxu0 %v4263
        %6091 = vmatprep.subr.bf16.mxu0 %v4256
        %6092 = vmatpush2.bf16.msra.mxu0 %v4255
        %6093 = vmatprep.subr.bf16.mxu0 %v4248
        %6094 = vmatpush2.bf16.msra.mxu0 %v4247
        %6095 = vmatprep.subr.bf16.mxu0 %v4240
        %6096 = vmatpush2.bf16.msra.mxu0 %v4239
        %6097 = vmatprep.subr.bf16.mxu0 %v4232
        %6098 = vmatpush2.bf16.msra.mxu0 %v4231
        %6099 = vmatprep.subr.bf16.mxu0 %v4224
        %6100 = vmatpush2.bf16.msra.mxu0 %v4223
        %6101 = vmatprep.subr.bf16.mxu0 %v4216
        %6102 = vmatpush2.bf16.msra.mxu0 %v4215
        %6103 = vmatprep.mubr.bf16.mxu0 %v1314
        %6104 = vmatmul.mubr.bf16.gmra.mxu0 %v1313
        %v6105 = vpop.f32.mrf.mxu0
        %v6106 = vadd.f32 %v6065, %v6105
        %v6107 = vpop.f32.mrf.mxu0
        %v6108 = vadd.f32 %v6067, %v6107
        %v6109 = vpop.f32.mrf.mxu0
        %v6110 = vpop.f32.mrf.mxu0
        %6111 = vdwg.mxu0
        %6112 = vmatprep.subr.bf16.mxu0 %v4336
        %6113 = vmatpush1.bf16.msra.mxu0 %v4335
        %6114 = vmatprep.subr.bf16.mxu0 %v4328
        %6115 = vmatpush1.bf16.msra.mxu0 %v4327
        %6116 = vmatprep.subr.bf16.mxu0 %v4320
        %6117 = vmatpush1.bf16.msra.mxu0 %v4319
        %6118 = vmatprep.subr.bf16.mxu0 %v4312
        %6119 = vmatpush1.bf16.msra.mxu0 %v4311
        %6120 = vmatprep.subr.bf16.mxu0 %v4304
        %6121 = vmatpush1.bf16.msra.mxu0 %v4303
        %6122 = vmatprep.subr.bf16.mxu0 %v4296
        %6123 = vmatpush1.bf16.msra.mxu0 %v4295
        %6124 = vmatprep.subr.bf16.mxu0 %v4288
        %6125 = vmatpush1.bf16.msra.mxu0 %v4287
        %6126 = vmatprep.subr.bf16.mxu0 %v4280
        %6127 = vmatpush1.bf16.msra.mxu0 %v4279
        %6128 = vmatprep.subr.bf16.mxu0 %v4400
        %6129 = vmatpush2.bf16.msra.mxu0 %v4399
        %6130 = vmatprep.subr.bf16.mxu0 %v4392
        %6131 = vmatpush2.bf16.msra.mxu0 %v4391
        %6132 = vmatprep.subr.bf16.mxu0 %v4384
        %6133 = vmatpush2.bf16.msra.mxu0 %v4383
        %6134 = vmatprep.subr.bf16.mxu0 %v4376
        %6135 = vmatpush2.bf16.msra.mxu0 %v4375
        %6136 = vmatprep.subr.bf16.mxu0 %v4368
        %6137 = vmatpush2.bf16.msra.mxu0 %v4367
        %6138 = vmatprep.subr.bf16.mxu0 %v4360
        %6139 = vmatpush2.bf16.msra.mxu0 %v4359
        %6140 = vmatprep.subr.bf16.mxu0 %v4352
        %6141 = vmatpush2.bf16.msra.mxu0 %v4351
        %6142 = vmatprep.subr.bf16.mxu0 %v4344
        %6143 = vmatpush2.bf16.msra.mxu0 %v4343
        %6144 = vmatprep.mubr.bf16.mxu0 %v1316
        %6145 = vmatmul.mubr.bf16.gmra.mxu0 %v1315
        %v6146 = vpop.f32.mrf.mxu0
        %v6147 = vadd.f32 %v6106, %v6146
        %v6148 = vpop.f32.mrf.mxu0
        %v6149 = vadd.f32 %v6108, %v6148
        %v6150 = vpop.f32.mrf.mxu0
        %v6151 = vpop.f32.mrf.mxu0
        %6152 = vdwg.mxu0
        %v6153 = vadd.f32 %v511, %v5409
        %v6154 = vadd.f32 %v512, %v5411
        %v6155 = vadd.f32 %v513, %v5655
        %v6156 = vadd.f32 %v514, %v5657
        %v6157 = vadd.f32 %v515, %v5901
        %v6158 = vadd.f32 %v516, %v5903
        %v6159 = vadd.f32 %v517, %v6147
        %v6160 = vadd.f32 %v518, %v6149
        %6161 = vst [vmem:[#allocation2] sm:$0xff] %v6153
        %6162 = vst [vmem:[#allocation2 + $0x8] sm:$0xff] %v6154
        %6163 = vst [vmem:[#allocation2 + $0x10] sm:$0xff] %v6155
        %6164 = vst [vmem:[#allocation2 + $0x18] sm:$0xff] %v6156
        %6165 = vst [vmem:[#allocation2 + $0x20] sm:$0xff] %v6157
        %6166 = vst [vmem:[#allocation2 + $0x28] sm:$0xff] %v6158
        %6167 = vst [vmem:[#allocation2 + $0x30] sm:$0xff] %v6159
        %6168 = vst [vmem:[#allocation2 + $0x38] sm:$0xff] %v6160
        %p6169 = scmp.eq.s32.totalorder %s30, 1
        // Predicated region
        $region101: #{fcn_forward.1} parent=63 // pred_check
          %p6170 = pneg %p6169
        $region102: #{fcn_forward.1} parent=63 // pred_check_branch
          %6172 = sbr.rel (%p6170) target = $region104
        $region103: #{fcn_forward.1} parent=63 // pred_region
          %v6173 = vld [vmem:[#allocation2] sm:$0xff]
          %v6174 = vld [vmem:[#allocation2 + $0x8] sm:$0xff]
          %v6175 = vld [vmem:[#allocation2 + $0x10] sm:$0xff]
          %v6176 = vld [vmem:[#allocation2 + $0x18] sm:$0xff]
          %v6177 = vld [vmem:[#allocation2 + $0x20] sm:$0xff]
          %v6178 = vld [vmem:[#allocation2 + $0x28] sm:$0xff]
          %v6179 = vld [vmem:[#allocation2 + $0x30] sm:$0xff]
          %v6180 = vld [vmem:[#allocation2 + $0x38] sm:$0xff]
          %v6181 = vld [vmem:[#allocation6] sm:$0xff]
          %v6183 = vlaneseq
          %v6184 = vshrl.u32 %v6183, 7
          %v6185 = vsub.s32 0, %v6184
          %v6186 = vrot.slane %v6181, %v6185
          %v6187 = vlaneseq
          %v6188 = vshrl.u32 %v6187, 7
          %v6189 = vsub.s32 1, %v6188
          %v6190 = vrot.slane %v6181, %v6189
          %v6191 = vlaneseq
          %v6192 = vshrl.u32 %v6191, 7
          %v6193 = vsub.s32 2, %v6192
          %v6194 = vrot.slane %v6181, %v6193
          %v6195 = vlaneseq
          %v6196 = vshrl.u32 %v6195, 7
          %v6197 = vsub.s32 3, %v6196
          %v6198 = vrot.slane %v6181, %v6197
          %v6199 = vlaneseq
          %v6200 = vshrl.u32 %v6199, 7
          %v6201 = vsub.s32 4, %v6200
          %v6202 = vrot.slane %v6181, %v6201
          %v6203 = vlaneseq
          %v6204 = vshrl.u32 %v6203, 7
          %v6205 = vsub.s32 5, %v6204
          %v6206 = vrot.slane %v6181, %v6205
          %v6207 = vlaneseq
          %v6208 = vshrl.u32 %v6207, 7
          %v6209 = vsub.s32 6, %v6208
          %v6210 = vrot.slane %v6181, %v6209
          %v6211 = vlaneseq
          %v6212 = vshrl.u32 %v6211, 7
          %v6213 = vsub.s32 7, %v6212
          %v6214 = vrot.slane %v6181, %v6213
          %v6223 = vadd.f32 %v6173, %v6186
          %v6224 = vadd.f32 %v6174, %v6190
          %v6225 = vadd.f32 %v6175, %v6194
          %v6226 = vadd.f32 %v6176, %v6198
          %v6227 = vadd.f32 %v6177, %v6202
          %v6228 = vadd.f32 %v6178, %v6206
          %v6229 = vadd.f32 %v6179, %v6210
          %v6230 = vadd.f32 %v6180, %v6214
          %v6231 = vpack.c.bf16 %v6223, %v6223
          %v6232 = vpack.c.bf16 %v6224, %v6224
          %v6233 = vpack.c.bf16 %v6225, %v6225
          %v6234 = vpack.c.bf16 %v6226, %v6226
          %v6235 = vpack.c.bf16 %v6227, %v6227
          %v6236 = vpack.c.bf16 %v6228, %v6228
          %v6237 = vpack.c.bf16 %v6229, %v6229
          %v6238 = vpack.c.bf16 %v6230, %v6230
          %v6239 = vld [vmem:[#allocation8] sm:$0xff]
          %v6240 = vld [vmem:[#allocation8 + $0x8] sm:$0xff]
          %v6241 = vld [vmem:[#allocation8 + $0x10] sm:$0xff]
          %v6242 = vld [vmem:[#allocation8 + $0x18] sm:$0xff]
          %v6243 = vld [vmem:[#allocation8 + $0x20] sm:$0xff]
          %v6244 = vld [vmem:[#allocation8 + $0x28] sm:$0xff]
          %v6245 = vld [vmem:[#allocation8 + $0x30] sm:$0xff]
          %v6246 = vld [vmem:[#allocation8 + $0x38] sm:$0xff]
          %v6247 = vld [vmem:[#allocation8 + $0x40] sm:$0xff]
          %v6248 = vld [vmem:[#allocation8 + $0x48] sm:$0xff]
          %v6249 = vld [vmem:[#allocation8 + $0x50] sm:$0xff]
          %v6250 = vld [vmem:[#allocation8 + $0x58] sm:$0xff]
          %v6251 = vld [vmem:[#allocation8 + $0x60] sm:$0xff]
          %v6252 = vld [vmem:[#allocation8 + $0x68] sm:$0xff]
          %v6253 = vld [vmem:[#allocation8 + $0x70] sm:$0xff]
          %v6254 = vld [vmem:[#allocation8 + $0x78] sm:$0xff]
          %v6255 = vld [vmem:[#allocation8 + $0x80] sm:$0xff]
          %v6256 = vld [vmem:[#allocation8 + $0x88] sm:$0xff]
          %v6257 = vld [vmem:[#allocation8 + $0x90] sm:$0xff]
          %v6258 = vld [vmem:[#allocation8 + $0x98] sm:$0xff]
          %v6259 = vld [vmem:[#allocation8 + $0xa0] sm:$0xff]
          %v6260 = vld [vmem:[#allocation8 + $0xa8] sm:$0xff]
          %v6261 = vld [vmem:[#allocation8 + $0xb0] sm:$0xff]
          %v6262 = vld [vmem:[#allocation8 + $0xb8] sm:$0xff]
          %v6263 = vld [vmem:[#allocation8 + $0xc0] sm:$0xff]
          %v6264 = vld [vmem:[#allocation8 + $0xc8] sm:$0xff]
          %v6265 = vld [vmem:[#allocation8 + $0xd0] sm:$0xff]
          %v6266 = vld [vmem:[#allocation8 + $0xd8] sm:$0xff]
          %v6267 = vld [vmem:[#allocation8 + $0xe0] sm:$0xff]
          %v6268 = vld [vmem:[#allocation8 + $0xe8] sm:$0xff]
          %v6269 = vld [vmem:[#allocation8 + $0xf0] sm:$0xff]
          %v6270 = vld [vmem:[#allocation8 + $0xf8] sm:$0xff]
          %v6271 = vld [vmem:[#allocation8 + $0x100] sm:$0xff]
          %v6272 = vld [vmem:[#allocation8 + $0x108] sm:$0xff]
          %v6273 = vld [vmem:[#allocation8 + $0x110] sm:$0xff]
          %v6274 = vld [vmem:[#allocation8 + $0x118] sm:$0xff]
          %v6275 = vld [vmem:[#allocation8 + $0x120] sm:$0xff]
          %v6276 = vld [vmem:[#allocation8 + $0x128] sm:$0xff]
          %v6277 = vld [vmem:[#allocation8 + $0x130] sm:$0xff]
          %v6278 = vld [vmem:[#allocation8 + $0x138] sm:$0xff]
          %v6279 = vld [vmem:[#allocation8 + $0x140] sm:$0xff]
          %v6280 = vld [vmem:[#allocation8 + $0x148] sm:$0xff]
          %v6281 = vld [vmem:[#allocation8 + $0x150] sm:$0xff]
          %v6282 = vld [vmem:[#allocation8 + $0x158] sm:$0xff]
          %v6283 = vld [vmem:[#allocation8 + $0x160] sm:$0xff]
          %v6284 = vld [vmem:[#allocation8 + $0x168] sm:$0xff]
          %v6285 = vld [vmem:[#allocation8 + $0x170] sm:$0xff]
          %v6286 = vld [vmem:[#allocation8 + $0x178] sm:$0xff]
          %v6287 = vld [vmem:[#allocation8 + $0x180] sm:$0xff]
          %v6288 = vld [vmem:[#allocation8 + $0x188] sm:$0xff]
          %v6289 = vld [vmem:[#allocation8 + $0x190] sm:$0xff]
          %v6290 = vld [vmem:[#allocation8 + $0x198] sm:$0xff]
          %v6291 = vld [vmem:[#allocation8 + $0x1a0] sm:$0xff]
          %v6292 = vld [vmem:[#allocation8 + $0x1a8] sm:$0xff]
          %v6293 = vld [vmem:[#allocation8 + $0x1b0] sm:$0xff]
          %v6294 = vld [vmem:[#allocation8 + $0x1b8] sm:$0xff]
          %v6295 = vld [vmem:[#allocation8 + $0x1c0] sm:$0xff]
          %v6296 = vld [vmem:[#allocation8 + $0x1c8] sm:$0xff]
          %v6297 = vld [vmem:[#allocation8 + $0x1d0] sm:$0xff]
          %v6298 = vld [vmem:[#allocation8 + $0x1d8] sm:$0xff]
          %v6299 = vld [vmem:[#allocation8 + $0x1e0] sm:$0xff]
          %v6300 = vld [vmem:[#allocation8 + $0x1e8] sm:$0xff]
          %v6301 = vld [vmem:[#allocation8 + $0x1f0] sm:$0xff]
          %v6302 = vld [vmem:[#allocation8 + $0x1f8] sm:$0xff]
          %v6303 = vld [vmem:[#allocation8 + $0x200] sm:$0xff]
          %v6304 = vld [vmem:[#allocation8 + $0x208] sm:$0xff]
          %v6305 = vld [vmem:[#allocation8 + $0x210] sm:$0xff]
          %v6306 = vld [vmem:[#allocation8 + $0x218] sm:$0xff]
          %v6307 = vld [vmem:[#allocation8 + $0x220] sm:$0xff]
          %v6308 = vld [vmem:[#allocation8 + $0x228] sm:$0xff]
          %v6309 = vld [vmem:[#allocation8 + $0x230] sm:$0xff]
          %v6310 = vld [vmem:[#allocation8 + $0x238] sm:$0xff]
          %v6311 = vld [vmem:[#allocation8 + $0x240] sm:$0xff]
          %v6312 = vld [vmem:[#allocation8 + $0x248] sm:$0xff]
          %v6313 = vld [vmem:[#allocation8 + $0x250] sm:$0xff]
          %v6314 = vld [vmem:[#allocation8 + $0x258] sm:$0xff]
          %v6315 = vld [vmem:[#allocation8 + $0x260] sm:$0xff]
          %v6316 = vld [vmem:[#allocation8 + $0x268] sm:$0xff]
          %v6317 = vld [vmem:[#allocation8 + $0x270] sm:$0xff]
          %v6318 = vld [vmem:[#allocation8 + $0x278] sm:$0xff]
          %v6319 = vld [vmem:[#allocation8 + $0x280] sm:$0xff]
          %v6320 = vld [vmem:[#allocation8 + $0x288] sm:$0xff]
          %v6321 = vld [vmem:[#allocation8 + $0x290] sm:$0xff]
          %v6322 = vld [vmem:[#allocation8 + $0x298] sm:$0xff]
          %v6323 = vld [vmem:[#allocation8 + $0x2a0] sm:$0xff]
          %v6324 = vld [vmem:[#allocation8 + $0x2a8] sm:$0xff]
          %v6325 = vld [vmem:[#allocation8 + $0x2b0] sm:$0xff]
          %v6326 = vld [vmem:[#allocation8 + $0x2b8] sm:$0xff]
          %v6327 = vld [vmem:[#allocation8 + $0x2c0] sm:$0xff]
          %v6328 = vld [vmem:[#allocation8 + $0x2c8] sm:$0xff]
          %v6329 = vld [vmem:[#allocation8 + $0x2d0] sm:$0xff]
          %v6330 = vld [vmem:[#allocation8 + $0x2d8] sm:$0xff]
          %v6331 = vld [vmem:[#allocation8 + $0x2e0] sm:$0xff]
          %v6332 = vld [vmem:[#allocation8 + $0x2e8] sm:$0xff]
          %v6333 = vld [vmem:[#allocation8 + $0x2f0] sm:$0xff]
          %v6334 = vld [vmem:[#allocation8 + $0x2f8] sm:$0xff]
          %v6335 = vld [vmem:[#allocation8 + $0x300] sm:$0xff]
          %v6336 = vld [vmem:[#allocation8 + $0x308] sm:$0xff]
          %v6337 = vld [vmem:[#allocation8 + $0x310] sm:$0xff]
          %v6338 = vld [vmem:[#allocation8 + $0x318] sm:$0xff]
          %v6339 = vld [vmem:[#allocation8 + $0x320] sm:$0xff]
          %v6340 = vld [vmem:[#allocation8 + $0x328] sm:$0xff]
          %v6341 = vld [vmem:[#allocation8 + $0x330] sm:$0xff]
          %v6342 = vld [vmem:[#allocation8 + $0x338] sm:$0xff]
          %v6343 = vld [vmem:[#allocation8 + $0x340] sm:$0xff]
          %v6344 = vld [vmem:[#allocation8 + $0x348] sm:$0xff]
          %v6345 = vld [vmem:[#allocation8 + $0x350] sm:$0xff]
          %v6346 = vld [vmem:[#allocation8 + $0x358] sm:$0xff]
          %v6347 = vld [vmem:[#allocation8 + $0x360] sm:$0xff]
          %v6348 = vld [vmem:[#allocation8 + $0x368] sm:$0xff]
          %v6349 = vld [vmem:[#allocation8 + $0x370] sm:$0xff]
          %v6350 = vld [vmem:[#allocation8 + $0x378] sm:$0xff]
          %v6351 = vld [vmem:[#allocation8 + $0x380] sm:$0xff]
          %v6352 = vld [vmem:[#allocation8 + $0x388] sm:$0xff]
          %v6353 = vld [vmem:[#allocation8 + $0x390] sm:$0xff]
          %v6354 = vld [vmem:[#allocation8 + $0x398] sm:$0xff]
          %v6355 = vld [vmem:[#allocation8 + $0x3a0] sm:$0xff]
          %v6356 = vld [vmem:[#allocation8 + $0x3a8] sm:$0xff]
          %v6357 = vld [vmem:[#allocation8 + $0x3b0] sm:$0xff]
          %v6358 = vld [vmem:[#allocation8 + $0x3b8] sm:$0xff]
          %v6359 = vld [vmem:[#allocation8 + $0x3c0] sm:$0xff]
          %v6360 = vld [vmem:[#allocation8 + $0x3c8] sm:$0xff]
          %v6361 = vld [vmem:[#allocation8 + $0x3d0] sm:$0xff]
          %v6362 = vld [vmem:[#allocation8 + $0x3d8] sm:$0xff]
          %v6363 = vld [vmem:[#allocation8 + $0x3e0] sm:$0xff]
          %v6364 = vld [vmem:[#allocation8 + $0x3e8] sm:$0xff]
          %v6365 = vld [vmem:[#allocation8 + $0x3f0] sm:$0xff]
          %v6366 = vld [vmem:[#allocation8 + $0x3f8] sm:$0xff]
          %v6367 = vld [vmem:[#allocation9] sm:$0x3]
          %v6369 = vlaneseq
          %v6370 = vshrl.u32 %v6369, 7
          %v6371 = vsub.s32 0, %v6370
          %v6372 = vrot.slane %v6367, %v6371
          %v6373 = vlaneseq
          %v6374 = vshrl.u32 %v6373, 7
          %v6375 = vsub.s32 1, %v6374
          %v6376 = vrot.slane %v6367, %v6375
          %v6507 = vunpack.c.l.b16 %v6239
          %v6508 = vunpack.c.h.b16 %v6239
          %v6509 = vunpack.c.l.b16 %v6240
          %v6510 = vunpack.c.h.b16 %v6240
          %v6511 = vunpack.c.l.b16 %v6241
          %v6512 = vunpack.c.h.b16 %v6241
          %v6513 = vunpack.c.l.b16 %v6242
          %v6514 = vunpack.c.h.b16 %v6242
          %v6515 = vunpack.c.l.b16 %v6243
          %v6516 = vunpack.c.h.b16 %v6243
          %v6517 = vunpack.c.l.b16 %v6244
          %v6518 = vunpack.c.h.b16 %v6244
          %v6519 = vunpack.c.l.b16 %v6245
          %v6520 = vunpack.c.h.b16 %v6245
          %v6521 = vunpack.c.l.b16 %v6246
          %v6522 = vunpack.c.h.b16 %v6246
          %v6523 = vunpack.c.l.b16 %v6247
          %v6524 = vunpack.c.h.b16 %v6247
          %v6525 = vunpack.c.l.b16 %v6248
          %v6526 = vunpack.c.h.b16 %v6248
          %v6527 = vunpack.c.l.b16 %v6249
          %v6528 = vunpack.c.h.b16 %v6249
          %v6529 = vunpack.c.l.b16 %v6250
          %v6530 = vunpack.c.h.b16 %v6250
          %v6531 = vunpack.c.l.b16 %v6251
          %v6532 = vunpack.c.h.b16 %v6251
          %v6533 = vunpack.c.l.b16 %v6252
          %v6534 = vunpack.c.h.b16 %v6252
          %v6535 = vunpack.c.l.b16 %v6253
          %v6536 = vunpack.c.h.b16 %v6253
          %v6537 = vunpack.c.l.b16 %v6254
          %v6538 = vunpack.c.h.b16 %v6254
          %v6539 = vunpack.c.l.b16 %v6255
          %v6540 = vunpack.c.h.b16 %v6255
          %v6541 = vunpack.c.l.b16 %v6256
          %v6542 = vunpack.c.h.b16 %v6256
          %v6543 = vunpack.c.l.b16 %v6257
          %v6544 = vunpack.c.h.b16 %v6257
          %v6545 = vunpack.c.l.b16 %v6258
          %v6546 = vunpack.c.h.b16 %v6258
          %v6547 = vunpack.c.l.b16 %v6259
          %v6548 = vunpack.c.h.b16 %v6259
          %v6549 = vunpack.c.l.b16 %v6260
          %v6550 = vunpack.c.h.b16 %v6260
          %v6551 = vunpack.c.l.b16 %v6261
          %v6552 = vunpack.c.h.b16 %v6261
          %v6553 = vunpack.c.l.b16 %v6262
          %v6554 = vunpack.c.h.b16 %v6262
          %v6555 = vunpack.c.l.b16 %v6263
          %v6556 = vunpack.c.h.b16 %v6263
          %v6557 = vunpack.c.l.b16 %v6264
          %v6558 = vunpack.c.h.b16 %v6264
          %v6559 = vunpack.c.l.b16 %v6265
          %v6560 = vunpack.c.h.b16 %v6265
          %v6561 = vunpack.c.l.b16 %v6266
          %v6562 = vunpack.c.h.b16 %v6266
          %v6563 = vunpack.c.l.b16 %v6267
          %v6564 = vunpack.c.h.b16 %v6267
          %v6565 = vunpack.c.l.b16 %v6268
          %v6566 = vunpack.c.h.b16 %v6268
          %v6567 = vunpack.c.l.b16 %v6269
          %v6568 = vunpack.c.h.b16 %v6269
          %v6569 = vunpack.c.l.b16 %v6270
          %v6570 = vunpack.c.h.b16 %v6270
          %v6571 = vunpack.c.l.b16 %v6271
          %v6572 = vunpack.c.h.b16 %v6271
          %v6573 = vunpack.c.l.b16 %v6272
          %v6574 = vunpack.c.h.b16 %v6272
          %v6575 = vunpack.c.l.b16 %v6273
          %v6576 = vunpack.c.h.b16 %v6273
          %v6577 = vunpack.c.l.b16 %v6274
          %v6578 = vunpack.c.h.b16 %v6274
          %v6579 = vunpack.c.l.b16 %v6275
          %v6580 = vunpack.c.h.b16 %v6275
          %v6581 = vunpack.c.l.b16 %v6276
          %v6582 = vunpack.c.h.b16 %v6276
          %v6583 = vunpack.c.l.b16 %v6277
          %v6584 = vunpack.c.h.b16 %v6277
          %v6585 = vunpack.c.l.b16 %v6278
          %v6586 = vunpack.c.h.b16 %v6278
          %v6587 = vunpack.c.l.b16 %v6279
          %v6588 = vunpack.c.h.b16 %v6279
          %v6589 = vunpack.c.l.b16 %v6280
          %v6590 = vunpack.c.h.b16 %v6280
          %v6591 = vunpack.c.l.b16 %v6281
          %v6592 = vunpack.c.h.b16 %v6281
          %v6593 = vunpack.c.l.b16 %v6282
          %v6594 = vunpack.c.h.b16 %v6282
          %v6595 = vunpack.c.l.b16 %v6283
          %v6596 = vunpack.c.h.b16 %v6283
          %v6597 = vunpack.c.l.b16 %v6284
          %v6598 = vunpack.c.h.b16 %v6284
          %v6599 = vunpack.c.l.b16 %v6285
          %v6600 = vunpack.c.h.b16 %v6285
          %v6601 = vunpack.c.l.b16 %v6286
          %v6602 = vunpack.c.h.b16 %v6286
          %v6603 = vunpack.c.l.b16 %v6287
          %v6604 = vunpack.c.h.b16 %v6287
          %v6605 = vunpack.c.l.b16 %v6288
          %v6606 = vunpack.c.h.b16 %v6288
          %v6607 = vunpack.c.l.b16 %v6289
          %v6608 = vunpack.c.h.b16 %v6289
          %v6609 = vunpack.c.l.b16 %v6290
          %v6610 = vunpack.c.h.b16 %v6290
          %v6611 = vunpack.c.l.b16 %v6291
          %v6612 = vunpack.c.h.b16 %v6291
          %v6613 = vunpack.c.l.b16 %v6292
          %v6614 = vunpack.c.h.b16 %v6292
          %v6615 = vunpack.c.l.b16 %v6293
          %v6616 = vunpack.c.h.b16 %v6293
          %v6617 = vunpack.c.l.b16 %v6294
          %v6618 = vunpack.c.h.b16 %v6294
          %v6619 = vunpack.c.l.b16 %v6295
          %v6620 = vunpack.c.h.b16 %v6295
          %v6621 = vunpack.c.l.b16 %v6296
          %v6622 = vunpack.c.h.b16 %v6296
          %v6623 = vunpack.c.l.b16 %v6297
          %v6624 = vunpack.c.h.b16 %v6297
          %v6625 = vunpack.c.l.b16 %v6298
          %v6626 = vunpack.c.h.b16 %v6298
          %v6627 = vunpack.c.l.b16 %v6299
          %v6628 = vunpack.c.h.b16 %v6299
          %v6629 = vunpack.c.l.b16 %v6300
          %v6630 = vunpack.c.h.b16 %v6300
          %v6631 = vunpack.c.l.b16 %v6301
          %v6632 = vunpack.c.h.b16 %v6301
          %v6633 = vunpack.c.l.b16 %v6302
          %v6634 = vunpack.c.h.b16 %v6302
          %v6635 = vunpack.c.l.b16 %v6303
          %v6636 = vunpack.c.h.b16 %v6303
          %v6637 = vunpack.c.l.b16 %v6304
          %v6638 = vunpack.c.h.b16 %v6304
          %v6639 = vunpack.c.l.b16 %v6305
          %v6640 = vunpack.c.h.b16 %v6305
          %v6641 = vunpack.c.l.b16 %v6306
          %v6642 = vunpack.c.h.b16 %v6306
          %v6643 = vunpack.c.l.b16 %v6307
          %v6644 = vunpack.c.h.b16 %v6307
          %v6645 = vunpack.c.l.b16 %v6308
          %v6646 = vunpack.c.h.b16 %v6308
          %v6647 = vunpack.c.l.b16 %v6309
          %v6648 = vunpack.c.h.b16 %v6309
          %v6649 = vunpack.c.l.b16 %v6310
          %v6650 = vunpack.c.h.b16 %v6310
          %v6651 = vunpack.c.l.b16 %v6311
          %v6652 = vunpack.c.h.b16 %v6311
          %v6653 = vunpack.c.l.b16 %v6312
          %v6654 = vunpack.c.h.b16 %v6312
          %v6655 = vunpack.c.l.b16 %v6313
          %v6656 = vunpack.c.h.b16 %v6313
          %v6657 = vunpack.c.l.b16 %v6314
          %v6658 = vunpack.c.h.b16 %v6314
          %v6659 = vunpack.c.l.b16 %v6315
          %v6660 = vunpack.c.h.b16 %v6315
          %v6661 = vunpack.c.l.b16 %v6316
          %v6662 = vunpack.c.h.b16 %v6316
          %v6663 = vunpack.c.l.b16 %v6317
          %v6664 = vunpack.c.h.b16 %v6317
          %v6665 = vunpack.c.l.b16 %v6318
          %v6666 = vunpack.c.h.b16 %v6318
          %v6667 = vunpack.c.l.b16 %v6319
          %v6668 = vunpack.c.h.b16 %v6319
          %v6669 = vunpack.c.l.b16 %v6320
          %v6670 = vunpack.c.h.b16 %v6320
          %v6671 = vunpack.c.l.b16 %v6321
          %v6672 = vunpack.c.h.b16 %v6321
          %v6673 = vunpack.c.l.b16 %v6322
          %v6674 = vunpack.c.h.b16 %v6322
          %v6675 = vunpack.c.l.b16 %v6323
          %v6676 = vunpack.c.h.b16 %v6323
          %v6677 = vunpack.c.l.b16 %v6324
          %v6678 = vunpack.c.h.b16 %v6324
          %v6679 = vunpack.c.l.b16 %v6325
          %v6680 = vunpack.c.h.b16 %v6325
          %v6681 = vunpack.c.l.b16 %v6326
          %v6682 = vunpack.c.h.b16 %v6326
          %v6683 = vunpack.c.l.b16 %v6327
          %v6684 = vunpack.c.h.b16 %v6327
          %v6685 = vunpack.c.l.b16 %v6328
          %v6686 = vunpack.c.h.b16 %v6328
          %v6687 = vunpack.c.l.b16 %v6329
          %v6688 = vunpack.c.h.b16 %v6329
          %v6689 = vunpack.c.l.b16 %v6330
          %v6690 = vunpack.c.h.b16 %v6330
          %v6691 = vunpack.c.l.b16 %v6331
          %v6692 = vunpack.c.h.b16 %v6331
          %v6693 = vunpack.c.l.b16 %v6332
          %v6694 = vunpack.c.h.b16 %v6332
          %v6695 = vunpack.c.l.b16 %v6333
          %v6696 = vunpack.c.h.b16 %v6333
          %v6697 = vunpack.c.l.b16 %v6334
          %v6698 = vunpack.c.h.b16 %v6334
          %v6699 = vunpack.c.l.b16 %v6335
          %v6700 = vunpack.c.h.b16 %v6335
          %v6701 = vunpack.c.l.b16 %v6336
          %v6702 = vunpack.c.h.b16 %v6336
          %v6703 = vunpack.c.l.b16 %v6337
          %v6704 = vunpack.c.h.b16 %v6337
          %v6705 = vunpack.c.l.b16 %v6338
          %v6706 = vunpack.c.h.b16 %v6338
          %v6707 = vunpack.c.l.b16 %v6339
          %v6708 = vunpack.c.h.b16 %v6339
          %v6709 = vunpack.c.l.b16 %v6340
          %v6710 = vunpack.c.h.b16 %v6340
          %v6711 = vunpack.c.l.b16 %v6341
          %v6712 = vunpack.c.h.b16 %v6341
          %v6713 = vunpack.c.l.b16 %v6342
          %v6714 = vunpack.c.h.b16 %v6342
          %v6715 = vunpack.c.l.b16 %v6343
          %v6716 = vunpack.c.h.b16 %v6343
          %v6717 = vunpack.c.l.b16 %v6344
          %v6718 = vunpack.c.h.b16 %v6344
          %v6719 = vunpack.c.l.b16 %v6345
          %v6720 = vunpack.c.h.b16 %v6345
          %v6721 = vunpack.c.l.b16 %v6346
          %v6722 = vunpack.c.h.b16 %v6346
          %v6723 = vunpack.c.l.b16 %v6347
          %v6724 = vunpack.c.h.b16 %v6347
          %v6725 = vunpack.c.l.b16 %v6348
          %v6726 = vunpack.c.h.b16 %v6348
          %v6727 = vunpack.c.l.b16 %v6349
          %v6728 = vunpack.c.h.b16 %v6349
          %v6729 = vunpack.c.l.b16 %v6350
          %v6730 = vunpack.c.h.b16 %v6350
          %v6731 = vunpack.c.l.b16 %v6351
          %v6732 = vunpack.c.h.b16 %v6351
          %v6733 = vunpack.c.l.b16 %v6352
          %v6734 = vunpack.c.h.b16 %v6352
          %v6735 = vunpack.c.l.b16 %v6353
          %v6736 = vunpack.c.h.b16 %v6353
          %v6737 = vunpack.c.l.b16 %v6354
          %v6738 = vunpack.c.h.b16 %v6354
          %v6739 = vunpack.c.l.b16 %v6355
          %v6740 = vunpack.c.h.b16 %v6355
          %v6741 = vunpack.c.l.b16 %v6356
          %v6742 = vunpack.c.h.b16 %v6356
          %v6743 = vunpack.c.l.b16 %v6357
          %v6744 = vunpack.c.h.b16 %v6357
          %v6745 = vunpack.c.l.b16 %v6358
          %v6746 = vunpack.c.h.b16 %v6358
          %v6747 = vunpack.c.l.b16 %v6359
          %v6748 = vunpack.c.h.b16 %v6359
          %v6749 = vunpack.c.l.b16 %v6360
          %v6750 = vunpack.c.h.b16 %v6360
          %v6751 = vunpack.c.l.b16 %v6361
          %v6752 = vunpack.c.h.b16 %v6361
          %v6753 = vunpack.c.l.b16 %v6362
          %v6754 = vunpack.c.h.b16 %v6362
          %v6755 = vunpack.c.l.b16 %v6363
          %v6756 = vunpack.c.h.b16 %v6363
          %v6757 = vunpack.c.l.b16 %v6364
          %v6758 = vunpack.c.h.b16 %v6364
          %v6759 = vunpack.c.l.b16 %v6365
          %v6760 = vunpack.c.h.b16 %v6365
          %v6761 = vunpack.c.l.b16 %v6366
          %v6762 = vunpack.c.h.b16 %v6366
          %v6763 = vpack.c.b16 %v6509, %v6507
          %v6764 = vpack.c.b16 %v6510, %v6508
          %v6765 = vpack.c.b16 %v6513, %v6511
          %v6766 = vpack.c.b16 %v6514, %v6512
          %v6767 = vpack.c.b16 %v6517, %v6515
          %v6768 = vpack.c.b16 %v6518, %v6516
          %v6769 = vpack.c.b16 %v6521, %v6519
          %v6770 = vpack.c.b16 %v6522, %v6520
          %v6771 = vpack.c.b16 %v6525, %v6523
          %v6772 = vpack.c.b16 %v6526, %v6524
          %v6773 = vpack.c.b16 %v6529, %v6527
          %v6774 = vpack.c.b16 %v6530, %v6528
          %v6775 = vpack.c.b16 %v6533, %v6531
          %v6776 = vpack.c.b16 %v6534, %v6532
          %v6777 = vpack.c.b16 %v6537, %v6535
          %v6778 = vpack.c.b16 %v6538, %v6536
          %v6779 = vpack.c.b16 %v6541, %v6539
          %v6780 = vpack.c.b16 %v6542, %v6540
          %v6781 = vpack.c.b16 %v6545, %v6543
          %v6782 = vpack.c.b16 %v6546, %v6544
          %v6783 = vpack.c.b16 %v6549, %v6547
          %v6784 = vpack.c.b16 %v6550, %v6548
          %v6785 = vpack.c.b16 %v6553, %v6551
          %v6786 = vpack.c.b16 %v6554, %v6552
          %v6787 = vpack.c.b16 %v6557, %v6555
          %v6788 = vpack.c.b16 %v6558, %v6556
          %v6789 = vpack.c.b16 %v6561, %v6559
          %v6790 = vpack.c.b16 %v6562, %v6560
          %v6791 = vpack.c.b16 %v6565, %v6563
          %v6792 = vpack.c.b16 %v6566, %v6564
          %v6793 = vpack.c.b16 %v6569, %v6567
          %v6794 = vpack.c.b16 %v6570, %v6568
          %v6795 = vpack.c.b16 %v6573, %v6571
          %v6796 = vpack.c.b16 %v6574, %v6572
          %v6797 = vpack.c.b16 %v6577, %v6575
          %v6798 = vpack.c.b16 %v6578, %v6576
          %v6799 = vpack.c.b16 %v6581, %v6579
          %v6800 = vpack.c.b16 %v6582, %v6580
          %v6801 = vpack.c.b16 %v6585, %v6583
          %v6802 = vpack.c.b16 %v6586, %v6584
          %v6803 = vpack.c.b16 %v6589, %v6587
          %v6804 = vpack.c.b16 %v6590, %v6588
          %v6805 = vpack.c.b16 %v6593, %v6591
          %v6806 = vpack.c.b16 %v6594, %v6592
          %v6807 = vpack.c.b16 %v6597, %v6595
          %v6808 = vpack.c.b16 %v6598, %v6596
          %v6809 = vpack.c.b16 %v6601, %v6599
          %v6810 = vpack.c.b16 %v6602, %v6600
          %v6811 = vpack.c.b16 %v6605, %v6603
          %v6812 = vpack.c.b16 %v6606, %v6604
          %v6813 = vpack.c.b16 %v6609, %v6607
          %v6814 = vpack.c.b16 %v6610, %v6608
          %v6815 = vpack.c.b16 %v6613, %v6611
          %v6816 = vpack.c.b16 %v6614, %v6612
          %v6817 = vpack.c.b16 %v6617, %v6615
          %v6818 = vpack.c.b16 %v6618, %v6616
          %v6819 = vpack.c.b16 %v6621, %v6619
          %v6820 = vpack.c.b16 %v6622, %v6620
          %v6821 = vpack.c.b16 %v6625, %v6623
          %v6822 = vpack.c.b16 %v6626, %v6624
          %v6823 = vpack.c.b16 %v6629, %v6627
          %v6824 = vpack.c.b16 %v6630, %v6628
          %v6825 = vpack.c.b16 %v6633, %v6631
          %v6826 = vpack.c.b16 %v6634, %v6632
          %v6827 = vpack.c.b16 %v6637, %v6635
          %v6828 = vpack.c.b16 %v6638, %v6636
          %v6829 = vpack.c.b16 %v6641, %v6639
          %v6830 = vpack.c.b16 %v6642, %v6640
          %v6831 = vpack.c.b16 %v6645, %v6643
          %v6832 = vpack.c.b16 %v6646, %v6644
          %v6833 = vpack.c.b16 %v6649, %v6647
          %v6834 = vpack.c.b16 %v6650, %v6648
          %v6835 = vpack.c.b16 %v6653, %v6651
          %v6836 = vpack.c.b16 %v6654, %v6652
          %v6837 = vpack.c.b16 %v6657, %v6655
          %v6838 = vpack.c.b16 %v6658, %v6656
          %v6839 = vpack.c.b16 %v6661, %v6659
          %v6840 = vpack.c.b16 %v6662, %v6660
          %v6841 = vpack.c.b16 %v6665, %v6663
          %v6842 = vpack.c.b16 %v6666, %v6664
          %v6843 = vpack.c.b16 %v6669, %v6667
          %v6844 = vpack.c.b16 %v6670, %v6668
          %v6845 = vpack.c.b16 %v6673, %v6671
          %v6846 = vpack.c.b16 %v6674, %v6672
          %v6847 = vpack.c.b16 %v6677, %v6675
          %v6848 = vpack.c.b16 %v6678, %v6676
          %v6849 = vpack.c.b16 %v6681, %v6679
          %v6850 = vpack.c.b16 %v6682, %v6680
          %v6851 = vpack.c.b16 %v6685, %v6683
          %v6852 = vpack.c.b16 %v6686, %v6684
          %v6853 = vpack.c.b16 %v6689, %v6687
          %v6854 = vpack.c.b16 %v6690, %v6688
          %v6855 = vpack.c.b16 %v6693, %v6691
          %v6856 = vpack.c.b16 %v6694, %v6692
          %v6857 = vpack.c.b16 %v6697, %v6695
          %v6858 = vpack.c.b16 %v6698, %v6696
          %v6859 = vpack.c.b16 %v6701, %v6699
          %v6860 = vpack.c.b16 %v6702, %v6700
          %v6861 = vpack.c.b16 %v6705, %v6703
          %v6862 = vpack.c.b16 %v6706, %v6704
          %v6863 = vpack.c.b16 %v6709, %v6707
          %v6864 = vpack.c.b16 %v6710, %v6708
          %v6865 = vpack.c.b16 %v6713, %v6711
          %v6866 = vpack.c.b16 %v6714, %v6712
          %v6867 = vpack.c.b16 %v6717, %v6715
          %v6868 = vpack.c.b16 %v6718, %v6716
          %v6869 = vpack.c.b16 %v6721, %v6719
          %v6870 = vpack.c.b16 %v6722, %v6720
          %v6871 = vpack.c.b16 %v6725, %v6723
          %v6872 = vpack.c.b16 %v6726, %v6724
          %v6873 = vpack.c.b16 %v6729, %v6727
          %v6874 = vpack.c.b16 %v6730, %v6728
          %v6875 = vpack.c.b16 %v6733, %v6731
          %v6876 = vpack.c.b16 %v6734, %v6732
          %v6877 = vpack.c.b16 %v6737, %v6735
          %v6878 = vpack.c.b16 %v6738, %v6736
          %v6879 = vpack.c.b16 %v6741, %v6739
          %v6880 = vpack.c.b16 %v6742, %v6740
          %v6881 = vpack.c.b16 %v6745, %v6743
          %v6882 = vpack.c.b16 %v6746, %v6744
          %v6883 = vpack.c.b16 %v6749, %v6747
          %v6884 = vpack.c.b16 %v6750, %v6748
          %v6885 = vpack.c.b16 %v6753, %v6751
          %v6886 = vpack.c.b16 %v6754, %v6752
          %v6887 = vpack.c.b16 %v6757, %v6755
          %v6888 = vpack.c.b16 %v6758, %v6756
          %v6889 = vpack.c.b16 %v6761, %v6759
          %v6890 = vpack.c.b16 %v6762, %v6760
          %7019 = vmatprep.subr.bf16.mxu0 %v6778
          %7020 = vmatpush1.bf16.msra.mxu0 %v6777
          %7021 = vmatprep.subr.bf16.mxu0 %v6776
          %7022 = vmatpush1.bf16.msra.mxu0 %v6775
          %7023 = vmatprep.subr.bf16.mxu0 %v6774
          %7024 = vmatpush1.bf16.msra.mxu0 %v6773
          %7025 = vmatprep.subr.bf16.mxu0 %v6772
          %7026 = vmatpush1.bf16.msra.mxu0 %v6771
          %7027 = vmatprep.subr.bf16.mxu0 %v6770
          %7028 = vmatpush1.bf16.msra.mxu0 %v6769
          %7029 = vmatprep.subr.bf16.mxu0 %v6768
          %7030 = vmatpush1.bf16.msra.mxu0 %v6767
          %7031 = vmatprep.subr.bf16.mxu0 %v6766
          %7032 = vmatpush1.bf16.msra.mxu0 %v6765
          %7033 = vmatprep.subr.bf16.mxu0 %v6764
          %7034 = vmatpush1.bf16.msra.mxu0 %v6763
          %7035 = vmatprep.subr.bf16.mxu0 %v6794
          %7036 = vmatpush2.bf16.msra.mxu0 %v6793
          %7037 = vmatprep.subr.bf16.mxu0 %v6792
          %7038 = vmatpush2.bf16.msra.mxu0 %v6791
          %7039 = vmatprep.subr.bf16.mxu0 %v6790
          %7040 = vmatpush2.bf16.msra.mxu0 %v6789
          %7041 = vmatprep.subr.bf16.mxu0 %v6788
          %7042 = vmatpush2.bf16.msra.mxu0 %v6787
          %7043 = vmatprep.subr.bf16.mxu0 %v6786
          %7044 = vmatpush2.bf16.msra.mxu0 %v6785
          %7045 = vmatprep.subr.bf16.mxu0 %v6784
          %7046 = vmatpush2.bf16.msra.mxu0 %v6783
          %7047 = vmatprep.subr.bf16.mxu0 %v6782
          %7048 = vmatpush2.bf16.msra.mxu0 %v6781
          %7049 = vmatprep.subr.bf16.mxu0 %v6780
          %7050 = vmatpush2.bf16.msra.mxu0 %v6779
          %7051 = vmatprep.mubr.bf16.mxu0 %v6232
          %7052 = vmatmul.mubr.bf16.gmra.mxu0 %v6231
          %v7053 = vpop.f32.mrf.mxu0
          %v7054 = vadd.f32 %v6372, %v7053
          %v7055 = vpop.f32.mrf.mxu0
          %v7056 = vadd.f32 %v6376, %v7055
          %v7057 = vpop.f32.mrf.mxu0
          %v7058 = vpop.f32.mrf.mxu0
          %7059 = vdwg.mxu0
          %7060 = vmatprep.subr.bf16.mxu0 %v6810
          %7061 = vmatpush1.bf16.msra.mxu0 %v6809
          %7062 = vmatprep.subr.bf16.mxu0 %v6808
          %7063 = vmatpush1.bf16.msra.mxu0 %v6807
          %7064 = vmatprep.subr.bf16.mxu0 %v6806
          %7065 = vmatpush1.bf16.msra.mxu0 %v6805
          %7066 = vmatprep.subr.bf16.mxu0 %v6804
          %7067 = vmatpush1.bf16.msra.mxu0 %v6803
          %7068 = vmatprep.subr.bf16.mxu0 %v6802
          %7069 = vmatpush1.bf16.msra.mxu0 %v6801
          %7070 = vmatprep.subr.bf16.mxu0 %v6800
          %7071 = vmatpush1.bf16.msra.mxu0 %v6799
          %7072 = vmatprep.subr.bf16.mxu0 %v6798
          %7073 = vmatpush1.bf16.msra.mxu0 %v6797
          %7074 = vmatprep.subr.bf16.mxu0 %v6796
          %7075 = vmatpush1.bf16.msra.mxu0 %v6795
          %7076 = vmatprep.subr.bf16.mxu0 %v6826
          %7077 = vmatpush2.bf16.msra.mxu0 %v6825
          %7078 = vmatprep.subr.bf16.mxu0 %v6824
          %7079 = vmatpush2.bf16.msra.mxu0 %v6823
          %7080 = vmatprep.subr.bf16.mxu0 %v6822
          %7081 = vmatpush2.bf16.msra.mxu0 %v6821
          %7082 = vmatprep.subr.bf16.mxu0 %v6820
          %7083 = vmatpush2.bf16.msra.mxu0 %v6819
          %7084 = vmatprep.subr.bf16.mxu0 %v6818
          %7085 = vmatpush2.bf16.msra.mxu0 %v6817
          %7086 = vmatprep.subr.bf16.mxu0 %v6816
          %7087 = vmatpush2.bf16.msra.mxu0 %v6815
          %7088 = vmatprep.subr.bf16.mxu0 %v6814
          %7089 = vmatpush2.bf16.msra.mxu0 %v6813
          %7090 = vmatprep.subr.bf16.mxu0 %v6812
          %7091 = vmatpush2.bf16.msra.mxu0 %v6811
          %7092 = vmatprep.mubr.bf16.mxu0 %v6234
          %7093 = vmatmul.mubr.bf16.gmra.mxu0 %v6233
          %v7094 = vpop.f32.mrf.mxu0
          %v7095 = vadd.f32 %v7054, %v7094
          %v7096 = vpop.f32.mrf.mxu0
          %v7097 = vadd.f32 %v7056, %v7096
          %v7098 = vpop.f32.mrf.mxu0
          %v7099 = vpop.f32.mrf.mxu0
          %7100 = vdwg.mxu0
          %7101 = vmatprep.subr.bf16.mxu0 %v6842
          %7102 = vmatpush1.bf16.msra.mxu0 %v6841
          %7103 = vmatprep.subr.bf16.mxu0 %v6840
          %7104 = vmatpush1.bf16.msra.mxu0 %v6839
          %7105 = vmatprep.subr.bf16.mxu0 %v6838
          %7106 = vmatpush1.bf16.msra.mxu0 %v6837
          %7107 = vmatprep.subr.bf16.mxu0 %v6836
          %7108 = vmatpush1.bf16.msra.mxu0 %v6835
          %7109 = vmatprep.subr.bf16.mxu0 %v6834
          %7110 = vmatpush1.bf16.msra.mxu0 %v6833
          %7111 = vmatprep.subr.bf16.mxu0 %v6832
          %7112 = vmatpush1.bf16.msra.mxu0 %v6831
          %7113 = vmatprep.subr.bf16.mxu0 %v6830
          %7114 = vmatpush1.bf16.msra.mxu0 %v6829
          %7115 = vmatprep.subr.bf16.mxu0 %v6828
          %7116 = vmatpush1.bf16.msra.mxu0 %v6827
          %7117 = vmatprep.subr.bf16.mxu0 %v6858
          %7118 = vmatpush2.bf16.msra.mxu0 %v6857
          %7119 = vmatprep.subr.bf16.mxu0 %v6856
          %7120 = vmatpush2.bf16.msra.mxu0 %v6855
          %7121 = vmatprep.subr.bf16.mxu0 %v6854
          %7122 = vmatpush2.bf16.msra.mxu0 %v6853
          %7123 = vmatprep.subr.bf16.mxu0 %v6852
          %7124 = vmatpush2.bf16.msra.mxu0 %v6851
          %7125 = vmatprep.subr.bf16.mxu0 %v6850
          %7126 = vmatpush2.bf16.msra.mxu0 %v6849
          %7127 = vmatprep.subr.bf16.mxu0 %v6848
          %7128 = vmatpush2.bf16.msra.mxu0 %v6847
          %7129 = vmatprep.subr.bf16.mxu0 %v6846
          %7130 = vmatpush2.bf16.msra.mxu0 %v6845
          %7131 = vmatprep.subr.bf16.mxu0 %v6844
          %7132 = vmatpush2.bf16.msra.mxu0 %v6843
          %7133 = vmatprep.mubr.bf16.mxu0 %v6236
          %7134 = vmatmul.mubr.bf16.gmra.mxu0 %v6235
          %v7135 = vpop.f32.mrf.mxu0
          %v7136 = vadd.f32 %v7095, %v7135
          %v7137 = vpop.f32.mrf.mxu0
          %v7138 = vadd.f32 %v7097, %v7137
          %v7139 = vpop.f32.mrf.mxu0
          %v7140 = vpop.f32.mrf.mxu0
          %7141 = vdwg.mxu0
          %7142 = vmatprep.subr.bf16.mxu0 %v6874
          %7143 = vmatpush1.bf16.msra.mxu0 %v6873
          %7144 = vmatprep.subr.bf16.mxu0 %v6872
          %7145 = vmatpush1.bf16.msra.mxu0 %v6871
          %7146 = vmatprep.subr.bf16.mxu0 %v6870
          %7147 = vmatpush1.bf16.msra.mxu0 %v6869
          %7148 = vmatprep.subr.bf16.mxu0 %v6868
          %7149 = vmatpush1.bf16.msra.mxu0 %v6867
          %7150 = vmatprep.subr.bf16.mxu0 %v6866
          %7151 = vmatpush1.bf16.msra.mxu0 %v6865
          %7152 = vmatprep.subr.bf16.mxu0 %v6864
          %7153 = vmatpush1.bf16.msra.mxu0 %v6863
          %7154 = vmatprep.subr.bf16.mxu0 %v6862
          %7155 = vmatpush1.bf16.msra.mxu0 %v6861
          %7156 = vmatprep.subr.bf16.mxu0 %v6860
          %7157 = vmatpush1.bf16.msra.mxu0 %v6859
          %7158 = vmatprep.subr.bf16.mxu0 %v6890
          %7159 = vmatpush2.bf16.msra.mxu0 %v6889
          %7160 = vmatprep.subr.bf16.mxu0 %v6888
          %7161 = vmatpush2.bf16.msra.mxu0 %v6887
          %7162 = vmatprep.subr.bf16.mxu0 %v6886
          %7163 = vmatpush2.bf16.msra.mxu0 %v6885
          %7164 = vmatprep.subr.bf16.mxu0 %v6884
          %7165 = vmatpush2.bf16.msra.mxu0 %v6883
          %7166 = vmatprep.subr.bf16.mxu0 %v6882
          %7167 = vmatpush2.bf16.msra.mxu0 %v6881
          %7168 = vmatprep.subr.bf16.mxu0 %v6880
          %7169 = vmatpush2.bf16.msra.mxu0 %v6879
          %7170 = vmatprep.subr.bf16.mxu0 %v6878
          %7171 = vmatpush2.bf16.msra.mxu0 %v6877
          %7172 = vmatprep.subr.bf16.mxu0 %v6876
          %7173 = vmatpush2.bf16.msra.mxu0 %v6875
          %7174 = vmatprep.mubr.bf16.mxu0 %v6238
          %7175 = vmatmul.mubr.bf16.gmra.mxu0 %v6237
          %v7176 = vpop.f32.mrf.mxu0
          %v7177 = vadd.f32 %v7136, %v7176
          %v7178 = vpop.f32.mrf.mxu0
          %v7179 = vadd.f32 %v7138, %v7178
          %v7180 = vpop.f32.mrf.mxu0
          %v7181 = vpop.f32.mrf.mxu0
          %7182 = vdwg.mxu0
          %v7183 = vpack.c.bf16 %v7177, %v7177
          %v7184 = vpack.c.bf16 %v7179, %v7179
          %v7185 = vld [vmem:[#allocation11] sm:$0xf]
          %v7186 = vld [vmem:[#allocation11 + $0x4] sm:$0xf]
          %v7187 = vld [vmem:[#allocation11 + $0x8] sm:$0xf]
          %v7188 = vld [vmem:[#allocation11 + $0xc] sm:$0xf]
          %v7189 = vld [vmem:[#allocation11 + $0x10] sm:$0xf]
          %v7190 = vld [vmem:[#allocation11 + $0x14] sm:$0xf]
          %v7191 = vld [vmem:[#allocation11 + $0x18] sm:$0xf]
          %v7192 = vld [vmem:[#allocation11 + $0x1c] sm:$0xf]
          %v7193 = vld [vmem:[#allocation11 + $0x20] sm:$0xf]
          %v7194 = vld [vmem:[#allocation11 + $0x24] sm:$0xf]
          %v7195 = vld [vmem:[#allocation11 + $0x28] sm:$0xf]
          %v7196 = vld [vmem:[#allocation11 + $0x2c] sm:$0xf]
          %v7197 = vld [vmem:[#allocation11 + $0x30] sm:$0xf]
          %v7198 = vld [vmem:[#allocation11 + $0x34] sm:$0xf]
          %v7199 = vld [vmem:[#allocation11 + $0x38] sm:$0xf]
          %v7200 = vld [vmem:[#allocation11 + $0x3c] sm:$0xf]
          %v7201 = vld [vmem:[#allocation11 + $0x40] sm:$0xf]
          %v7202 = vld [vmem:[#allocation11 + $0x44] sm:$0xf]
          %v7203 = vld [vmem:[#allocation11 + $0x48] sm:$0xf]
          %v7204 = vld [vmem:[#allocation11 + $0x4c] sm:$0xf]
          %v7205 = vld [vmem:[#allocation11 + $0x50] sm:$0xf]
          %v7206 = vld [vmem:[#allocation11 + $0x54] sm:$0xf]
          %v7207 = vld [vmem:[#allocation11 + $0x58] sm:$0xf]
          %v7208 = vld [vmem:[#allocation11 + $0x5c] sm:$0xf]
          %v7209 = vld [vmem:[#allocation11 + $0x60] sm:$0xf]
          %v7210 = vld [vmem:[#allocation11 + $0x64] sm:$0xf]
          %v7211 = vld [vmem:[#allocation11 + $0x68] sm:$0xf]
          %v7212 = vld [vmem:[#allocation11 + $0x6c] sm:$0xf]
          %v7213 = vld [vmem:[#allocation11 + $0x70] sm:$0xf]
          %v7214 = vld [vmem:[#allocation11 + $0x74] sm:$0xf]
          %v7215 = vld [vmem:[#allocation11 + $0x78] sm:$0xf]
          %v7216 = vld [vmem:[#allocation11 + $0x7c] sm:$0xf]
          %v7217 = vld [vmem:[#allocation12] sm:$0x1]
          %v7219 = vlaneseq
          %v7220 = vshrl.u32 %v7219, 7
          %v7221 = vsub.s32 0, %v7220
          %v7222 = vrot.slane %v7217, %v7221
          %v7256 = vunpack.c.l.b16 %v7185
          %v7257 = vunpack.c.l.b16 %v7186
          %v7258 = vunpack.c.l.b16 %v7187
          %v7259 = vunpack.c.l.b16 %v7188
          %v7260 = vunpack.c.l.b16 %v7189
          %v7261 = vunpack.c.l.b16 %v7190
          %v7262 = vunpack.c.l.b16 %v7191
          %v7263 = vunpack.c.l.b16 %v7192
          %v7264 = vunpack.c.l.b16 %v7193
          %v7265 = vunpack.c.l.b16 %v7194
          %v7266 = vunpack.c.l.b16 %v7195
          %v7267 = vunpack.c.l.b16 %v7196
          %v7268 = vunpack.c.l.b16 %v7197
          %v7269 = vunpack.c.l.b16 %v7198
          %v7270 = vunpack.c.l.b16 %v7199
          %v7271 = vunpack.c.l.b16 %v7200
          %v7272 = vunpack.c.l.b16 %v7201
          %v7273 = vunpack.c.l.b16 %v7202
          %v7274 = vunpack.c.l.b16 %v7203
          %v7275 = vunpack.c.l.b16 %v7204
          %v7276 = vunpack.c.l.b16 %v7205
          %v7277 = vunpack.c.l.b16 %v7206
          %v7278 = vunpack.c.l.b16 %v7207
          %v7279 = vunpack.c.l.b16 %v7208
          %v7280 = vunpack.c.l.b16 %v7209
          %v7281 = vunpack.c.l.b16 %v7210
          %v7282 = vunpack.c.l.b16 %v7211
          %v7283 = vunpack.c.l.b16 %v7212
          %v7284 = vunpack.c.l.b16 %v7213
          %v7285 = vunpack.c.l.b16 %v7214
          %v7286 = vunpack.c.l.b16 %v7215
          %v7287 = vunpack.c.l.b16 %v7216
          %v7288 = vpack.c.b16 %v7257, %v7256
          %v7289 = vpack.c.b16 %v7259, %v7258
          %v7290 = vpack.c.b16 %v7261, %v7260
          %v7291 = vpack.c.b16 %v7263, %v7262
          %v7292 = vpack.c.b16 %v7265, %v7264
          %v7293 = vpack.c.b16 %v7267, %v7266
          %v7294 = vpack.c.b16 %v7269, %v7268
          %v7295 = vpack.c.b16 %v7271, %v7270
          %v7296 = vpack.c.b16 %v7273, %v7272
          %v7297 = vpack.c.b16 %v7275, %v7274
          %v7298 = vpack.c.b16 %v7277, %v7276
          %v7299 = vpack.c.b16 %v7279, %v7278
          %v7300 = vpack.c.b16 %v7281, %v7280
          %v7301 = vpack.c.b16 %v7283, %v7282
          %v7302 = vpack.c.b16 %v7285, %v7284
          %v7303 = vpack.c.b16 %v7287, %v7286
          %7320 = vmatprep.subr.bf16.mxu0 0
          %7321 = vmatpush1.bf16.msra.mxu0 %v7295
          %7322 = vmatprep.subr.bf16.mxu0 0
          %7323 = vmatpush1.bf16.msra.mxu0 %v7294
          %7324 = vmatprep.subr.bf16.mxu0 0
          %7325 = vmatpush1.bf16.msra.mxu0 %v7293
          %7326 = vmatprep.subr.bf16.mxu0 0
          %7327 = vmatpush1.bf16.msra.mxu0 %v7292
          %7328 = vmatprep.subr.bf16.mxu0 0
          %7329 = vmatpush1.bf16.msra.mxu0 %v7291
          %7330 = vmatprep.subr.bf16.mxu0 0
          %7331 = vmatpush1.bf16.msra.mxu0 %v7290
          %7332 = vmatprep.subr.bf16.mxu0 0
          %7333 = vmatpush1.bf16.msra.mxu0 %v7289
          %7334 = vmatprep.subr.bf16.mxu0 0
          %7335 = vmatpush1.bf16.msra.mxu0 %v7288
          %7336 = vmatprep.subr.bf16.mxu0 0
          %7337 = vmatpush2.bf16.msra.mxu0 %v7303
          %7338 = vmatprep.subr.bf16.mxu0 0
          %7339 = vmatpush2.bf16.msra.mxu0 %v7302
          %7340 = vmatprep.subr.bf16.mxu0 0
          %7341 = vmatpush2.bf16.msra.mxu0 %v7301
          %7342 = vmatprep.subr.bf16.mxu0 0
          %7343 = vmatpush2.bf16.msra.mxu0 %v7300
          %7344 = vmatprep.subr.bf16.mxu0 0
          %7345 = vmatpush2.bf16.msra.mxu0 %v7299
          %7346 = vmatprep.subr.bf16.mxu0 0
          %7347 = vmatpush2.bf16.msra.mxu0 %v7298
          %7348 = vmatprep.subr.bf16.mxu0 0
          %7349 = vmatpush2.bf16.msra.mxu0 %v7297
          %7350 = vmatprep.subr.bf16.mxu0 0
          %7351 = vmatpush2.bf16.msra.mxu0 %v7296
          %7352 = vmatprep.mubr.bf16.mxu0 %v7184
          %7353 = vmatmul.mubr.bf16.gmra.mxu0 %v7183
          %v7354 = vpop.f32.mrf.mxu0
          %v7355 = vadd.f32 %v7222, %v7354
          %v7356 = vpop.f32.mrf.mxu0
          %v7357 = vpop.f32.mrf.mxu0
          %v7358 = vpop.f32.mrf.mxu0
          %7359 = vdwg.mxu0
          %v7360 = vpack.c.bf16 %v7355, %v7355
          %v7361 = vld [vmem:[%s7] sm:$0xf]
          %v7362 = vld [vmem:[%s7 + $0x4] sm:$0xf]
          %v7363 = vld [vmem:[%s7 + $0x8] sm:$0xf]
          %v7364 = vld [vmem:[%s7 + $0xc] sm:$0xf]
          %v7365 = vld [vmem:[%s7 + $0x10] sm:$0xf]
          %v7366 = vld [vmem:[%s7 + $0x14] sm:$0xf]
          %v7367 = vld [vmem:[%s7 + $0x18] sm:$0xf]
          %v7368 = vld [vmem:[%s7 + $0x1c] sm:$0xf]
          %v7369 = vld [vmem:[%s7 + $0x20] sm:$0xf]
          %v7370 = vld [vmem:[%s7 + $0x24] sm:$0xf]
          %v7371 = vld [vmem:[%s7 + $0x28] sm:$0xf]
          %v7372 = vld [vmem:[%s7 + $0x2c] sm:$0xf]
          %v7373 = vld [vmem:[%s7 + $0x30] sm:$0xf]
          %v7374 = vld [vmem:[%s7 + $0x34] sm:$0xf]
          %v7375 = vld [vmem:[%s7 + $0x38] sm:$0xf]
          %v7376 = vld [vmem:[%s7 + $0x3c] sm:$0xf]
          %v7377 = vld [vmem:[#allocation14] sm:$0x1]
          %v7379 = vlaneseq
          %v7380 = vshrl.u32 %v7379, 7
          %v7381 = vsub.s32 0, %v7380
          %v7382 = vrot.slane %v7377, %v7381
          %v7400 = vunpack.c.l.b16 %v7361
          %v7401 = vunpack.c.l.b16 %v7362
          %v7402 = vunpack.c.l.b16 %v7363
          %v7403 = vunpack.c.l.b16 %v7364
          %v7404 = vunpack.c.l.b16 %v7365
          %v7405 = vunpack.c.l.b16 %v7366
          %v7406 = vunpack.c.l.b16 %v7367
          %v7407 = vunpack.c.l.b16 %v7368
          %v7408 = vunpack.c.l.b16 %v7369
          %v7409 = vunpack.c.l.b16 %v7370
          %v7410 = vunpack.c.l.b16 %v7371
          %v7411 = vunpack.c.l.b16 %v7372
          %v7412 = vunpack.c.l.b16 %v7373
          %v7413 = vunpack.c.l.b16 %v7374
          %v7414 = vunpack.c.l.b16 %v7375
          %v7415 = vunpack.c.l.b16 %v7376
          %v7416 = vpack.c.b16 %v7401, %v7400
          %v7417 = vpack.c.b16 %v7403, %v7402
          %v7418 = vpack.c.b16 %v7405, %v7404
          %v7419 = vpack.c.b16 %v7407, %v7406
          %v7420 = vpack.c.b16 %v7409, %v7408
          %v7421 = vpack.c.b16 %v7411, %v7410
          %v7422 = vpack.c.b16 %v7413, %v7412
          %v7423 = vpack.c.b16 %v7415, %v7414
          %7432 = vmatprep.subr.bf16.mxu0 0
          %7433 = vmatpush1.bf16.msra.mxu0 %v7423
          %7434 = vmatprep.subr.bf16.mxu0 0
          %7435 = vmatpush1.bf16.msra.mxu0 %v7422
          %7436 = vmatprep.subr.bf16.mxu0 0
          %7437 = vmatpush1.bf16.msra.mxu0 %v7421
          %7438 = vmatprep.subr.bf16.mxu0 0
          %7439 = vmatpush1.bf16.msra.mxu0 %v7420
          %7440 = vmatprep.subr.bf16.mxu0 0
          %7441 = vmatpush1.bf16.msra.mxu0 %v7419
          %7442 = vmatprep.subr.bf16.mxu0 0
          %7443 = vmatpush1.bf16.msra.mxu0 %v7418
          %7444 = vmatprep.subr.bf16.mxu0 0
          %7445 = vmatpush1.bf16.msra.mxu0 %v7417
          %7446 = vmatprep.subr.bf16.mxu0 0
          %7447 = vmatpush1.bf16.msra.mxu0 %v7416
          %7448 = vmatprep.subr.bf16.mxu0 0
          %7449 = vmatpush2.bf16.msra.mxu0 0
          %7450 = vmatprep.subr.bf16.mxu0 0
          %7451 = vmatpush2.bf16.msra.mxu0 0
          %7452 = vmatprep.subr.bf16.mxu0 0
          %7453 = vmatpush2.bf16.msra.mxu0 0
          %7454 = vmatprep.subr.bf16.mxu0 0
          %7455 = vmatpush2.bf16.msra.mxu0 0
          %7456 = vmatprep.subr.bf16.mxu0 0
          %7457 = vmatpush2.bf16.msra.mxu0 0
          %7458 = vmatprep.subr.bf16.mxu0 0
          %7459 = vmatpush2.bf16.msra.mxu0 0
          %7460 = vmatprep.subr.bf16.mxu0 0
          %7461 = vmatpush2.bf16.msra.mxu0 0
          %7462 = vmatprep.subr.bf16.mxu0 0
          %7463 = vmatpush2.bf16.msra.mxu0 0
          %7464 = vmatprep.mubr.bf16.mxu0 0
          %7465 = vmatmul.mubr.bf16.gmra.mxu0 %v7360
          %v7466 = vpop.f32.mrf.mxu0
          %v7467 = vadd.f32 %v7382, %v7466
          %v7468 = vpop.f32.mrf.mxu0
          %v7469 = vpop.f32.mrf.mxu0
          %v7470 = vpop.f32.mrf.mxu0
          %7471 = vdwg.mxu0
          %v7472 = vpack.c.bf16 %v7467, %v7467
          %v7473 = vld [vmem:[%s9] sm:$0xf]
          %v7474 = vld [vmem:[%s9 + $0x4] sm:$0xf]
          %v7475 = vld [vmem:[%s9 + $0x8] sm:$0xf]
          %v7476 = vld [vmem:[%s9 + $0xc] sm:$0xf]
          %v7477 = vld [vmem:[%s9 + $0x10] sm:$0xf]
          %v7478 = vld [vmem:[%s9 + $0x14] sm:$0xf]
          %v7479 = vld [vmem:[%s9 + $0x18] sm:$0xf]
          %v7480 = vld [vmem:[%s9 + $0x1c] sm:$0xf]
          %v7481 = vld [vmem:[#allocation15] sm:$0x1]
          %v7483 = vlaneseq
          %v7484 = vshrl.u32 %v7483, 7
          %v7485 = vsub.s32 0, %v7484
          %v7486 = vrot.slane %v7481, %v7485
          %v7496 = vunpack.c.l.b16 %v7473
          %v7497 = vunpack.c.l.b16 %v7474
          %v7498 = vunpack.c.l.b16 %v7475
          %v7499 = vunpack.c.l.b16 %v7476
          %v7500 = vunpack.c.l.b16 %v7477
          %v7501 = vunpack.c.l.b16 %v7478
          %v7502 = vunpack.c.l.b16 %v7479
          %v7503 = vunpack.c.l.b16 %v7480
          %v7504 = vpack.c.b16 %v7497, %v7496
          %v7505 = vpack.c.b16 %v7499, %v7498
          %v7506 = vpack.c.b16 %v7501, %v7500
          %v7507 = vpack.c.b16 %v7503, %v7502
          %vm7512 = vcmask 523264
          %v7514 = vsel %vm7512, %v7472, 0
          %7516 = vmatprep.subr.bf16.mxu0 0
          %7517 = vmatpush1.bf16.msra.mxu0 0
          %7518 = vmatprep.subr.bf16.mxu0 0
          %7519 = vmatpush1.bf16.msra.mxu0 0
          %7520 = vmatprep.subr.bf16.mxu0 0
          %7521 = vmatpush1.bf16.msra.mxu0 0
          %7522 = vmatprep.subr.bf16.mxu0 0
          %7523 = vmatpush1.bf16.msra.mxu0 0
          %7524 = vmatprep.subr.bf16.mxu0 0
          %7525 = vmatpush1.bf16.msra.mxu0 %v7507
          %7526 = vmatprep.subr.bf16.mxu0 0
          %7527 = vmatpush1.bf16.msra.mxu0 %v7506
          %7528 = vmatprep.subr.bf16.mxu0 0
          %7529 = vmatpush1.bf16.msra.mxu0 %v7505
          %7530 = vmatprep.subr.bf16.mxu0 0
          %7531 = vmatpush1.bf16.msra.mxu0 %v7504
          %7532 = vmatprep.subr.bf16.mxu0 0
          %7533 = vmatpush2.bf16.msra.mxu0 0
          %7534 = vmatprep.subr.bf16.mxu0 0
          %7535 = vmatpush2.bf16.msra.mxu0 0
          %7536 = vmatprep.subr.bf16.mxu0 0
          %7537 = vmatpush2.bf16.msra.mxu0 0
          %7538 = vmatprep.subr.bf16.mxu0 0
          %7539 = vmatpush2.bf16.msra.mxu0 0
          %7540 = vmatprep.subr.bf16.mxu0 0
          %7541 = vmatpush2.bf16.msra.mxu0 0
          %7542 = vmatprep.subr.bf16.mxu0 0
          %7543 = vmatpush2.bf16.msra.mxu0 0
          %7544 = vmatprep.subr.bf16.mxu0 0
          %7545 = vmatpush2.bf16.msra.mxu0 0
          %7546 = vmatprep.subr.bf16.mxu0 0
          %7547 = vmatpush2.bf16.msra.mxu0 0
          %7548 = vmatprep.mubr.bf16.mxu0 0
          %7549 = vmatmul.mubr.bf16.gmra.mxu0 %v7514
          %v7550 = vpop.f32.mrf.mxu0
          %v7551 = vadd.f32 %v7486, %v7550
          %v7552 = vpop.f32.mrf.mxu0
          %v7553 = vpop.f32.mrf.mxu0
          %v7554 = vpop.f32.mrf.mxu0
          %7555 = vdwg.mxu0
          %vm7556 = vcmask 89088
          %v7557 = vsel %vm7556, %v7551, -inf
          %7558 = vmax.xlane.f32.xlu0 %v7557
          %v7559 = vpop.xlane.xlu0 %7558
          %v7560 = vsub.f32 %v7551, %v7559
          %v7561 = vmul.f32 %v7560, 1.442695
          %v7562 = vpow.pop %v7561
          %v7563 = vsel %vm7556, %v7562, 0.0
          %7564 = vadd.xlane.f32.xlu0 %v7563
          %v7565 = vpop.xlane.xlu0 %7564
          %v7566 = vrcp.pop %v7565
          %v7567 = vmul.f32 %v7562, %v7566
          %7568 = vst.msk [vmem:[#allocation17] sm:$0xff] %vm7556, %v7567
        $region104: #{fcn_forward.1} parent=63 // pred_fallthru
          _
        // Predicated region
        $region105: #{fcn_forward.1} parent=63 // pred_check
          %p7569 = pneg %p279
        $region106: #{fcn_forward.1} parent=63 // pred_check_branch
          %7571 = sbr.rel (%p7569) target = $region108
        $region107: #{fcn_forward.1} parent=63 // pred_region
          %s7573 = ssub.s32 128, 128
          %7574 = vsyncadd [#allocation5], %s7573
          %s7576 = sshll.u32 [#allocation17], 4
          %s7577 = int_to_ptr.vmem [resolvable:$true] %s7576
          %7579 = dma.vmem_to_hbm [thread:$0]  %s7577, 128, %s11, [#allocation5]
        $region108: #{fcn_forward.1} parent=63 // pred_fallthru
          _
        // Predicated region
        $region109: #{fcn_forward.1} parent=63 // pred_check
          %p7580 = pneg %p279
        $region110: #{fcn_forward.1} parent=63 // pred_check_branch
          %7582 = sbr.rel (%p7580) target = $region112
        $region111: #{fcn_forward.1} parent=63 // pred_region
          %7583 = dma.done [#allocation5], 128
        $region112: #{fcn_forward.1} parent=63 // pred_fallthru
          _
      $region64: #{fcn_forward.1} parent=5 // pred_fallthru
        _
      %p7584 = scmp.le.s32.totalorder 2, %s25
      // Predicated region
      $region113: #{fcn_forward.1} parent=5 // pred_check
        %p7585 = pneg %p7584
      $region114: #{fcn_forward.1} parent=5 // pred_check_branch
        %7587 = sbr.rel (%p7585) target = $region116
      $region115: #{fcn_forward.1} parent=5 // pred_region
        %s7588 = ssub.s32 %s25, 2
      $region116: #{fcn_forward.1} parent=5 // pred_fallthru
        _
    $region6: #{fcn_forward.1} parent=1 // loop_footer
      %s29 = sadd.s32 1, %s25
    $region7: #{fcn_forward.1} parent=1 // loop_footer_branch
      %24 = sbr.rel target = $region3
    $region8: #{fcn_forward.1} parent=1 // loop_exit
      _
    %7589 = vsyncpa [#allocation4], 1
    %s7590 = scalar_lea.sflag [#allocation4], 1
    %7591 = vsyncpa %s7590, 1
    %7592 = vsyncpa [#allocation7], 1
    %7593 = vsyncpa [#allocation10], 1
    %7594 = vsyncpa [#allocation13], 1
    %7595 = vsyncpa [#allocation16], 1
    %7596 = vsyncpa [#allocation5], 1
    %s7597 = scalar_lea.sflag [#allocation5], 1
    %7598 = vsyncpa %s7597, 1

</llo_original>
